<compile_context>
chip_gen: v7x
topology: tpu7x:2x2x1
jax: 0.10.0
libtpu: 0.0.40
codegen_flags: <defaults>
</compile_context>

<pallas_src>
import functools

import jax
import jax.numpy as jnp
from jax.experimental import pallas as pl
from jax.experimental.pallas import tpu as pltpu


HIDDEN = (2048, 128, 1024)
OUT_PAD = 128  # lane-dense width of the final layer / output block


def _round_up(x, m):
    return ((x + m - 1) // m) * m


def ageregnet_kernel(x_ref,
                     w1_ref, b1_ref,
                     w2_ref, b2_ref,
                     w3_ref, b3_ref,
                     w4_ref, b4_ref,
                     out_ref,
                     acc_ref):
    """One (batch-tile, K-tile) grid step.

    Layer 1 (x @ w1) is accumulated over the K grid axis into an f32 VMEM
    scratch; layers 2-4 plus the lane-dense store run only on the last K step.
    """
    k = pl.program_id(1)

    @pl.when(k == 0)
    def _():
        acc_ref[...] = jnp.zeros_like(acc_ref)

    # f32 -> bf16 cast on the VPU (hidden under the MXU) so x is read from HBM
    # exactly once, in its original dtype.
    acc_ref[...] += jnp.dot(x_ref[...].astype(jnp.bfloat16), w1_ref[...],
                            preferred_element_type=jnp.float32)

    @pl.when(k == pl.num_programs(1) - 1)
    def _():
        h = jnp.maximum(acc_ref[...] + b1_ref[...], 0.0).astype(jnp.bfloat16)
        h = jnp.maximum(
            jnp.dot(h, w2_ref[...], preferred_element_type=jnp.float32)
            + b2_ref[...], 0.0).astype(jnp.bfloat16)
        h = jnp.maximum(
            jnp.dot(h, w3_ref[...], preferred_element_type=jnp.float32)
            + b3_ref[...], 0.0).astype(jnp.bfloat16)
        y = jnp.dot(h, w4_ref[...], preferred_element_type=jnp.float32) + b4_ref[...]
        out_ref[...] = y.astype(out_ref.dtype)


def _choose_batch_tile(batch, batch_tile):
    """Batch tile: 8-aligned, <= batch, and >= 2 grid steps when batch allows."""
    if batch % 8 != 0:
        # TODO(synk): mask the ragged tail; for now one full-batch block
        # (block dim == full array dim is always a legal layout).
        return batch
    tile = min(max(8, _round_up(batch_tile, 8)), batch)
    # v7x has 2 TensorCores; the "parallel" batch axis only shards across them
    # when the grid has >= 2 steps, so split medium batches into >= 2 tiles.
    if batch // tile < 2 and batch >= 16:
        tile = max(8, (batch // 2) // 8 * 8)
    return tile


def _choose_k_tile(in_num, k_tile):
    """K tile for layer 1; K tiles must be 128-aligned and divide in_num."""
    if k_tile is not None:
        if in_num % k_tile != 0 or (k_tile != in_num and k_tile % 128 != 0):
            raise ValueError(f"invalid k_tile={k_tile} for in_num={in_num}")
        return k_tile
    # Only K-tile once w1 (in_num x 2048 bf16, double-buffered) starts to
    # threaten VMEM (v7x has 64 MiB); otherwise keep w1 fully resident so it
    # is DMA'd from HBM exactly once.
    if in_num > 2048:
        for tk in (2048, 1024, 512, 256, 128):
            if in_num % tk == 0:
                return tk
    return in_num


def _vmem_limit_bytes(tile, tk):
    """Actual footprint of the pipelined operands + scratch, with headroom."""
    bf16, f32 = 2, 4
    dbl = 2  # default Pallas pipelining double-buffers every blocked operand
    h1, h2, h3 = HIDDEN
    x_io = dbl * tile * tk * f32
    out_io = dbl * tile * OUT_PAD * f32
    weights = dbl * bf16 * (tk * h1 + h1 * h2 + h2 * h3 + h3 * OUT_PAD)
    biases = dbl * f32 * (h1 + h2 + h3 + OUT_PAD)
    acc = tile * h1 * f32                 # layer-1 accumulator scratch
    acts = 3 * tile * h1 * f32            # live activation temporaries + slack
    budget = x_io + out_io + weights + biases + acc + acts
    # 1.5x headroom for Mosaic internals; floor 16 MiB, cap 56 MiB so the
    # request stays inside v7x's 64 MiB physical VMEM (v5e/v6e have 128 MiB).
    return int(min(56 << 20, max(16 << 20, int(1.5 * budget))))


@functools.partial(jax.jit, static_argnames=("batch_tile", "k_tile"))
def age_reg_net_forward(x, params, *, batch_tile=512, k_tile=None):
    """Runs the fused Pallas kernel; returns age_y[:, 0] (shape (batch,))."""
    (w1, b1), (w2, b2), (w3, b3), (w4, b4) = params
    batch, in_num = x.shape

    # forward() returns only column 0 -> keep that column and zero-pad layer 4
    # to OUT_PAD lanes so both the matmul and the output store are full-lane.
    w4 = jnp.pad(w4[:, :1], ((0, 0), (0, OUT_PAD - 1)))
    b4 = jnp.pad(b4[:, :1], ((0, 0), (0, OUT_PAD - 1)))

    # Weights in bf16 for full-rate MXU on all generations; biases stay f32.
    # x is NOT cast here (in-kernel cast avoids an extra HBM pass over x).
    w1, w2, w3, w4 = (w.astype(jnp.bfloat16) for w in (w1, w2, w3, w4))

    tile = _choose_batch_tile(batch, batch_tile)
    tk = _choose_k_tile(in_num, k_tile)
    nb = pl.cdiv(batch, tile)
    nk = in_num // tk

    def _const_spec(shape):
        # Constant index_map: block fetched once, resident across the grid.
        return pl.BlockSpec(shape, lambda i, k: (0, 0))

    grid_spec = pltpu.PrefetchScalarGridSpec(
        num_scalar_prefetch=0,
        grid=(nb, nk),
        in_specs=[
            pl.BlockSpec((tile, tk), lambda i, k: (i, k)),        # x (K-tiled)
            pl.BlockSpec((tk, HIDDEN[0]), lambda i, k: (k, 0)),   # w1 (K-tiled)
            _const_spec(b1.shape),
            _const_spec(w2.shape), _const_spec(b2.shape),
            _const_spec(w3.shape), _const_spec(b3.shape),
            _const_spec(w4.shape), _const_spec(b4.shape),
        ],
        out_specs=pl.BlockSpec((tile, OUT_PAD), lambda i, k: (i, 0)),
        scratch_shapes=[pltpu.VMEM((tile, HIDDEN[0]), jnp.float32)],
    )

    out = pl.pallas_call(
        ageregnet_kernel,
        out_shape=jax.ShapeDtypeStruct((batch, OUT_PAD), jnp.float32),
        grid_spec=grid_spec,
        compiler_params=pltpu.CompilerParams(
            dimension_semantics=("parallel", "arbitrary"),
            vmem_limit_bytes=_vmem_limit_bytes(tile, tk),
        ),
    )(x, w1, b1, w2, b2, w3, b3, w4, b4)

    return out[:, 0]


def init_params(key, in_num, age_out_num):
    """Deterministic (Xavier-uniform-like) init, mimicking init_weights()."""
    dims = [(in_num, HIDDEN[0]), (HIDDEN[0], HIDDEN[1]),
            (HIDDEN[1], HIDDEN[2]), (HIDDEN[2], age_out_num)]
    params = []
    for fan_in, fan_out in dims:
        kw, kb, key = jax.random.split(key, 3)
        limit = jnp.sqrt(6.0 / (fan_in + fan_out))
        w = jax.random.uniform(kw, (fan_in, fan_out), jnp.float32, -limit, limit)
        b = jax.random.uniform(kb, (1, fan_out), jnp.float32, -0.01, 0.01)
        params.append((w, b))
    return tuple(params)


def reference_forward(x, params):
    """Pure-JAX reference with the same bf16-operand / f32-accumulate numerics."""
    h = x.astype(jnp.bfloat16)
    n = len(params)
    for i, (w, b) in enumerate(params):
        h = jnp.dot(h, w.astype(jnp.bfloat16),
                    preferred_element_type=jnp.float32) + b
        if i < n - 1:
            h = jnp.maximum(h, 0.0).astype(jnp.bfloat16)
    return h[:, 0]


if __name__ == "__main__":
    key = jax.random.PRNGKey(0)
    k_x, k_p, k_x2, k_p2 = jax.random.split(key, 4)

    # --- Demo 1: small shapes, single K step, batch split into 2 grid tiles ---
    batch, in_num, age_out_num = 16, 32, 4
    x = jax.random.normal(k_x, (batch, in_num), jnp.float32)
    params = init_params(k_p, in_num, age_out_num)

    ref = jax.block_until_ready(reference_forward(x, params))
    out = jax.block_until_ready(age_reg_net_forward(x, params))
    assert out.shape == (batch,), out.shape
    assert jnp.allclose(out, ref, atol=3e-3, rtol=3e-2), (out, ref)

    # --- Demo 2: ragged batch (not a multiple of 8) -> one full-batch block ---
    x_rag = x[:10]
    ref_rag = jax.block_until_ready(reference_forward(x_rag, params))
    out_rag = jax.block_until_ready(age_reg_net_forward(x_rag, params))
    assert out_rag.shape == (10,), out_rag.shape
    assert jnp.allclose(out_rag, ref_rag, atol=3e-3, rtol=3e-2), (out_rag, ref_rag)

    # --- Demo 3: K-tiled layer 1 (2 K steps) exercising the accumulator path ---
    in_num2 = 256
    x2 = jax.random.normal(k_x2, (batch, in_num2), jnp.float32)
    params2 = init_params(k_p2, in_num2, age_out_num)
    ref2 = jax.block_until_ready(reference_forward(x2, params2))
    out2 = jax.block_until_ready(age_reg_net_forward(x2, params2, k_tile=128))
    assert out2.shape == (batch,), out2.shape
    assert jnp.allclose(out2, ref2, atol=3e-3, rtol=3e-2), (out2, ref2)

    print("KERNEL_OK")
</pallas_src>

<mosaic_0001>
module attributes {stable_mosaic.version = 11 : i64} {
  func.func @ageregnet_kernel(%arg0: i32, %arg1: i32, %arg2: memref<8x32xf32, #tpu.memory_space<vmem>>, %arg3: memref<32x2048xbf16, #tpu.memory_space<vmem>>, %arg4: memref<1x2048xf32, #tpu.memory_space<vmem>>, %arg5: memref<2048x128xbf16, #tpu.memory_space<vmem>>, %arg6: memref<1x128xf32, #tpu.memory_space<vmem>>, %arg7: memref<128x1024xbf16, #tpu.memory_space<vmem>>, %arg8: memref<1x1024xf32, #tpu.memory_space<vmem>>, %arg9: memref<1024x128xbf16, #tpu.memory_space<vmem>>, %arg10: memref<1x128xf32, #tpu.memory_space<vmem>>, %arg11: memref<8x128xf32, #tpu.memory_space<vmem>>, %arg12: memref<8x2048xf32, #tpu.memory_space<vmem>>) attributes {dimension_semantics = [#tpu.dimension_semantics<parallel>, #tpu.dimension_semantics<arbitrary>], iteration_bounds = array<i64: 2, 1>, scalar_prefetch = 0 : i64, scratch_operands = 1 : i64, tpu.core_type = #tpu.core_type<tc>, window_params = [{transform_indices = @transform_0, window_bounds = array<i64: 8, 32>}, {transform_indices = @transform_1, window_bounds = array<i64: 32, 2048>}, {pipeline_mode = #tpu.pipeline_mode<synchronous>, transform_indices = @transform_2, window_bounds = array<i64: 1, 2048>}, {pipeline_mode = #tpu.pipeline_mode<synchronous>, transform_indices = @transform_3, window_bounds = array<i64: 2048, 128>}, {pipeline_mode = #tpu.pipeline_mode<synchronous>, transform_indices = @transform_4, window_bounds = array<i64: 1, 128>}, {pipeline_mode = #tpu.pipeline_mode<synchronous>, transform_indices = @transform_5, window_bounds = array<i64: 128, 1024>}, {pipeline_mode = #tpu.pipeline_mode<synchronous>, transform_indices = @transform_6, window_bounds = array<i64: 1, 1024>}, {pipeline_mode = #tpu.pipeline_mode<synchronous>, transform_indices = @transform_7, window_bounds = array<i64: 1024, 128>}, {pipeline_mode = #tpu.pipeline_mode<synchronous>, transform_indices = @transform_8, window_bounds = array<i64: 1, 128>}, {transform_indices = @transform_9, window_bounds = array<i64: 8, 128>}]} {
    %c0_i32 = arith.constant 0 : i32
    %0 = arith.cmpi eq, %arg1, %c0_i32 : i32
    %1 = arith.extui %0 : i1 to i32
    %c0_i32_0 = arith.constant 0 : i32
    %2 = arith.cmpi ne, %1, %c0_i32_0 : i32
    scf.if %2 {
      %cst_10 = arith.constant 0.000000e+00 : f32
      %13 = vector.broadcast %cst_10 : f32 to vector<8x2048xf32>
      %c0_11 = arith.constant 0 : index
      %c0_12 = arith.constant 0 : index
      %14 = vector.load %arg12[%c0_11, %c0_12] : memref<8x2048xf32, #tpu.memory_space<vmem>>, vector<8x2048xf32>
      tpu.vector_store %arg12[%c0_11, %c0_12], %13 {strides = array<i32>} : memref<8x2048xf32, #tpu.memory_space<vmem>>, vector<8x2048xf32>,
    } else {
    }
    %c0 = arith.constant 0 : index
    %c0_1 = arith.constant 0 : index
    %3 = vector.load %arg12[%c0, %c0_1] : memref<8x2048xf32, #tpu.memory_space<vmem>>, vector<8x2048xf32>
    %c0_2 = arith.constant 0 : index
    %c0_3 = arith.constant 0 : index
    %4 = vector.load %arg2[%c0_2, %c0_3] : memref<8x32xf32, #tpu.memory_space<vmem>>, vector<8x32xf32>
    %5 = arith.truncf %4 : vector<8x32xf32> to vector<8x32xbf16>
    %c0_4 = arith.constant 0 : index
    %c0_5 = arith.constant 0 : index
    %6 = vector.load %arg3[%c0_4, %c0_5] : memref<32x2048xbf16, #tpu.memory_space<vmem>>, vector<32x2048xbf16>
    %cst = arith.constant dense<0.000000e+00> : vector<8x2048xf32>
    %7 = tpu.matmul %5, %6, %cst {dimension_numbers = #tpu.dot_dimension_numbers<[1], [0], [0], [1], [0, 0, 1, 1], [], []>} : vector<8x32xbf16>, vector<32x2048xbf16>, vector<8x2048xf32> -> vector<8x2048xf32>
    %8 = arith.addf %3, %7 : vector<8x2048xf32>
    %c0_6 = arith.constant 0 : index
    %c0_7 = arith.constant 0 : index
    %9 = vector.load %arg12[%c0_6, %c0_7] : memref<8x2048xf32, #tpu.memory_space<vmem>>, vector<8x2048xf32>
    tpu.vector_store %arg12[%c0_6, %c0_7], %8 {strides = array<i32>} : memref<8x2048xf32, #tpu.memory_space<vmem>>, vector<8x2048xf32>,
    %c0_i32_8 = arith.constant 0 : i32
    %10 = arith.cmpi eq, %arg1, %c0_i32_8 : i32
    %11 = arith.extui %10 : i1 to i32
    %c0_i32_9 = arith.constant 0 : i32
    %12 = arith.cmpi ne, %11, %c0_i32_9 : i32
    scf.if %12 {
      %c0_10 = arith.constant 0 : index
      %c0_11 = arith.constant 0 : index
      %13 = vector.load %arg12[%c0_10, %c0_11] : memref<8x2048xf32, #tpu.memory_space<vmem>>, vector<8x2048xf32>
      %c0_12 = arith.constant 0 : index
      %c0_13 = arith.constant 0 : index
      %14 = vector.load %arg4[%c0_12, %c0_13] : memref<1x2048xf32, #tpu.memory_space<vmem>>, vector<1x2048xf32>
      %15 = vector.broadcast %14 : vector<1x2048xf32> to vector<8x2048xf32>
      %16 = arith.addf %13, %15 : vector<8x2048xf32>
      %cst_14 = arith.constant 0.000000e+00 : f32
      %17 = vector.broadcast %cst_14 : f32 to vector<8x2048xf32>
      %18 = arith.maximumf %16, %17 : vector<8x2048xf32>
      %19 = arith.truncf %18 : vector<8x2048xf32> to vector<8x2048xbf16>
      %c0_15 = arith.constant 0 : index
      %c0_16 = arith.constant 0 : index
      %20 = vector.load %arg5[%c0_15, %c0_16] : memref<2048x128xbf16, #tpu.memory_space<vmem>>, vector<2048x128xbf16>
      %cst_17 = arith.constant dense<0.000000e+00> : vector<8x128xf32>
      %21 = tpu.matmul %19, %20, %cst_17 {dimension_numbers = #tpu.dot_dimension_numbers<[1], [0], [0], [1], [0, 0, 1, 1], [], []>} : vector<8x2048xbf16>, vector<2048x128xbf16>, vector<8x128xf32> -> vector<8x128xf32>
      %c0_18 = arith.constant 0 : index
      %c0_19 = arith.constant 0 : index
      %22 = vector.load %arg6[%c0_18, %c0_19] : memref<1x128xf32, #tpu.memory_space<vmem>>, vector<1x128xf32>
      %23 = vector.broadcast %22 : vector<1x128xf32> to vector<8x128xf32>
      %24 = arith.addf %21, %23 : vector<8x128xf32>
      %cst_20 = arith.constant 0.000000e+00 : f32
      %25 = vector.broadcast %cst_20 : f32 to vector<8x128xf32>
      %26 = arith.maximumf %24, %25 : vector<8x128xf32>
      %27 = arith.truncf %26 : vector<8x128xf32> to vector<8x128xbf16>
      %c0_21 = arith.constant 0 : index
      %c0_22 = arith.constant 0 : index
      %28 = vector.load %arg7[%c0_21, %c0_22] : memref<128x1024xbf16, #tpu.memory_space<vmem>>, vector<128x1024xbf16>
      %cst_23 = arith.constant dense<0.000000e+00> : vector<8x1024xf32>
      %29 = tpu.matmul %27, %28, %cst_23 {dimension_numbers = #tpu.dot_dimension_numbers<[1], [0], [0], [1], [0, 0, 1, 1], [], []>} : vector<8x128xbf16>, vector<128x1024xbf16>, vector<8x1024xf32> -> vector<8x1024xf32>
      %c0_24 = arith.constant 0 : index
      %c0_25 = arith.constant 0 : index
      %30 = vector.load %arg8[%c0_24, %c0_25] : memref<1x1024xf32, #tpu.memory_space<vmem>>, vector<1x1024xf32>
      %31 = vector.broadcast %30 : vector<1x1024xf32> to vector<8x1024xf32>
      %32 = arith.addf %29, %31 : vector<8x1024xf32>
      %cst_26 = arith.constant 0.000000e+00 : f32
      %33 = vector.broadcast %cst_26 : f32 to vector<8x1024xf32>
      %34 = arith.maximumf %32, %33 : vector<8x1024xf32>
      %35 = arith.truncf %34 : vector<8x1024xf32> to vector<8x1024xbf16>
      %c0_27 = arith.constant 0 : index
      %c0_28 = arith.constant 0 : index
      %36 = vector.load %arg9[%c0_27, %c0_28] : memref<1024x128xbf16, #tpu.memory_space<vmem>>, vector<1024x128xbf16>
      %cst_29 = arith.constant dense<0.000000e+00> : vector<8x128xf32>
      %37 = tpu.matmul %35, %36, %cst_29 {dimension_numbers = #tpu.dot_dimension_numbers<[1], [0], [0], [1], [0, 0, 1, 1], [], []>} : vector<8x1024xbf16>, vector<1024x128xbf16>, vector<8x128xf32> -> vector<8x128xf32>
      %c0_30 = arith.constant 0 : index
      %c0_31 = arith.constant 0 : index
      %38 = vector.load %arg10[%c0_30, %c0_31] : memref<1x128xf32, #tpu.memory_space<vmem>>, vector<1x128xf32>
      %39 = vector.broadcast %38 : vector<1x128xf32> to vector<8x128xf32>
      %40 = arith.addf %37, %39 : vector<8x128xf32>
      %c0_32 = arith.constant 0 : index
      %c0_33 = arith.constant 0 : index
      %41 = vector.load %arg11[%c0_32, %c0_33] : memref<8x128xf32, #tpu.memory_space<vmem>>, vector<8x128xf32>
      tpu.vector_store %arg11[%c0_32, %c0_33], %40 {strides = array<i32>} : memref<8x128xf32, #tpu.memory_space<vmem>>, vector<8x128xf32>,
    } else {
    }
    return
  }
  func.func @transform_0(%arg0: i32, %arg1: i32) -> (i32, i32) {
    %c0_i32 = arith.constant 0 : i32
    return %arg0, %arg1 : i32, i32
  }
  func.func @transform_1(%arg0: i32, %arg1: i32) -> (i32, i32) {
    %c0_i32 = arith.constant 0 : i32
    %c0_i32_0 = arith.constant 0 : i32
    return %arg1, %c0_i32 : i32, i32
  }
  func.func @transform_2(%arg0: i32, %arg1: i32) -> (i32, i32) {
    %c0_i32 = arith.constant 0 : i32
    %c0_i32_0 = arith.constant 0 : i32
    %c0_i32_1 = arith.constant 0 : i32
    return %c0_i32, %c0_i32_0 : i32, i32
  }
  func.func @transform_3(%arg0: i32, %arg1: i32) -> (i32, i32) {
    %c0_i32 = arith.constant 0 : i32
    %c0_i32_0 = arith.constant 0 : i32
    %c0_i32_1 = arith.constant 0 : i32
    return %c0_i32, %c0_i32_0 : i32, i32
  }
  func.func @transform_4(%arg0: i32, %arg1: i32) -> (i32, i32) {
    %c0_i32 = arith.constant 0 : i32
    %c0_i32_0 = arith.constant 0 : i32
    %c0_i32_1 = arith.constant 0 : i32
    return %c0_i32, %c0_i32_0 : i32, i32
  }
  func.func @transform_5(%arg0: i32, %arg1: i32) -> (i32, i32) {
    %c0_i32 = arith.constant 0 : i32
    %c0_i32_0 = arith.constant 0 : i32
    %c0_i32_1 = arith.constant 0 : i32
    return %c0_i32, %c0_i32_0 : i32, i32
  }
  func.func @transform_6(%arg0: i32, %arg1: i32) -> (i32, i32) {
    %c0_i32 = arith.constant 0 : i32
    %c0_i32_0 = arith.constant 0 : i32
    %c0_i32_1 = arith.constant 0 : i32
    return %c0_i32, %c0_i32_0 : i32, i32
  }
  func.func @transform_7(%arg0: i32, %arg1: i32) -> (i32, i32) {
    %c0_i32 = arith.constant 0 : i32
    %c0_i32_0 = arith.constant 0 : i32
    %c0_i32_1 = arith.constant 0 : i32
    return %c0_i32, %c0_i32_0 : i32, i32
  }
  func.func @transform_8(%arg0: i32, %arg1: i32) -> (i32, i32) {
    %c0_i32 = arith.constant 0 : i32
    %c0_i32_0 = arith.constant 0 : i32
    %c0_i32_1 = arith.constant 0 : i32
    return %c0_i32, %c0_i32_0 : i32, i32
  }
  func.func @transform_9(%arg0: i32, %arg1: i32) -> (i32, i32) {
    %c0_i32 = arith.constant 0 : i32
    %c0_i32_0 = arith.constant 0 : i32
    return %arg0, %c0_i32 : i32, i32
  }
}

</mosaic_0001>

<llo_original>
// kernel: age_reg_net_forward.1
$region0: #{age_reg_net_forward.1}
  #allocation0 [shape = 'u32[]', space=smem, size = 0x4, offset = 0x4, fixed_abs, tag = 'smem constant byte address 0x4 - core index']
  #allocation1 [shape = 'u32[144,128]{1,0:T(1,128)}', space=vmem, size = 0x12000, scoped, tag = 'internal scratch']
  #allocation2 [shape = 'f32[8,2048]{1,0:T(8,128)}', space=vmem, size = 0x10000, scoped, tag = 'scratch operand']
  %s0 = inlined_call_operand.vmem [shape: f32[16,32], index: 0, kind: input, shape index: {}]
  %s1 = inlined_call_operand.vmem [shape: bf16[32,2048], index: 1, kind: input, shape index: {}]
  %s2 = inlined_call_operand.vmem [shape: f32[1,2048], index: 2, kind: input, shape index: {}]
  %s3 = inlined_call_operand.vmem [shape: bf16[2048,128], index: 3, kind: input, shape index: {}]
  %s4 = inlined_call_operand.vmem [shape: f32[1,128], index: 4, kind: input, shape index: {}]
  %s5 = inlined_call_operand.vmem [shape: bf16[128,1024], index: 5, kind: input, shape index: {}]
  %s6 = inlined_call_operand.vmem [shape: f32[1,1024], index: 6, kind: input, shape index: {}]
  %s7 = inlined_call_operand.vmem [shape: bf16[1024,128], index: 7, kind: input, shape index: {}]
  %s8 = inlined_call_operand.vmem [shape: f32[1,128], index: 8, kind: input, shape index: {}]
  %s9 = inlined_call_operand.vmem [shape: f32[16,128], index: 9, kind: output, shape index: {}]
  %s10 = sld [smem:[#allocation0]]
  $region77: #{age_reg_net_forward.1} parent=0
    _
  %s12 = ssub.s32 1, %s10
  %s13 = scalar_select 0, %s12, %s10
  loop: start=0, step=1, limit=4
  $region2: #{age_reg_net_forward.1} parent=0 // loop_pre_header
    _
  $region3: #{age_reg_net_forward.1} parent=0 // loop_header
    %s15 = sphi 0, %s19
    %p16 = scmp.ge.s32.totalorder %s15, 4
    %s22 = sphi 0, %s34
    %s23 = sphi 0, %s30
    %s24 = sphi 0, %s22
    %s25 = sphi 0, %s23
    %s26 = sphi 0, %s24
    %s27 = sphi 0, %s25
    %s39 = sphi 0, %s41
    %s42 = sphi 0, %s39
    %s43 = sphi 0, %s42
    %s59 = sphi 0, %s43
    %s65 = sphi 0, %s67
    %s68 = sphi 0, %s65
    %s69 = sphi 0, %s68
    %s85 = sphi 0, %s69
    %s89 = sphi 0, %s89
    %s91 = sphi 0, %s89
    %s92 = sphi 0, %s91
    %s106 = sphi 0, %s92
    %s110 = sphi 0, %s110
    %s112 = sphi 0, %s110
    %s113 = sphi 0, %s112
    %s127 = sphi 0, %s113
    %s131 = sphi 0, %s131
    %s133 = sphi 0, %s131
    %s134 = sphi 0, %s133
    %s148 = sphi 0, %s134
    %s152 = sphi 0, %s152
    %s154 = sphi 0, %s152
    %s155 = sphi 0, %s154
    %s169 = sphi 0, %s155
    %s173 = sphi 0, %s173
    %s175 = sphi 0, %s173
    %s176 = sphi 0, %s175
    %s190 = sphi 0, %s176
    %s194 = sphi 0, %s194
    %s196 = sphi 0, %s194
    %s197 = sphi 0, %s196
    %s211 = sphi 0, %s197
    %s215 = sphi 0, %s215
    %s217 = sphi 0, %s215
    %s218 = sphi 0, %s217
    %s232 = sphi 0, %s218
    %s238 = sphi 0, %s240
    %s241 = sphi 0, %s238
    %s242 = sphi 0, %s241
    %s258 = sphi 0, %s242
  $region4: #{age_reg_net_forward.1} parent=0 // loop_header_branch
    %18 = sbr.rel (%p16) target = $region8
  $region5: #{age_reg_net_forward.1} parent=0 // loop_body
    %s20 = ssub.s32 %s15, 1
    %s21 = ssub.s32 %s15, 2
    %s28 = sadd.s32 1, %s23
    %p29 = scmp.ge.s32.totalorder %s28, 1
    %s30 = scalar_select %p29, 0, %s28
    %s31 = sadd.s32 1, %s22
    %s32 = scalar_select %p29, %s31, %s22
    %p33 = scmp.ge.s32.totalorder %s32, 2
    %s34 = scalar_select %p33, 0, %s32
    %s35 = ssub.s32 %s22, %s34
    %s36 = ssub.s32 %s23, %s30
    %s37 = sor.u32 %s35, %s36
    %p38 = scmp.eq.s32.totalorder %s37, 0
    %s40 = sadd.s32 %s39, 1
    %s41 = scalar_select %p38, %s39, %s40
    %p44 = pneg %p38
    %p45 = scmp.eq.s32.totalorder %s15, 1
    %p46 = por %p44, %p45
    %p47 = scmp.ne.s32.totalorder %s39, %s42
    %p48 = scmp.eq.s32.totalorder %s15, 0
    %p49 = por %p47, %p48
    %p50 = scmp.ne.s32.totalorder %s39, %s42
    %p51 = scmp.eq.s32.totalorder %s20, 1
    %p52 = por %p50, %p51
    %p53 = scmp.ne.s32.totalorder %s42, %s43
    %p54 = scmp.eq.s32.totalorder %s20, 0
    %p55 = por %p53, %p54
    %p56 = scmp.ne.s32.totalorder %s42, %s43
    %p57 = scmp.eq.s32.totalorder %s21, 1
    %p58 = por %p56, %p57
    %p60 = scmp.ne.s32.totalorder %s43, %s59
    %p61 = scmp.eq.s32.totalorder %s21, 0
    %p62 = por %p60, %p61
    %s63 = ssub.s32 %s23, %s30
    %p64 = scmp.eq.s32.totalorder %s63, 0
    %s66 = sadd.s32 %s65, 1
    %s67 = scalar_select %p64, %s65, %s66
    %p70 = pneg %p64
    %p71 = scmp.eq.s32.totalorder %s15, 1
    %p72 = por %p70, %p71
    %p73 = scmp.ne.s32.totalorder %s65, %s68
    %p74 = scmp.eq.s32.totalorder %s15, 0
    %p75 = por %p73, %p74
    %p76 = scmp.ne.s32.totalorder %s65, %s68
    %p77 = scmp.eq.s32.totalorder %s20, 1
    %p78 = por %p76, %p77
    %p79 = scmp.ne.s32.totalorder %s68, %s69
    %p80 = scmp.eq.s32.totalorder %s20, 0
    %p81 = por %p79, %p80
    %p82 = scmp.ne.s32.totalorder %s68, %s69
    %p83 = scmp.eq.s32.totalorder %s21, 1
    %p84 = por %p82, %p83
    %p86 = scmp.ne.s32.totalorder %s69, %s85
    %p87 = scmp.eq.s32.totalorder %s21, 0
    %p88 = por %p86, %p87
    %s90 = sadd.s32 %s89, 1
    %p93 = scmp.eq.s32.totalorder %s15, 1
    %p94 = scmp.ne.s32.totalorder %s89, %s91
    %p95 = scmp.eq.s32.totalorder %s15, 0
    %p96 = por %p94, %p95
    %p97 = scmp.ne.s32.totalorder %s89, %s91
    %p98 = scmp.eq.s32.totalorder %s20, 1
    %p99 = por %p97, %p98
    %p100 = scmp.ne.s32.totalorder %s91, %s92
    %p101 = scmp.eq.s32.totalorder %s20, 0
    %p102 = por %p100, %p101
    %p103 = scmp.ne.s32.totalorder %s91, %s92
    %p104 = scmp.eq.s32.totalorder %s21, 1
    %p105 = por %p103, %p104
    %p107 = scmp.ne.s32.totalorder %s92, %s106
    %p108 = scmp.eq.s32.totalorder %s21, 0
    %p109 = por %p107, %p108
    %s111 = sadd.s32 %s110, 1
    %p114 = scmp.eq.s32.totalorder %s15, 1
    %p115 = scmp.ne.s32.totalorder %s110, %s112
    %p116 = scmp.eq.s32.totalorder %s15, 0
    %p117 = por %p115, %p116
    %p118 = scmp.ne.s32.totalorder %s110, %s112
    %p119 = scmp.eq.s32.totalorder %s20, 1
    %p120 = por %p118, %p119
    %p121 = scmp.ne.s32.totalorder %s112, %s113
    %p122 = scmp.eq.s32.totalorder %s20, 0
    %p123 = por %p121, %p122
    %p124 = scmp.ne.s32.totalorder %s112, %s113
    %p125 = scmp.eq.s32.totalorder %s21, 1
    %p126 = por %p124, %p125
    %p128 = scmp.ne.s32.totalorder %s113, %s127
    %p129 = scmp.eq.s32.totalorder %s21, 0
    %p130 = por %p128, %p129
    %s132 = sadd.s32 %s131, 1
    %p135 = scmp.eq.s32.totalorder %s15, 1
    %p136 = scmp.ne.s32.totalorder %s131, %s133
    %p137 = scmp.eq.s32.totalorder %s15, 0
    %p138 = por %p136, %p137
    %p139 = scmp.ne.s32.totalorder %s131, %s133
    %p140 = scmp.eq.s32.totalorder %s20, 1
    %p141 = por %p139, %p140
    %p142 = scmp.ne.s32.totalorder %s133, %s134
    %p143 = scmp.eq.s32.totalorder %s20, 0
    %p144 = por %p142, %p143
    %p145 = scmp.ne.s32.totalorder %s133, %s134
    %p146 = scmp.eq.s32.totalorder %s21, 1
    %p147 = por %p145, %p146
    %p149 = scmp.ne.s32.totalorder %s134, %s148
    %p150 = scmp.eq.s32.totalorder %s21, 0
    %p151 = por %p149, %p150
    %s153 = sadd.s32 %s152, 1
    %p156 = scmp.eq.s32.totalorder %s15, 1
    %p157 = scmp.ne.s32.totalorder %s152, %s154
    %p158 = scmp.eq.s32.totalorder %s15, 0
    %p159 = por %p157, %p158
    %p160 = scmp.ne.s32.totalorder %s152, %s154
    %p161 = scmp.eq.s32.totalorder %s20, 1
    %p162 = por %p160, %p161
    %p163 = scmp.ne.s32.totalorder %s154, %s155
    %p164 = scmp.eq.s32.totalorder %s20, 0
    %p165 = por %p163, %p164
    %p166 = scmp.ne.s32.totalorder %s154, %s155
    %p167 = scmp.eq.s32.totalorder %s21, 1
    %p168 = por %p166, %p167
    %p170 = scmp.ne.s32.totalorder %s155, %s169
    %p171 = scmp.eq.s32.totalorder %s21, 0
    %p172 = por %p170, %p171
    %s174 = sadd.s32 %s173, 1
    %p177 = scmp.eq.s32.totalorder %s15, 1
    %p178 = scmp.ne.s32.totalorder %s173, %s175
    %p179 = scmp.eq.s32.totalorder %s15, 0
    %p180 = por %p178, %p179
    %p181 = scmp.ne.s32.totalorder %s173, %s175
    %p182 = scmp.eq.s32.totalorder %s20, 1
    %p183 = por %p181, %p182
    %p184 = scmp.ne.s32.totalorder %s175, %s176
    %p185 = scmp.eq.s32.totalorder %s20, 0
    %p186 = por %p184, %p185
    %p187 = scmp.ne.s32.totalorder %s175, %s176
    %p188 = scmp.eq.s32.totalorder %s21, 1
    %p189 = por %p187, %p188
    %p191 = scmp.ne.s32.totalorder %s176, %s190
    %p192 = scmp.eq.s32.totalorder %s21, 0
    %p193 = por %p191, %p192
    %s195 = sadd.s32 %s194, 1
    %p198 = scmp.eq.s32.totalorder %s15, 1
    %p199 = scmp.ne.s32.totalorder %s194, %s196
    %p200 = scmp.eq.s32.totalorder %s15, 0
    %p201 = por %p199, %p200
    %p202 = scmp.ne.s32.totalorder %s194, %s196
    %p203 = scmp.eq.s32.totalorder %s20, 1
    %p204 = por %p202, %p203
    %p205 = scmp.ne.s32.totalorder %s196, %s197
    %p206 = scmp.eq.s32.totalorder %s20, 0
    %p207 = por %p205, %p206
    %p208 = scmp.ne.s32.totalorder %s196, %s197
    %p209 = scmp.eq.s32.totalorder %s21, 1
    %p210 = por %p208, %p209
    %p212 = scmp.ne.s32.totalorder %s197, %s211
    %p213 = scmp.eq.s32.totalorder %s21, 0
    %p214 = por %p212, %p213
    %s216 = sadd.s32 %s215, 1
    %p219 = scmp.eq.s32.totalorder %s15, 1
    %p220 = scmp.ne.s32.totalorder %s215, %s217
    %p221 = scmp.eq.s32.totalorder %s15, 0
    %p222 = por %p220, %p221
    %p223 = scmp.ne.s32.totalorder %s215, %s217
    %p224 = scmp.eq.s32.totalorder %s20, 1
    %p225 = por %p223, %p224
    %p226 = scmp.ne.s32.totalorder %s217, %s218
    %p227 = scmp.eq.s32.totalorder %s20, 0
    %p228 = por %p226, %p227
    %p229 = scmp.ne.s32.totalorder %s217, %s218
    %p230 = scmp.eq.s32.totalorder %s21, 1
    %p231 = por %p229, %p230
    %p233 = scmp.ne.s32.totalorder %s218, %s232
    %p234 = scmp.eq.s32.totalorder %s21, 0
    %p235 = por %p233, %p234
    %s236 = ssub.s32 %s22, %s34
    %p237 = scmp.eq.s32.totalorder %s236, 0
    %s239 = sadd.s32 %s238, 1
    %s240 = scalar_select %p237, %s238, %s239
    %p243 = pneg %p237
    %p244 = scmp.eq.s32.totalorder %s15, 1
    %p245 = por %p243, %p244
    %p246 = scmp.ne.s32.totalorder %s238, %s241
    %p247 = scmp.eq.s32.totalorder %s15, 0
    %p248 = por %p246, %p247
    %p249 = scmp.ne.s32.totalorder %s238, %s241
    %p250 = scmp.eq.s32.totalorder %s20, 1
    %p251 = por %p249, %p250
    %p252 = scmp.ne.s32.totalorder %s241, %s242
    %p253 = scmp.eq.s32.totalorder %s20, 0
    %p254 = por %p252, %p253
    %p255 = scmp.ne.s32.totalorder %s241, %s242
    %p256 = scmp.eq.s32.totalorder %s21, 1
    %p257 = por %p255, %p256
    %p259 = scmp.ne.s32.totalorder %s242, %s258
    %p260 = scmp.eq.s32.totalorder %s21, 0
    %p261 = por %p259, %p260
    %p262 = scmp.le.s32.totalorder 1, %s15
    %p263 = scmp.lt.s32.totalorder %s15, 3
    %p264 = pnand %p262, %p263
    %p265 = pneg %p264
    // Predicated region
    $region9: #{age_reg_net_forward.1} parent=5 // pred_check
      _
    $region10: #{age_reg_net_forward.1} parent=5 // pred_check_branch
      %267 = sbr.rel (%p264) target = $region12
    $region11: #{age_reg_net_forward.1} parent=5 // pred_region
      %s268 = ssub.s32 %s15, 1
      // Predicated region
      $region13: #{age_reg_net_forward.1} parent=11 // pred_check
        %p269 = pneg %p81
      $region14: #{age_reg_net_forward.1} parent=11 // pred_check_branch
        %271 = sbr.rel (%p269) target = $region16
      $region15: #{age_reg_net_forward.1} parent=11 // pred_region
        %s272 = smul.u32 4, %s25
        %p273 = scmp.lt.s32.totalorder %s272, 3
        %s274 = scalar_select %p273, %s272, 3
        %s275 = smul.addr %s274, 16
        %s276 = smul.addr %s275, 4
        %s277 = scalar_lea.vmem %s1, %s276
        %s278 = smul.u32 4, %s25
      $region16: #{age_reg_net_forward.1} parent=11 // pred_fallthru
        _
      // Predicated region
      $region17: #{age_reg_net_forward.1} parent=11 // pred_check
        %p279 = pneg %p102
      $region18: #{age_reg_net_forward.1} parent=11 // pred_check_branch
        %281 = sbr.rel (%p279) target = $region20
      $region19: #{age_reg_net_forward.1} parent=11 // pred_region
        _
      $region20: #{age_reg_net_forward.1} parent=11 // pred_fallthru
        _
      // Predicated region
      $region21: #{age_reg_net_forward.1} parent=11 // pred_check
        %p282 = pneg %p123
      $region22: #{age_reg_net_forward.1} parent=11 // pred_check_branch
        %284 = sbr.rel (%p282) target = $region24
      $region23: #{age_reg_net_forward.1} parent=11 // pred_region
        _
      $region24: #{age_reg_net_forward.1} parent=11 // pred_fallthru
        _
      // Predicated region
      $region25: #{age_reg_net_forward.1} parent=11 // pred_check
        %p285 = pneg %p144
      $region26: #{age_reg_net_forward.1} parent=11 // pred_check_branch
        %287 = sbr.rel (%p285) target = $region28
      $region27: #{age_reg_net_forward.1} parent=11 // pred_region
        _
      $region28: #{age_reg_net_forward.1} parent=11 // pred_fallthru
        _
      // Predicated region
      $region29: #{age_reg_net_forward.1} parent=11 // pred_check
        %p288 = pneg %p165
      $region30: #{age_reg_net_forward.1} parent=11 // pred_check_branch
        %290 = sbr.rel (%p288) target = $region32
      $region31: #{age_reg_net_forward.1} parent=11 // pred_region
        _
      $region32: #{age_reg_net_forward.1} parent=11 // pred_fallthru
        _
      // Predicated region
      $region33: #{age_reg_net_forward.1} parent=11 // pred_check
        %p291 = pneg %p186
      $region34: #{age_reg_net_forward.1} parent=11 // pred_check_branch
        %293 = sbr.rel (%p291) target = $region36
      $region35: #{age_reg_net_forward.1} parent=11 // pred_region
        _
      $region36: #{age_reg_net_forward.1} parent=11 // pred_fallthru
        _
      // Predicated region
      $region37: #{age_reg_net_forward.1} parent=11 // pred_check
        %p294 = pneg %p207
      $region38: #{age_reg_net_forward.1} parent=11 // pred_check_branch
        %296 = sbr.rel (%p294) target = $region40
      $region39: #{age_reg_net_forward.1} parent=11 // pred_region
        _
      $region40: #{age_reg_net_forward.1} parent=11 // pred_fallthru
        _
      // Predicated region
      $region41: #{age_reg_net_forward.1} parent=11 // pred_check
        %p297 = pneg %p228
      $region42: #{age_reg_net_forward.1} parent=11 // pred_check_branch
        %299 = sbr.rel (%p297) target = $region44
      $region43: #{age_reg_net_forward.1} parent=11 // pred_region
        _
      $region44: #{age_reg_net_forward.1} parent=11 // pred_fallthru
        _
    $region12: #{age_reg_net_forward.1} parent=5 // pred_fallthru
      _
    %p300 = scmp.lt.s32.totalorder %s15, 2
    // Predicated region
    $region45: #{age_reg_net_forward.1} parent=5 // pred_check
      %p301 = pneg %p300
    $region46: #{age_reg_net_forward.1} parent=5 // pred_check_branch
      %303 = sbr.rel (%p301) target = $region48
    $region47: #{age_reg_net_forward.1} parent=5 // pred_region
      // Predicated region
      $region49: #{age_reg_net_forward.1} parent=47 // pred_check
        %p304 = pneg %p49
      $region50: #{age_reg_net_forward.1} parent=47 // pred_check_branch
        %306 = sbr.rel (%p304) target = $region52
      $region51: #{age_reg_net_forward.1} parent=47 // pred_region
        %p307 = scmp.lt.s32.totalorder %s22, 1
        %s308 = scalar_select %p307, %s22, 1
        %p309 = scmp.lt.s32.totalorder %s23, 0
        %s310 = scalar_select %p309, %s23, 0
        %s311 = sadd.s32 %s310, %s308
        %s312 = smul.addr %s311, 8
        %s313 = scalar_lea.vmem %s0, %s312
      $region52: #{age_reg_net_forward.1} parent=47 // pred_fallthru
        _
    $region48: #{age_reg_net_forward.1} parent=5 // pred_fallthru
      _
    %p314 = scmp.le.s32.totalorder 1, %s15
    %p315 = scmp.lt.s32.totalorder %s15, 3
    %p316 = pnand %p314, %p315
    %p317 = pneg %p316
    // Predicated region
    $region53: #{age_reg_net_forward.1} parent=5 // pred_check
      _
    $region54: #{age_reg_net_forward.1} parent=5 // pred_check_branch
      %319 = sbr.rel (%p316) target = $region56
    $region55: #{age_reg_net_forward.1} parent=5 // pred_region
      %s320 = ssub.s32 %s15, 1
      %p321 = scmp.lt.s32.totalorder %s24, 1
      %s322 = scalar_select %p321, %s24, 1
      %p323 = scmp.lt.s32.totalorder %s25, 0
      %s324 = scalar_select %p323, %s25, 0
      %s325 = sadd.s32 %s324, %s322
      %s326 = smul.addr %s325, 8
      %s327 = scalar_lea.vmem %s0, %s326
      %p328 = pneg %p55
      %p329 = pneg %p52
      %s330 = smul.u32 4, %s25
      %p331 = scmp.lt.s32.totalorder %s330, 3
      %s332 = scalar_select %p331, %s330, 3
      %s333 = smul.addr %s332, 16
      %s334 = smul.addr %s333, 4
      %s335 = scalar_lea.vmem %s1, %s334
      %p336 = pneg %p81
      %p337 = pneg %p78
      %p338 = pneg %p102
      %p339 = pneg %p99
      %p340 = pneg %p123
      %p341 = pneg %p120
      %p342 = pneg %p144
      %p343 = pneg %p141
      %p344 = pneg %p165
      %p345 = pneg %p162
      %p346 = pneg %p186
      %p347 = pneg %p183
      %p348 = pneg %p207
      %p349 = pneg %p204
      %p350 = pneg %p228
      %p351 = pneg %p225
      %p352 = pneg %p254
      %p353 = pneg %p251
      %p354 = scmp.lt.s32.totalorder %s24, 1
      %s355 = scalar_select %p354, %s24, 1
      %s356 = smul.addr %s355, 8
      %s357 = scalar_lea.vmem %s9, %s356
      %p358 = scmp.lt.s32.totalorder %s24, 1
      %s359 = scalar_select %p358, %s24, 1
      %p360 = scmp.lt.s32.totalorder %s25, 0
      %s361 = scalar_select %p360, %s25, 0
      %s362 = sadd.s32 %s361, %s359
      %s363 = smul.addr %s362, 8
      %s364 = scalar_lea.vmem %s0, %s363
      %s365 = smul.u32 4, %s25
      %p366 = scmp.lt.s32.totalorder %s365, 3
      %s367 = scalar_select %p366, %s365, 3
      %s368 = smul.addr %s367, 16
      %s369 = smul.addr %s368, 4
      %s370 = scalar_lea.vmem %s1, %s369
      %s371 = smul.u32 4, %s25
      %p372 = scmp.lt.s32.totalorder %s24, 1
      %s373 = scalar_select %p372, %s24, 1
      %s374 = smul.addr %s373, 8
      %s375 = scalar_lea.vmem %s9, %s374
      %p377 = scmp.eq.s32.totalorder %s25, 0
      // Predicated region
      $region57: #{age_reg_net_forward.1} parent=55 // pred_check
        %p378 = pneg %p377
      $region58: #{age_reg_net_forward.1} parent=55 // pred_check_branch
        %380 = sbr.rel (%p378) target = $region60
      $region59: #{age_reg_net_forward.1} parent=55 // pred_region
        %381 = vst [vmem:[#allocation2] sm:$0xff] 0.0
        %382 = vst [vmem:[#allocation2 + $0x8] sm:$0xff] 0.0
        %383 = vst [vmem:[#allocation2 + $0x10] sm:$0xff] 0.0
        %384 = vst [vmem:[#allocation2 + $0x18] sm:$0xff] 0.0
        %385 = vst [vmem:[#allocation2 + $0x20] sm:$0xff] 0.0
        %386 = vst [vmem:[#allocation2 + $0x28] sm:$0xff] 0.0
        %387 = vst [vmem:[#allocation2 + $0x30] sm:$0xff] 0.0
        %388 = vst [vmem:[#allocation2 + $0x38] sm:$0xff] 0.0
        %389 = vst [vmem:[#allocation2 + $0x40] sm:$0xff] 0.0
        %390 = vst [vmem:[#allocation2 + $0x48] sm:$0xff] 0.0
        %391 = vst [vmem:[#allocation2 + $0x50] sm:$0xff] 0.0
        %392 = vst [vmem:[#allocation2 + $0x58] sm:$0xff] 0.0
        %393 = vst [vmem:[#allocation2 + $0x60] sm:$0xff] 0.0
        %394 = vst [vmem:[#allocation2 + $0x68] sm:$0xff] 0.0
        %395 = vst [vmem:[#allocation2 + $0x70] sm:$0xff] 0.0
        %396 = vst [vmem:[#allocation2 + $0x78] sm:$0xff] 0.0
      $region60: #{age_reg_net_forward.1} parent=55 // pred_fallthru
        _
      %v397 = vld [vmem:[#allocation2] sm:$0xff]
      %v398 = vld [vmem:[#allocation2 + $0x8] sm:$0xff]
      %v399 = vld [vmem:[#allocation2 + $0x10] sm:$0xff]
      %v400 = vld [vmem:[#allocation2 + $0x18] sm:$0xff]
      %v401 = vld [vmem:[#allocation2 + $0x20] sm:$0xff]
      %v402 = vld [vmem:[#allocation2 + $0x28] sm:$0xff]
      %v403 = vld [vmem:[#allocation2 + $0x30] sm:$0xff]
      %v404 = vld [vmem:[#allocation2 + $0x38] sm:$0xff]
      %v405 = vld [vmem:[#allocation2 + $0x40] sm:$0xff]
      %v406 = vld [vmem:[#allocation2 + $0x48] sm:$0xff]
      %v407 = vld [vmem:[#allocation2 + $0x50] sm:$0xff]
      %v408 = vld [vmem:[#allocation2 + $0x58] sm:$0xff]
      %v409 = vld [vmem:[#allocation2 + $0x60] sm:$0xff]
      %v410 = vld [vmem:[#allocation2 + $0x68] sm:$0xff]
      %v411 = vld [vmem:[#allocation2 + $0x70] sm:$0xff]
      %v412 = vld [vmem:[#allocation2 + $0x78] sm:$0xff]
      %v413 = vld [vmem:[%s364] sm:$0xff]
      %v414 = vpack.c.bf16 %v413, %v413
      %v415 = vld [vmem:[%s370] sm:$0xff]
      %v416 = vld [vmem:[%s370 + $0x8] sm:$0xff]
      %v417 = vld [vmem:[%s370 + $0x10] sm:$0xff]
      %v418 = vld [vmem:[%s370 + $0x18] sm:$0xff]
      %v419 = vld [vmem:[%s370 + $0x20] sm:$0xff]
      %v420 = vld [vmem:[%s370 + $0x28] sm:$0xff]
      %v421 = vld [vmem:[%s370 + $0x30] sm:$0xff]
      %v422 = vld [vmem:[%s370 + $0x38] sm:$0xff]
      %v423 = vld [vmem:[%s370 + $0x40] sm:$0xff]
      %v424 = vld [vmem:[%s370 + $0x48] sm:$0xff]
      %v425 = vld [vmem:[%s370 + $0x50] sm:$0xff]
      %v426 = vld [vmem:[%s370 + $0x58] sm:$0xff]
      %v427 = vld [vmem:[%s370 + $0x60] sm:$0xff]
      %v428 = vld [vmem:[%s370 + $0x68] sm:$0xff]
      %v429 = vld [vmem:[%s370 + $0x70] sm:$0xff]
      %v430 = vld [vmem:[%s370 + $0x78] sm:$0xff]
      %v431 = vld [vmem:[%s370 + $0x80] sm:$0xff]
      %v432 = vld [vmem:[%s370 + $0x88] sm:$0xff]
      %v433 = vld [vmem:[%s370 + $0x90] sm:$0xff]
      %v434 = vld [vmem:[%s370 + $0x98] sm:$0xff]
      %v435 = vld [vmem:[%s370 + $0xa0] sm:$0xff]
      %v436 = vld [vmem:[%s370 + $0xa8] sm:$0xff]
      %v437 = vld [vmem:[%s370 + $0xb0] sm:$0xff]
      %v438 = vld [vmem:[%s370 + $0xb8] sm:$0xff]
      %v439 = vld [vmem:[%s370 + $0xc0] sm:$0xff]
      %v440 = vld [vmem:[%s370 + $0xc8] sm:$0xff]
      %v441 = vld [vmem:[%s370 + $0xd0] sm:$0xff]
      %v442 = vld [vmem:[%s370 + $0xd8] sm:$0xff]
      %v443 = vld [vmem:[%s370 + $0xe0] sm:$0xff]
      %v444 = vld [vmem:[%s370 + $0xe8] sm:$0xff]
      %v445 = vld [vmem:[%s370 + $0xf0] sm:$0xff]
      %v446 = vld [vmem:[%s370 + $0xf8] sm:$0xff]
      %v479 = vunpack.c.l.b16 %v415
      %v480 = vunpack.c.h.b16 %v415
      %v481 = vunpack.c.l.b16 %v416
      %v482 = vunpack.c.h.b16 %v416
      %v483 = vunpack.c.l.b16 %v417
      %v484 = vunpack.c.h.b16 %v417
      %v485 = vunpack.c.l.b16 %v418
      %v486 = vunpack.c.h.b16 %v418
      %v487 = vunpack.c.l.b16 %v419
      %v488 = vunpack.c.h.b16 %v419
      %v489 = vunpack.c.l.b16 %v420
      %v490 = vunpack.c.h.b16 %v420
      %v491 = vunpack.c.l.b16 %v421
      %v492 = vunpack.c.h.b16 %v421
      %v493 = vunpack.c.l.b16 %v422
      %v494 = vunpack.c.h.b16 %v422
      %v495 = vunpack.c.l.b16 %v423
      %v496 = vunpack.c.h.b16 %v423
      %v497 = vunpack.c.l.b16 %v424
      %v498 = vunpack.c.h.b16 %v424
      %v499 = vunpack.c.l.b16 %v425
      %v500 = vunpack.c.h.b16 %v425
      %v501 = vunpack.c.l.b16 %v426
      %v502 = vunpack.c.h.b16 %v426
      %v503 = vunpack.c.l.b16 %v427
      %v504 = vunpack.c.h.b16 %v427
      %v505 = vunpack.c.l.b16 %v428
      %v506 = vunpack.c.h.b16 %v428
      %v507 = vunpack.c.l.b16 %v429
      %v508 = vunpack.c.h.b16 %v429
      %v509 = vunpack.c.l.b16 %v430
      %v510 = vunpack.c.h.b16 %v430
      %v511 = vunpack.c.l.b16 %v431
      %v512 = vunpack.c.h.b16 %v431
      %v513 = vunpack.c.l.b16 %v432
      %v514 = vunpack.c.h.b16 %v432
      %v515 = vunpack.c.l.b16 %v433
      %v516 = vunpack.c.h.b16 %v433
      %v517 = vunpack.c.l.b16 %v434
      %v518 = vunpack.c.h.b16 %v434
      %v519 = vunpack.c.l.b16 %v435
      %v520 = vunpack.c.h.b16 %v435
      %v521 = vunpack.c.l.b16 %v436
      %v522 = vunpack.c.h.b16 %v436
      %v523 = vunpack.c.l.b16 %v437
      %v524 = vunpack.c.h.b16 %v437
      %v525 = vunpack.c.l.b16 %v438
      %v526 = vunpack.c.h.b16 %v438
      %v527 = vunpack.c.l.b16 %v439
      %v528 = vunpack.c.h.b16 %v439
      %v529 = vunpack.c.l.b16 %v440
      %v530 = vunpack.c.h.b16 %v440
      %v531 = vunpack.c.l.b16 %v441
      %v532 = vunpack.c.h.b16 %v441
      %v533 = vunpack.c.l.b16 %v442
      %v534 = vunpack.c.h.b16 %v442
      %v535 = vunpack.c.l.b16 %v443
      %v536 = vunpack.c.h.b16 %v443
      %v537 = vunpack.c.l.b16 %v444
      %v538 = vunpack.c.h.b16 %v444
      %v539 = vunpack.c.l.b16 %v445
      %v540 = vunpack.c.h.b16 %v445
      %v541 = vunpack.c.l.b16 %v446
      %v542 = vunpack.c.h.b16 %v446
      %v543 = vpack.c.b16 %v495, %v479
      %v544 = vpack.c.b16 %v496, %v480
      %v545 = vpack.c.b16 %v497, %v481
      %v546 = vpack.c.b16 %v498, %v482
      %v547 = vpack.c.b16 %v499, %v483
      %v548 = vpack.c.b16 %v500, %v484
      %v549 = vpack.c.b16 %v501, %v485
      %v550 = vpack.c.b16 %v502, %v486
      %v551 = vpack.c.b16 %v503, %v487
      %v552 = vpack.c.b16 %v504, %v488
      %v553 = vpack.c.b16 %v505, %v489
      %v554 = vpack.c.b16 %v506, %v490
      %v555 = vpack.c.b16 %v507, %v491
      %v556 = vpack.c.b16 %v508, %v492
      %v557 = vpack.c.b16 %v509, %v493
      %v558 = vpack.c.b16 %v510, %v494
      %v559 = vpack.c.b16 %v527, %v511
      %v560 = vpack.c.b16 %v528, %v512
      %v561 = vpack.c.b16 %v529, %v513
      %v562 = vpack.c.b16 %v530, %v514
      %v563 = vpack.c.b16 %v531, %v515
      %v564 = vpack.c.b16 %v532, %v516
      %v565 = vpack.c.b16 %v533, %v517
      %v566 = vpack.c.b16 %v534, %v518
      %v567 = vpack.c.b16 %v535, %v519
      %v568 = vpack.c.b16 %v536, %v520
      %v569 = vpack.c.b16 %v537, %v521
      %v570 = vpack.c.b16 %v538, %v522
      %v571 = vpack.c.b16 %v539, %v523
      %v572 = vpack.c.b16 %v540, %v524
      %v573 = vpack.c.b16 %v541, %v525
      %v574 = vpack.c.b16 %v542, %v526
      %vm607 = vcmask 261120
      %v609 = vsel %vm607, %v414, 0
      %611 = vmatprep.subr.bf16.mxu0 %v544
      %612 = vmatpush1.bf16.msra.mxu0 %v543
      %613 = vmatprep.subr.bf16.mxu0 %v560
      %614 = vmatpush1.bf16.msra.mxu0 %v559
      %615 = vmatprep.subr.bf16.mxu0 0
      %616 = vmatpush1.bf16.msra.mxu0 0
      %617 = vmatprep.subr.bf16.mxu0 0
      %618 = vmatpush1.bf16.msra.mxu0 0
      %619 = vmatprep.subr.bf16.mxu0 0
      %620 = vmatpush1.bf16.msra.mxu0 0
      %621 = vmatprep.subr.bf16.mxu0 0
      %622 = vmatpush1.bf16.msra.mxu0 0
      %623 = vmatprep.subr.bf16.mxu0 0
      %624 = vmatpush1.bf16.msra.mxu0 0
      %625 = vmatprep.subr.bf16.mxu0 0
      %626 = vmatpush1.bf16.msra.mxu0 0
      %627 = vmatprep.subr.bf16.mxu0 0
      %628 = vmatpush1.bf16.msra.mxu0 0
      %629 = vmatprep.subr.bf16.mxu0 0
      %630 = vmatpush1.bf16.msra.mxu0 0
      %631 = vmatprep.subr.bf16.mxu0 0
      %632 = vmatpush1.bf16.msra.mxu0 0
      %633 = vmatprep.subr.bf16.mxu0 0
      %634 = vmatpush1.bf16.msra.mxu0 0
      %635 = vmatprep.subr.bf16.mxu0 0
      %636 = vmatpush1.bf16.msra.mxu0 0
      %637 = vmatprep.subr.bf16.mxu0 0
      %638 = vmatpush1.bf16.msra.mxu0 0
      %639 = vmatprep.subr.bf16.mxu0 0
      %640 = vmatpush1.bf16.msra.mxu0 0
      %641 = vmatprep.subr.bf16.mxu0 0
      %642 = vmatpush1.bf16.msra.mxu0 0
      %643 = vmatprep.mubr.bf16.mxu0 0
      %644 = vmatmul.mubr.bf16.gmra.mrb[0].mxu0 %v609
      %v645 = vpop.f32.mrb[0].mxu0
      %v646 = vadd.f32 0.0, %v645
      %v647 = vpop.f32.mrb[0].mxu0
      %v648 = vadd.f32 0.0, %v647
      %v649 = vpop.f32.mrb[0].mxu0
      %v650 = vpop.f32.mrb[0].mxu0
      %651 = vdwg.mxu0
      %652 = vmatprep.subr.bf16.mxu0 %v546
      %653 = vmatpush1.bf16.msra.mxu0 %v545
      %654 = vmatprep.subr.bf16.mxu0 %v562
      %655 = vmatpush1.bf16.msra.mxu0 %v561
      %656 = vmatprep.subr.bf16.mxu0 0
      %657 = vmatpush1.bf16.msra.mxu0 0
      %658 = vmatprep.subr.bf16.mxu0 0
      %659 = vmatpush1.bf16.msra.mxu0 0
      %660 = vmatprep.subr.bf16.mxu0 0
      %661 = vmatpush1.bf16.msra.mxu0 0
      %662 = vmatprep.subr.bf16.mxu0 0
      %663 = vmatpush1.bf16.msra.mxu0 0
      %664 = vmatprep.subr.bf16.mxu0 0
      %665 = vmatpush1.bf16.msra.mxu0 0
      %666 = vmatprep.subr.bf16.mxu0 0
      %667 = vmatpush1.bf16.msra.mxu0 0
      %668 = vmatprep.subr.bf16.mxu0 0
      %669 = vmatpush1.bf16.msra.mxu0 0
      %670 = vmatprep.subr.bf16.mxu0 0
      %671 = vmatpush1.bf16.msra.mxu0 0
      %672 = vmatprep.subr.bf16.mxu0 0
      %673 = vmatpush1.bf16.msra.mxu0 0
      %674 = vmatprep.subr.bf16.mxu0 0
      %675 = vmatpush1.bf16.msra.mxu0 0
      %676 = vmatprep.subr.bf16.mxu0 0
      %677 = vmatpush1.bf16.msra.mxu0 0
      %678 = vmatprep.subr.bf16.mxu0 0
      %679 = vmatpush1.bf16.msra.mxu0 0
      %680 = vmatprep.subr.bf16.mxu0 0
      %681 = vmatpush1.bf16.msra.mxu0 0
      %682 = vmatprep.subr.bf16.mxu0 0
      %683 = vmatpush1.bf16.msra.mxu0 0
      %684 = vmatprep.mubr.bf16.mxu0 0
      %685 = vmatmul.mubr.bf16.gmra.mrb[0].mxu0 %v609
      %v686 = vpop.f32.mrb[0].mxu0
      %v687 = vadd.f32 0.0, %v686
      %v688 = vpop.f32.mrb[0].mxu0
      %v689 = vadd.f32 0.0, %v688
      %v690 = vpop.f32.mrb[0].mxu0
      %v691 = vpop.f32.mrb[0].mxu0
      %692 = vdwg.mxu0
      %693 = vmatprep.subr.bf16.mxu0 %v548
      %694 = vmatpush1.bf16.msra.mxu0 %v547
      %695 = vmatprep.subr.bf16.mxu0 %v564
      %696 = vmatpush1.bf16.msra.mxu0 %v563
      %697 = vmatprep.subr.bf16.mxu0 0
      %698 = vmatpush1.bf16.msra.mxu0 0
      %699 = vmatprep.subr.bf16.mxu0 0
      %700 = vmatpush1.bf16.msra.mxu0 0
      %701 = vmatprep.subr.bf16.mxu0 0
      %702 = vmatpush1.bf16.msra.mxu0 0
      %703 = vmatprep.subr.bf16.mxu0 0
      %704 = vmatpush1.bf16.msra.mxu0 0
      %705 = vmatprep.subr.bf16.mxu0 0
      %706 = vmatpush1.bf16.msra.mxu0 0
      %707 = vmatprep.subr.bf16.mxu0 0
      %708 = vmatpush1.bf16.msra.mxu0 0
      %709 = vmatprep.subr.bf16.mxu0 0
      %710 = vmatpush1.bf16.msra.mxu0 0
      %711 = vmatprep.subr.bf16.mxu0 0
      %712 = vmatpush1.bf16.msra.mxu0 0
      %713 = vmatprep.subr.bf16.mxu0 0
      %714 = vmatpush1.bf16.msra.mxu0 0
      %715 = vmatprep.subr.bf16.mxu0 0
      %716 = vmatpush1.bf16.msra.mxu0 0
      %717 = vmatprep.subr.bf16.mxu0 0
      %718 = vmatpush1.bf16.msra.mxu0 0
      %719 = vmatprep.subr.bf16.mxu0 0
      %720 = vmatpush1.bf16.msra.mxu0 0
      %721 = vmatprep.subr.bf16.mxu0 0
      %722 = vmatpush1.bf16.msra.mxu0 0
      %723 = vmatprep.subr.bf16.mxu0 0
      %724 = vmatpush1.bf16.msra.mxu0 0
      %725 = vmatprep.mubr.bf16.mxu0 0
      %726 = vmatmul.mubr.bf16.gmra.mrb[0].mxu0 %v609
      %v727 = vpop.f32.mrb[0].mxu0
      %v728 = vadd.f32 0.0, %v727
      %v729 = vpop.f32.mrb[0].mxu0
      %v730 = vadd.f32 0.0, %v729
      %v731 = vpop.f32.mrb[0].mxu0
      %v732 = vpop.f32.mrb[0].mxu0
      %733 = vdwg.mxu0
      %734 = vmatprep.subr.bf16.mxu0 %v550
      %735 = vmatpush1.bf16.msra.mxu0 %v549
      %736 = vmatprep.subr.bf16.mxu0 %v566
      %737 = vmatpush1.bf16.msra.mxu0 %v565
      %738 = vmatprep.subr.bf16.mxu0 0
      %739 = vmatpush1.bf16.msra.mxu0 0
      %740 = vmatprep.subr.bf16.mxu0 0
      %741 = vmatpush1.bf16.msra.mxu0 0
      %742 = vmatprep.subr.bf16.mxu0 0
      %743 = vmatpush1.bf16.msra.mxu0 0
      %744 = vmatprep.subr.bf16.mxu0 0
      %745 = vmatpush1.bf16.msra.mxu0 0
      %746 = vmatprep.subr.bf16.mxu0 0
      %747 = vmatpush1.bf16.msra.mxu0 0
      %748 = vmatprep.subr.bf16.mxu0 0
      %749 = vmatpush1.bf16.msra.mxu0 0
      %750 = vmatprep.subr.bf16.mxu0 0
      %751 = vmatpush1.bf16.msra.mxu0 0
      %752 = vmatprep.subr.bf16.mxu0 0
      %753 = vmatpush1.bf16.msra.mxu0 0
      %754 = vmatprep.subr.bf16.mxu0 0
      %755 = vmatpush1.bf16.msra.mxu0 0
      %756 = vmatprep.subr.bf16.mxu0 0
      %757 = vmatpush1.bf16.msra.mxu0 0
      %758 = vmatprep.subr.bf16.mxu0 0
      %759 = vmatpush1.bf16.msra.mxu0 0
      %760 = vmatprep.subr.bf16.mxu0 0
      %761 = vmatpush1.bf16.msra.mxu0 0
      %762 = vmatprep.subr.bf16.mxu0 0
      %763 = vmatpush1.bf16.msra.mxu0 0
      %764 = vmatprep.subr.bf16.mxu0 0
      %765 = vmatpush1.bf16.msra.mxu0 0
      %766 = vmatprep.mubr.bf16.mxu0 0
      %767 = vmatmul.mubr.bf16.gmra.mrb[0].mxu0 %v609
      %v768 = vpop.f32.mrb[0].mxu0
      %v769 = vadd.f32 0.0, %v768
      %v770 = vpop.f32.mrb[0].mxu0
      %v771 = vadd.f32 0.0, %v770
      %v772 = vpop.f32.mrb[0].mxu0
      %v773 = vpop.f32.mrb[0].mxu0
      %774 = vdwg.mxu0
      %775 = vmatprep.subr.bf16.mxu0 %v552
      %776 = vmatpush1.bf16.msra.mxu0 %v551
      %777 = vmatprep.subr.bf16.mxu0 %v568
      %778 = vmatpush1.bf16.msra.mxu0 %v567
      %779 = vmatprep.subr.bf16.mxu0 0
      %780 = vmatpush1.bf16.msra.mxu0 0
      %781 = vmatprep.subr.bf16.mxu0 0
      %782 = vmatpush1.bf16.msra.mxu0 0
      %783 = vmatprep.subr.bf16.mxu0 0
      %784 = vmatpush1.bf16.msra.mxu0 0
      %785 = vmatprep.subr.bf16.mxu0 0
      %786 = vmatpush1.bf16.msra.mxu0 0
      %787 = vmatprep.subr.bf16.mxu0 0
      %788 = vmatpush1.bf16.msra.mxu0 0
      %789 = vmatprep.subr.bf16.mxu0 0
      %790 = vmatpush1.bf16.msra.mxu0 0
      %791 = vmatprep.subr.bf16.mxu0 0
      %792 = vmatpush1.bf16.msra.mxu0 0
      %793 = vmatprep.subr.bf16.mxu0 0
      %794 = vmatpush1.bf16.msra.mxu0 0
      %795 = vmatprep.subr.bf16.mxu0 0
      %796 = vmatpush1.bf16.msra.mxu0 0
      %797 = vmatprep.subr.bf16.mxu0 0
      %798 = vmatpush1.bf16.msra.mxu0 0
      %799 = vmatprep.subr.bf16.mxu0 0
      %800 = vmatpush1.bf16.msra.mxu0 0
      %801 = vmatprep.subr.bf16.mxu0 0
      %802 = vmatpush1.bf16.msra.mxu0 0
      %803 = vmatprep.subr.bf16.mxu0 0
      %804 = vmatpush1.bf16.msra.mxu0 0
      %805 = vmatprep.subr.bf16.mxu0 0
      %806 = vmatpush1.bf16.msra.mxu0 0
      %807 = vmatprep.mubr.bf16.mxu0 0
      %808 = vmatmul.mubr.bf16.gmra.mrb[0].mxu0 %v609
      %v809 = vpop.f32.mrb[0].mxu0
      %v810 = vadd.f32 0.0, %v809
      %v811 = vpop.f32.mrb[0].mxu0
      %v812 = vadd.f32 0.0, %v811
      %v813 = vpop.f32.mrb[0].mxu0
      %v814 = vpop.f32.mrb[0].mxu0
      %815 = vdwg.mxu0
      %816 = vmatprep.subr.bf16.mxu0 %v554
      %817 = vmatpush1.bf16.msra.mxu0 %v553
      %818 = vmatprep.subr.bf16.mxu0 %v570
      %819 = vmatpush1.bf16.msra.mxu0 %v569
      %820 = vmatprep.subr.bf16.mxu0 0
      %821 = vmatpush1.bf16.msra.mxu0 0
      %822 = vmatprep.subr.bf16.mxu0 0
      %823 = vmatpush1.bf16.msra.mxu0 0
      %824 = vmatprep.subr.bf16.mxu0 0
      %825 = vmatpush1.bf16.msra.mxu0 0
      %826 = vmatprep.subr.bf16.mxu0 0
      %827 = vmatpush1.bf16.msra.mxu0 0
      %828 = vmatprep.subr.bf16.mxu0 0
      %829 = vmatpush1.bf16.msra.mxu0 0
      %830 = vmatprep.subr.bf16.mxu0 0
      %831 = vmatpush1.bf16.msra.mxu0 0
      %832 = vmatprep.subr.bf16.mxu0 0
      %833 = vmatpush1.bf16.msra.mxu0 0
      %834 = vmatprep.subr.bf16.mxu0 0
      %835 = vmatpush1.bf16.msra.mxu0 0
      %836 = vmatprep.subr.bf16.mxu0 0
      %837 = vmatpush1.bf16.msra.mxu0 0
      %838 = vmatprep.subr.bf16.mxu0 0
      %839 = vmatpush1.bf16.msra.mxu0 0
      %840 = vmatprep.subr.bf16.mxu0 0
      %841 = vmatpush1.bf16.msra.mxu0 0
      %842 = vmatprep.subr.bf16.mxu0 0
      %843 = vmatpush1.bf16.msra.mxu0 0
      %844 = vmatprep.subr.bf16.mxu0 0
      %845 = vmatpush1.bf16.msra.mxu0 0
      %846 = vmatprep.subr.bf16.mxu0 0
      %847 = vmatpush1.bf16.msra.mxu0 0
      %848 = vmatprep.mubr.bf16.mxu0 0
      %849 = vmatmul.mubr.bf16.gmra.mrb[0].mxu0 %v609
      %v850 = vpop.f32.mrb[0].mxu0
      %v851 = vadd.f32 0.0, %v850
      %v852 = vpop.f32.mrb[0].mxu0
      %v853 = vadd.f32 0.0, %v852
      %v854 = vpop.f32.mrb[0].mxu0
      %v855 = vpop.f32.mrb[0].mxu0
      %856 = vdwg.mxu0
      %857 = vmatprep.subr.bf16.mxu0 %v556
      %858 = vmatpush1.bf16.msra.mxu0 %v555
      %859 = vmatprep.subr.bf16.mxu0 %v572
      %860 = vmatpush1.bf16.msra.mxu0 %v571
      %861 = vmatprep.subr.bf16.mxu0 0
      %862 = vmatpush1.bf16.msra.mxu0 0
      %863 = vmatprep.subr.bf16.mxu0 0
      %864 = vmatpush1.bf16.msra.mxu0 0
      %865 = vmatprep.subr.bf16.mxu0 0
      %866 = vmatpush1.bf16.msra.mxu0 0
      %867 = vmatprep.subr.bf16.mxu0 0
      %868 = vmatpush1.bf16.msra.mxu0 0
      %869 = vmatprep.subr.bf16.mxu0 0
      %870 = vmatpush1.bf16.msra.mxu0 0
      %871 = vmatprep.subr.bf16.mxu0 0
      %872 = vmatpush1.bf16.msra.mxu0 0
      %873 = vmatprep.subr.bf16.mxu0 0
      %874 = vmatpush1.bf16.msra.mxu0 0
      %875 = vmatprep.subr.bf16.mxu0 0
      %876 = vmatpush1.bf16.msra.mxu0 0
      %877 = vmatprep.subr.bf16.mxu0 0
      %878 = vmatpush1.bf16.msra.mxu0 0
      %879 = vmatprep.subr.bf16.mxu0 0
      %880 = vmatpush1.bf16.msra.mxu0 0
      %881 = vmatprep.subr.bf16.mxu0 0
      %882 = vmatpush1.bf16.msra.mxu0 0
      %883 = vmatprep.subr.bf16.mxu0 0
      %884 = vmatpush1.bf16.msra.mxu0 0
      %885 = vmatprep.subr.bf16.mxu0 0
      %886 = vmatpush1.bf16.msra.mxu0 0
      %887 = vmatprep.subr.bf16.mxu0 0
      %888 = vmatpush1.bf16.msra.mxu0 0
      %889 = vmatprep.mubr.bf16.mxu0 0
      %890 = vmatmul.mubr.bf16.gmra.mrb[0].mxu0 %v609
      %v891 = vpop.f32.mrb[0].mxu0
      %v892 = vadd.f32 0.0, %v891
      %v893 = vpop.f32.mrb[0].mxu0
      %v894 = vadd.f32 0.0, %v893
      %v895 = vpop.f32.mrb[0].mxu0
      %v896 = vpop.f32.mrb[0].mxu0
      %897 = vdwg.mxu0
      %898 = vmatprep.subr.bf16.mxu0 %v558
      %899 = vmatpush1.bf16.msra.mxu0 %v557
      %900 = vmatprep.subr.bf16.mxu0 %v574
      %901 = vmatpush1.bf16.msra.mxu0 %v573
      %902 = vmatprep.subr.bf16.mxu0 0
      %903 = vmatpush1.bf16.msra.mxu0 0
      %904 = vmatprep.subr.bf16.mxu0 0
      %905 = vmatpush1.bf16.msra.mxu0 0
      %906 = vmatprep.subr.bf16.mxu0 0
      %907 = vmatpush1.bf16.msra.mxu0 0
      %908 = vmatprep.subr.bf16.mxu0 0
      %909 = vmatpush1.bf16.msra.mxu0 0
      %910 = vmatprep.subr.bf16.mxu0 0
      %911 = vmatpush1.bf16.msra.mxu0 0
      %912 = vmatprep.subr.bf16.mxu0 0
      %913 = vmatpush1.bf16.msra.mxu0 0
      %914 = vmatprep.subr.bf16.mxu0 0
      %915 = vmatpush1.bf16.msra.mxu0 0
      %916 = vmatprep.subr.bf16.mxu0 0
      %917 = vmatpush1.bf16.msra.mxu0 0
      %918 = vmatprep.subr.bf16.mxu0 0
      %919 = vmatpush1.bf16.msra.mxu0 0
      %920 = vmatprep.subr.bf16.mxu0 0
      %921 = vmatpush1.bf16.msra.mxu0 0
      %922 = vmatprep.subr.bf16.mxu0 0
      %923 = vmatpush1.bf16.msra.mxu0 0
      %924 = vmatprep.subr.bf16.mxu0 0
      %925 = vmatpush1.bf16.msra.mxu0 0
      %926 = vmatprep.subr.bf16.mxu0 0
      %927 = vmatpush1.bf16.msra.mxu0 0
      %928 = vmatprep.subr.bf16.mxu0 0
      %929 = vmatpush1.bf16.msra.mxu0 0
      %930 = vmatprep.mubr.bf16.mxu0 0
      %931 = vmatmul.mubr.bf16.gmra.mrb[0].mxu0 %v609
      %v932 = vpop.f32.mrb[0].mxu0
      %v933 = vadd.f32 0.0, %v932
      %v934 = vpop.f32.mrb[0].mxu0
      %v935 = vadd.f32 0.0, %v934
      %v936 = vpop.f32.mrb[0].mxu0
      %v937 = vpop.f32.mrb[0].mxu0
      %938 = vdwg.mxu0
      %v939 = vadd.f32 %v397, %v646
      %v940 = vadd.f32 %v398, %v648
      %v941 = vadd.f32 %v399, %v687
      %v942 = vadd.f32 %v400, %v689
      %v943 = vadd.f32 %v401, %v728
      %v944 = vadd.f32 %v402, %v730
      %v945 = vadd.f32 %v403, %v769
      %v946 = vadd.f32 %v404, %v771
      %v947 = vadd.f32 %v405, %v810
      %v948 = vadd.f32 %v406, %v812
      %v949 = vadd.f32 %v407, %v851
      %v950 = vadd.f32 %v408, %v853
      %v951 = vadd.f32 %v409, %v892
      %v952 = vadd.f32 %v410, %v894
      %v953 = vadd.f32 %v411, %v933
      %v954 = vadd.f32 %v412, %v935
      %955 = vst [vmem:[#allocation2] sm:$0xff] %v939
      %956 = vst [vmem:[#allocation2 + $0x8] sm:$0xff] %v940
      %957 = vst [vmem:[#allocation2 + $0x10] sm:$0xff] %v941
      %958 = vst [vmem:[#allocation2 + $0x18] sm:$0xff] %v942
      %959 = vst [vmem:[#allocation2 + $0x20] sm:$0xff] %v943
      %960 = vst [vmem:[#allocation2 + $0x28] sm:$0xff] %v944
      %961 = vst [vmem:[#allocation2 + $0x30] sm:$0xff] %v945
      %962 = vst [vmem:[#allocation2 + $0x38] sm:$0xff] %v946
      %963 = vst [vmem:[#allocation2 + $0x40] sm:$0xff] %v947
      %964 = vst [vmem:[#allocation2 + $0x48] sm:$0xff] %v948
      %965 = vst [vmem:[#allocation2 + $0x50] sm:$0xff] %v949
      %966 = vst [vmem:[#allocation2 + $0x58] sm:$0xff] %v950
      %967 = vst [vmem:[#allocation2 + $0x60] sm:$0xff] %v951
      %968 = vst [vmem:[#allocation2 + $0x68] sm:$0xff] %v952
      %969 = vst [vmem:[#allocation2 + $0x70] sm:$0xff] %v953
      %970 = vst [vmem:[#allocation2 + $0x78] sm:$0xff] %v954
      // Predicated region
      $region61: #{age_reg_net_forward.1} parent=55 // pred_check
        %p971 = pneg %p377
      $region62: #{age_reg_net_forward.1} parent=55 // pred_check_branch
        %973 = sbr.rel (%p971) target = $region64
      $region63: #{age_reg_net_forward.1} parent=55 // pred_region
        %v974 = vld [vmem:[#allocation2] sm:$0xff]
        %v975 = vld [vmem:[#allocation2 + $0x8] sm:$0xff]
        %v976 = vld [vmem:[#allocation2 + $0x10] sm:$0xff]
        %v977 = vld [vmem:[#allocation2 + $0x18] sm:$0xff]
        %v978 = vld [vmem:[#allocation2 + $0x20] sm:$0xff]
        %v979 = vld [vmem:[#allocation2 + $0x28] sm:$0xff]
        %v980 = vld [vmem:[#allocation2 + $0x30] sm:$0xff]
        %v981 = vld [vmem:[#allocation2 + $0x38] sm:$0xff]
        %v982 = vld [vmem:[#allocation2 + $0x40] sm:$0xff]
        %v983 = vld [vmem:[#allocation2 + $0x48] sm:$0xff]
        %v984 = vld [vmem:[#allocation2 + $0x50] sm:$0xff]
        %v985 = vld [vmem:[#allocation2 + $0x58] sm:$0xff]
        %v986 = vld [vmem:[#allocation2 + $0x60] sm:$0xff]
        %v987 = vld [vmem:[#allocation2 + $0x68] sm:$0xff]
        %v988 = vld [vmem:[#allocation2 + $0x70] sm:$0xff]
        %v989 = vld [vmem:[#allocation2 + $0x78] sm:$0xff]
        %v990 = vld [vmem:[%s2] sm:$0xff]
        %v991 = vld [vmem:[%s2 + $0x8] sm:$0xff]
        %v994 = vlaneseq
        %v995 = vshrl.u32 %v994, 7
        %v996 = vsub.s32 0, %v995
        %v997 = vrot.slane %v990, %v996
        %v998 = vlaneseq
        %v999 = vshrl.u32 %v998, 7
        %v1000 = vsub.s32 1, %v999
        %v1001 = vrot.slane %v990, %v1000
        %v1002 = vlaneseq
        %v1003 = vshrl.u32 %v1002, 7
        %v1004 = vsub.s32 2, %v1003
        %v1005 = vrot.slane %v990, %v1004
        %v1006 = vlaneseq
        %v1007 = vshrl.u32 %v1006, 7
        %v1008 = vsub.s32 3, %v1007
        %v1009 = vrot.slane %v990, %v1008
        %v1010 = vlaneseq
        %v1011 = vshrl.u32 %v1010, 7
        %v1012 = vsub.s32 4, %v1011
        %v1013 = vrot.slane %v990, %v1012
        %v1014 = vlaneseq
        %v1015 = vshrl.u32 %v1014, 7
        %v1016 = vsub.s32 5, %v1015
        %v1017 = vrot.slane %v990, %v1016
        %v1018 = vlaneseq
        %v1019 = vshrl.u32 %v1018, 7
        %v1020 = vsub.s32 6, %v1019
        %v1021 = vrot.slane %v990, %v1020
        %v1022 = vlaneseq
        %v1023 = vshrl.u32 %v1022, 7
        %v1024 = vsub.s32 7, %v1023
        %v1025 = vrot.slane %v990, %v1024
        %v1026 = vlaneseq
        %v1027 = vshrl.u32 %v1026, 7
        %v1028 = vsub.s32 0, %v1027
        %v1029 = vrot.slane %v991, %v1028
        %v1030 = vlaneseq
        %v1031 = vshrl.u32 %v1030, 7
        %v1032 = vsub.s32 1, %v1031
        %v1033 = vrot.slane %v991, %v1032
        %v1034 = vlaneseq
        %v1035 = vshrl.u32 %v1034, 7
        %v1036 = vsub.s32 2, %v1035
        %v1037 = vrot.slane %v991, %v1036
        %v1038 = vlaneseq
        %v1039 = vshrl.u32 %v1038, 7
        %v1040 = vsub.s32 3, %v1039
        %v1041 = vrot.slane %v991, %v1040
        %v1042 = vlaneseq
        %v1043 = vshrl.u32 %v1042, 7
        %v1044 = vsub.s32 4, %v1043
        %v1045 = vrot.slane %v991, %v1044
        %v1046 = vlaneseq
        %v1047 = vshrl.u32 %v1046, 7
        %v1048 = vsub.s32 5, %v1047
        %v1049 = vrot.slane %v991, %v1048
        %v1050 = vlaneseq
        %v1051 = vshrl.u32 %v1050, 7
        %v1052 = vsub.s32 6, %v1051
        %v1053 = vrot.slane %v991, %v1052
        %v1054 = vlaneseq
        %v1055 = vshrl.u32 %v1054, 7
        %v1056 = vsub.s32 7, %v1055
        %v1057 = vrot.slane %v991, %v1056
        %v1074 = vadd.f32 %v974, %v997
        %v1075 = vadd.f32 %v975, %v1001
        %v1076 = vadd.f32 %v976, %v1005
        %v1077 = vadd.f32 %v977, %v1009
        %v1078 = vadd.f32 %v978, %v1013
        %v1079 = vadd.f32 %v979, %v1017
        %v1080 = vadd.f32 %v980, %v1021
        %v1081 = vadd.f32 %v981, %v1025
        %v1082 = vadd.f32 %v982, %v1029
        %v1083 = vadd.f32 %v983, %v1033
        %v1084 = vadd.f32 %v984, %v1037
        %v1085 = vadd.f32 %v985, %v1041
        %v1086 = vadd.f32 %v986, %v1045
        %v1087 = vadd.f32 %v987, %v1049
        %v1088 = vadd.f32 %v988, %v1053
        %v1089 = vadd.f32 %v989, %v1057
        %v1090 = vmax.f32 %v1074, 0.0
        %v1091 = vmax.f32 %v1075, 0.0
        %v1092 = vmax.f32 %v1076, 0.0
        %v1093 = vmax.f32 %v1077, 0.0
        %v1094 = vmax.f32 %v1078, 0.0
        %v1095 = vmax.f32 %v1079, 0.0
        %v1096 = vmax.f32 %v1080, 0.0
        %v1097 = vmax.f32 %v1081, 0.0
        %v1098 = vmax.f32 %v1082, 0.0
        %v1099 = vmax.f32 %v1083, 0.0
        %v1100 = vmax.f32 %v1084, 0.0
        %v1101 = vmax.f32 %v1085, 0.0
        %v1102 = vmax.f32 %v1086, 0.0
        %v1103 = vmax.f32 %v1087, 0.0
        %v1104 = vmax.f32 %v1088, 0.0
        %v1105 = vmax.f32 %v1089, 0.0
        %v1106 = vpack.c.bf16 %v1090, %v1090
        %v1107 = vpack.c.bf16 %v1091, %v1091
        %v1108 = vpack.c.bf16 %v1092, %v1092
        %v1109 = vpack.c.bf16 %v1093, %v1093
        %v1110 = vpack.c.bf16 %v1094, %v1094
        %v1111 = vpack.c.bf16 %v1095, %v1095
        %v1112 = vpack.c.bf16 %v1096, %v1096
        %v1113 = vpack.c.bf16 %v1097, %v1097
        %v1114 = vpack.c.bf16 %v1098, %v1098
        %v1115 = vpack.c.bf16 %v1099, %v1099
        %v1116 = vpack.c.bf16 %v1100, %v1100
        %v1117 = vpack.c.bf16 %v1101, %v1101
        %v1118 = vpack.c.bf16 %v1102, %v1102
        %v1119 = vpack.c.bf16 %v1103, %v1103
        %v1120 = vpack.c.bf16 %v1104, %v1104
        %v1121 = vpack.c.bf16 %v1105, %v1105
        %v1122 = vld [vmem:[%s3] sm:$0xf]
        %v1123 = vld [vmem:[%s3 + $0x4] sm:$0xf]
        %v1124 = vld [vmem:[%s3 + $0x8] sm:$0xf]
        %v1125 = vld [vmem:[%s3 + $0xc] sm:$0xf]
        %v1126 = vld [vmem:[%s3 + $0x10] sm:$0xf]
        %v1127 = vld [vmem:[%s3 + $0x14] sm:$0xf]
        %v1128 = vld [vmem:[%s3 + $0x18] sm:$0xf]
        %v1129 = vld [vmem:[%s3 + $0x1c] sm:$0xf]
        %v1130 = vld [vmem:[%s3 + $0x20] sm:$0xf]
        %v1131 = vld [vmem:[%s3 + $0x24] sm:$0xf]
        %v1132 = vld [vmem:[%s3 + $0x28] sm:$0xf]
        %v1133 = vld [vmem:[%s3 + $0x2c] sm:$0xf]
        %v1134 = vld [vmem:[%s3 + $0x30] sm:$0xf]
        %v1135 = vld [vmem:[%s3 + $0x34] sm:$0xf]
        %v1136 = vld [vmem:[%s3 + $0x38] sm:$0xf]
        %v1137 = vld [vmem:[%s3 + $0x3c] sm:$0xf]
        %v1138 = vld [vmem:[%s3 + $0x40] sm:$0xf]
        %v1139 = vld [vmem:[%s3 + $0x44] sm:$0xf]
        %v1140 = vld [vmem:[%s3 + $0x48] sm:$0xf]
        %v1141 = vld [vmem:[%s3 + $0x4c] sm:$0xf]
        %v1142 = vld [vmem:[%s3 + $0x50] sm:$0xf]
        %v1143 = vld [vmem:[%s3 + $0x54] sm:$0xf]
        %v1144 = vld [vmem:[%s3 + $0x58] sm:$0xf]
        %v1145 = vld [vmem:[%s3 + $0x5c] sm:$0xf]
        %v1146 = vld [vmem:[%s3 + $0x60] sm:$0xf]
        %v1147 = vld [vmem:[%s3 + $0x64] sm:$0xf]
        %v1148 = vld [vmem:[%s3 + $0x68] sm:$0xf]
        %v1149 = vld [vmem:[%s3 + $0x6c] sm:$0xf]
        %v1150 = vld [vmem:[%s3 + $0x70] sm:$0xf]
        %v1151 = vld [vmem:[%s3 + $0x74] sm:$0xf]
        %v1152 = vld [vmem:[%s3 + $0x78] sm:$0xf]
        %v1153 = vld [vmem:[%s3 + $0x7c] sm:$0xf]
        %v1154 = vld [vmem:[%s3 + $0x80] sm:$0xf]
        %v1155 = vld [vmem:[%s3 + $0x84] sm:$0xf]
        %v1156 = vld [vmem:[%s3 + $0x88] sm:$0xf]
        %v1157 = vld [vmem:[%s3 + $0x8c] sm:$0xf]
        %v1158 = vld [vmem:[%s3 + $0x90] sm:$0xf]
        %v1159 = vld [vmem:[%s3 + $0x94] sm:$0xf]
        %v1160 = vld [vmem:[%s3 + $0x98] sm:$0xf]
        %v1161 = vld [vmem:[%s3 + $0x9c] sm:$0xf]
        %v1162 = vld [vmem:[%s3 + $0xa0] sm:$0xf]
        %v1163 = vld [vmem:[%s3 + $0xa4] sm:$0xf]
        %v1164 = vld [vmem:[%s3 + $0xa8] sm:$0xf]
        %v1165 = vld [vmem:[%s3 + $0xac] sm:$0xf]
        %v1166 = vld [vmem:[%s3 + $0xb0] sm:$0xf]
        %v1167 = vld [vmem:[%s3 + $0xb4] sm:$0xf]
        %v1168 = vld [vmem:[%s3 + $0xb8] sm:$0xf]
        %v1169 = vld [vmem:[%s3 + $0xbc] sm:$0xf]
        %v1170 = vld [vmem:[%s3 + $0xc0] sm:$0xf]
        %v1171 = vld [vmem:[%s3 + $0xc4] sm:$0xf]
        %v1172 = vld [vmem:[%s3 + $0xc8] sm:$0xf]
        %v1173 = vld [vmem:[%s3 + $0xcc] sm:$0xf]
        %v1174 = vld [vmem:[%s3 + $0xd0] sm:$0xf]
        %v1175 = vld [vmem:[%s3 + $0xd4] sm:$0xf]
        %v1176 = vld [vmem:[%s3 + $0xd8] sm:$0xf]
        %v1177 = vld [vmem:[%s3 + $0xdc] sm:$0xf]
        %v1178 = vld [vmem:[%s3 + $0xe0] sm:$0xf]
        %v1179 = vld [vmem:[%s3 + $0xe4] sm:$0xf]
        %v1180 = vld [vmem:[%s3 + $0xe8] sm:$0xf]
        %v1181 = vld [vmem:[%s3 + $0xec] sm:$0xf]
        %v1182 = vld [vmem:[%s3 + $0xf0] sm:$0xf]
        %v1183 = vld [vmem:[%s3 + $0xf4] sm:$0xf]
        %v1184 = vld [vmem:[%s3 + $0xf8] sm:$0xf]
        %v1185 = vld [vmem:[%s3 + $0xfc] sm:$0xf]
        %v1186 = vld [vmem:[%s3 + $0x100] sm:$0xf]
        %v1187 = vld [vmem:[%s3 + $0x104] sm:$0xf]
        %v1188 = vld [vmem:[%s3 + $0x108] sm:$0xf]
        %v1189 = vld [vmem:[%s3 + $0x10c] sm:$0xf]
        %v1190 = vld [vmem:[%s3 + $0x110] sm:$0xf]
        %v1191 = vld [vmem:[%s3 + $0x114] sm:$0xf]
        %v1192 = vld [vmem:[%s3 + $0x118] sm:$0xf]
        %v1193 = vld [vmem:[%s3 + $0x11c] sm:$0xf]
        %v1194 = vld [vmem:[%s3 + $0x120] sm:$0xf]
        %v1195 = vld [vmem:[%s3 + $0x124] sm:$0xf]
        %v1196 = vld [vmem:[%s3 + $0x128] sm:$0xf]
        %v1197 = vld [vmem:[%s3 + $0x12c] sm:$0xf]
        %v1198 = vld [vmem:[%s3 + $0x130] sm:$0xf]
        %v1199 = vld [vmem:[%s3 + $0x134] sm:$0xf]
        %v1200 = vld [vmem:[%s3 + $0x138] sm:$0xf]
        %v1201 = vld [vmem:[%s3 + $0x13c] sm:$0xf]
        %v1202 = vld [vmem:[%s3 + $0x140] sm:$0xf]
        %v1203 = vld [vmem:[%s3 + $0x144] sm:$0xf]
        %v1204 = vld [vmem:[%s3 + $0x148] sm:$0xf]
        %v1205 = vld [vmem:[%s3 + $0x14c] sm:$0xf]
        %v1206 = vld [vmem:[%s3 + $0x150] sm:$0xf]
        %v1207 = vld [vmem:[%s3 + $0x154] sm:$0xf]
        %v1208 = vld [vmem:[%s3 + $0x158] sm:$0xf]
        %v1209 = vld [vmem:[%s3 + $0x15c] sm:$0xf]
        %v1210 = vld [vmem:[%s3 + $0x160] sm:$0xf]
        %v1211 = vld [vmem:[%s3 + $0x164] sm:$0xf]
        %v1212 = vld [vmem:[%s3 + $0x168] sm:$0xf]
        %v1213 = vld [vmem:[%s3 + $0x16c] sm:$0xf]
        %v1214 = vld [vmem:[%s3 + $0x170] sm:$0xf]
        %v1215 = vld [vmem:[%s3 + $0x174] sm:$0xf]
        %v1216 = vld [vmem:[%s3 + $0x178] sm:$0xf]
        %v1217 = vld [vmem:[%s3 + $0x17c] sm:$0xf]
        %v1218 = vld [vmem:[%s3 + $0x180] sm:$0xf]
        %v1219 = vld [vmem:[%s3 + $0x184] sm:$0xf]
        %v1220 = vld [vmem:[%s3 + $0x188] sm:$0xf]
        %v1221 = vld [vmem:[%s3 + $0x18c] sm:$0xf]
        %v1222 = vld [vmem:[%s3 + $0x190] sm:$0xf]
        %v1223 = vld [vmem:[%s3 + $0x194] sm:$0xf]
        %v1224 = vld [vmem:[%s3 + $0x198] sm:$0xf]
        %v1225 = vld [vmem:[%s3 + $0x19c] sm:$0xf]
        %v1226 = vld [vmem:[%s3 + $0x1a0] sm:$0xf]
        %v1227 = vld [vmem:[%s3 + $0x1a4] sm:$0xf]
        %v1228 = vld [vmem:[%s3 + $0x1a8] sm:$0xf]
        %v1229 = vld [vmem:[%s3 + $0x1ac] sm:$0xf]
        %v1230 = vld [vmem:[%s3 + $0x1b0] sm:$0xf]
        %v1231 = vld [vmem:[%s3 + $0x1b4] sm:$0xf]
        %v1232 = vld [vmem:[%s3 + $0x1b8] sm:$0xf]
        %v1233 = vld [vmem:[%s3 + $0x1bc] sm:$0xf]
        %v1234 = vld [vmem:[%s3 + $0x1c0] sm:$0xf]
        %v1235 = vld [vmem:[%s3 + $0x1c4] sm:$0xf]
        %v1236 = vld [vmem:[%s3 + $0x1c8] sm:$0xf]
        %v1237 = vld [vmem:[%s3 + $0x1cc] sm:$0xf]
        %v1238 = vld [vmem:[%s3 + $0x1d0] sm:$0xf]
        %v1239 = vld [vmem:[%s3 + $0x1d4] sm:$0xf]
        %v1240 = vld [vmem:[%s3 + $0x1d8] sm:$0xf]
        %v1241 = vld [vmem:[%s3 + $0x1dc] sm:$0xf]
        %v1242 = vld [vmem:[%s3 + $0x1e0] sm:$0xf]
        %v1243 = vld [vmem:[%s3 + $0x1e4] sm:$0xf]
        %v1244 = vld [vmem:[%s3 + $0x1e8] sm:$0xf]
        %v1245 = vld [vmem:[%s3 + $0x1ec] sm:$0xf]
        %v1246 = vld [vmem:[%s3 + $0x1f0] sm:$0xf]
        %v1247 = vld [vmem:[%s3 + $0x1f4] sm:$0xf]
        %v1248 = vld [vmem:[%s3 + $0x1f8] sm:$0xf]
        %v1249 = vld [vmem:[%s3 + $0x1fc] sm:$0xf]
        %v1250 = vld [vmem:[%s3 + $0x200] sm:$0xf]
        %v1251 = vld [vmem:[%s3 + $0x204] sm:$0xf]
        %v1252 = vld [vmem:[%s3 + $0x208] sm:$0xf]
        %v1253 = vld [vmem:[%s3 + $0x20c] sm:$0xf]
        %v1254 = vld [vmem:[%s3 + $0x210] sm:$0xf]
        %v1255 = vld [vmem:[%s3 + $0x214] sm:$0xf]
        %v1256 = vld [vmem:[%s3 + $0x218] sm:$0xf]
        %v1257 = vld [vmem:[%s3 + $0x21c] sm:$0xf]
        %v1258 = vld [vmem:[%s3 + $0x220] sm:$0xf]
        %v1259 = vld [vmem:[%s3 + $0x224] sm:$0xf]
        %v1260 = vld [vmem:[%s3 + $0x228] sm:$0xf]
        %v1261 = vld [vmem:[%s3 + $0x22c] sm:$0xf]
        %v1262 = vld [vmem:[%s3 + $0x230] sm:$0xf]
        %v1263 = vld [vmem:[%s3 + $0x234] sm:$0xf]
        %v1264 = vld [vmem:[%s3 + $0x238] sm:$0xf]
        %v1265 = vld [vmem:[%s3 + $0x23c] sm:$0xf]
        %v1266 = vld [vmem:[%s3 + $0x240] sm:$0xf]
        %v1267 = vld [vmem:[%s3 + $0x244] sm:$0xf]
        %v1268 = vld [vmem:[%s3 + $0x248] sm:$0xf]
        %v1269 = vld [vmem:[%s3 + $0x24c] sm:$0xf]
        %v1270 = vld [vmem:[%s3 + $0x250] sm:$0xf]
        %v1271 = vld [vmem:[%s3 + $0x254] sm:$0xf]
        %v1272 = vld [vmem:[%s3 + $0x258] sm:$0xf]
        %v1273 = vld [vmem:[%s3 + $0x25c] sm:$0xf]
        %v1274 = vld [vmem:[%s3 + $0x260] sm:$0xf]
        %v1275 = vld [vmem:[%s3 + $0x264] sm:$0xf]
        %v1276 = vld [vmem:[%s3 + $0x268] sm:$0xf]
        %v1277 = vld [vmem:[%s3 + $0x26c] sm:$0xf]
        %v1278 = vld [vmem:[%s3 + $0x270] sm:$0xf]
        %v1279 = vld [vmem:[%s3 + $0x274] sm:$0xf]
        %v1280 = vld [vmem:[%s3 + $0x278] sm:$0xf]
        %v1281 = vld [vmem:[%s3 + $0x27c] sm:$0xf]
        %v1282 = vld [vmem:[%s3 + $0x280] sm:$0xf]
        %v1283 = vld [vmem:[%s3 + $0x284] sm:$0xf]
        %v1284 = vld [vmem:[%s3 + $0x288] sm:$0xf]
        %v1285 = vld [vmem:[%s3 + $0x28c] sm:$0xf]
        %v1286 = vld [vmem:[%s3 + $0x290] sm:$0xf]
        %v1287 = vld [vmem:[%s3 + $0x294] sm:$0xf]
        %v1288 = vld [vmem:[%s3 + $0x298] sm:$0xf]
        %v1289 = vld [vmem:[%s3 + $0x29c] sm:$0xf]
        %v1290 = vld [vmem:[%s3 + $0x2a0] sm:$0xf]
        %v1291 = vld [vmem:[%s3 + $0x2a4] sm:$0xf]
        %v1292 = vld [vmem:[%s3 + $0x2a8] sm:$0xf]
        %v1293 = vld [vmem:[%s3 + $0x2ac] sm:$0xf]
        %v1294 = vld [vmem:[%s3 + $0x2b0] sm:$0xf]
        %v1295 = vld [vmem:[%s3 + $0x2b4] sm:$0xf]
        %v1296 = vld [vmem:[%s3 + $0x2b8] sm:$0xf]
        %v1297 = vld [vmem:[%s3 + $0x2bc] sm:$0xf]
        %v1298 = vld [vmem:[%s3 + $0x2c0] sm:$0xf]
        %v1299 = vld [vmem:[%s3 + $0x2c4] sm:$0xf]
        %v1300 = vld [vmem:[%s3 + $0x2c8] sm:$0xf]
        %v1301 = vld [vmem:[%s3 + $0x2cc] sm:$0xf]
        %v1302 = vld [vmem:[%s3 + $0x2d0] sm:$0xf]
        %v1303 = vld [vmem:[%s3 + $0x2d4] sm:$0xf]
        %v1304 = vld [vmem:[%s3 + $0x2d8] sm:$0xf]
        %v1305 = vld [vmem:[%s3 + $0x2dc] sm:$0xf]
        %v1306 = vld [vmem:[%s3 + $0x2e0] sm:$0xf]
        %v1307 = vld [vmem:[%s3 + $0x2e4] sm:$0xf]
        %v1308 = vld [vmem:[%s3 + $0x2e8] sm:$0xf]
        %v1309 = vld [vmem:[%s3 + $0x2ec] sm:$0xf]
        %v1310 = vld [vmem:[%s3 + $0x2f0] sm:$0xf]
        %v1311 = vld [vmem:[%s3 + $0x2f4] sm:$0xf]
        %v1312 = vld [vmem:[%s3 + $0x2f8] sm:$0xf]
        %v1313 = vld [vmem:[%s3 + $0x2fc] sm:$0xf]
        %v1314 = vld [vmem:[%s3 + $0x300] sm:$0xf]
        %v1315 = vld [vmem:[%s3 + $0x304] sm:$0xf]
        %v1316 = vld [vmem:[%s3 + $0x308] sm:$0xf]
        %v1317 = vld [vmem:[%s3 + $0x30c] sm:$0xf]
        %v1318 = vld [vmem:[%s3 + $0x310] sm:$0xf]
        %v1319 = vld [vmem:[%s3 + $0x314] sm:$0xf]
        %v1320 = vld [vmem:[%s3 + $0x318] sm:$0xf]
        %v1321 = vld [vmem:[%s3 + $0x31c] sm:$0xf]
        %v1322 = vld [vmem:[%s3 + $0x320] sm:$0xf]
        %v1323 = vld [vmem:[%s3 + $0x324] sm:$0xf]
        %v1324 = vld [vmem:[%s3 + $0x328] sm:$0xf]
        %v1325 = vld [vmem:[%s3 + $0x32c] sm:$0xf]
        %v1326 = vld [vmem:[%s3 + $0x330] sm:$0xf]
        %v1327 = vld [vmem:[%s3 + $0x334] sm:$0xf]
        %v1328 = vld [vmem:[%s3 + $0x338] sm:$0xf]
        %v1329 = vld [vmem:[%s3 + $0x33c] sm:$0xf]
        %v1330 = vld [vmem:[%s3 + $0x340] sm:$0xf]
        %v1331 = vld [vmem:[%s3 + $0x344] sm:$0xf]
        %v1332 = vld [vmem:[%s3 + $0x348] sm:$0xf]
        %v1333 = vld [vmem:[%s3 + $0x34c] sm:$0xf]
        %v1334 = vld [vmem:[%s3 + $0x350] sm:$0xf]
        %v1335 = vld [vmem:[%s3 + $0x354] sm:$0xf]
        %v1336 = vld [vmem:[%s3 + $0x358] sm:$0xf]
        %v1337 = vld [vmem:[%s3 + $0x35c] sm:$0xf]
        %v1338 = vld [vmem:[%s3 + $0x360] sm:$0xf]
        %v1339 = vld [vmem:[%s3 + $0x364] sm:$0xf]
        %v1340 = vld [vmem:[%s3 + $0x368] sm:$0xf]
        %v1341 = vld [vmem:[%s3 + $0x36c] sm:$0xf]
        %v1342 = vld [vmem:[%s3 + $0x370] sm:$0xf]
        %v1343 = vld [vmem:[%s3 + $0x374] sm:$0xf]
        %v1344 = vld [vmem:[%s3 + $0x378] sm:$0xf]
        %v1345 = vld [vmem:[%s3 + $0x37c] sm:$0xf]
        %v1346 = vld [vmem:[%s3 + $0x380] sm:$0xf]
        %v1347 = vld [vmem:[%s3 + $0x384] sm:$0xf]
        %v1348 = vld [vmem:[%s3 + $0x388] sm:$0xf]
        %v1349 = vld [vmem:[%s3 + $0x38c] sm:$0xf]
        %v1350 = vld [vmem:[%s3 + $0x390] sm:$0xf]
        %v1351 = vld [vmem:[%s3 + $0x394] sm:$0xf]
        %v1352 = vld [vmem:[%s3 + $0x398] sm:$0xf]
        %v1353 = vld [vmem:[%s3 + $0x39c] sm:$0xf]
        %v1354 = vld [vmem:[%s3 + $0x3a0] sm:$0xf]
        %v1355 = vld [vmem:[%s3 + $0x3a4] sm:$0xf]
        %v1356 = vld [vmem:[%s3 + $0x3a8] sm:$0xf]
        %v1357 = vld [vmem:[%s3 + $0x3ac] sm:$0xf]
        %v1358 = vld [vmem:[%s3 + $0x3b0] sm:$0xf]
        %v1359 = vld [vmem:[%s3 + $0x3b4] sm:$0xf]
        %v1360 = vld [vmem:[%s3 + $0x3b8] sm:$0xf]
        %v1361 = vld [vmem:[%s3 + $0x3bc] sm:$0xf]
        %v1362 = vld [vmem:[%s3 + $0x3c0] sm:$0xf]
        %v1363 = vld [vmem:[%s3 + $0x3c4] sm:$0xf]
        %v1364 = vld [vmem:[%s3 + $0x3c8] sm:$0xf]
        %v1365 = vld [vmem:[%s3 + $0x3cc] sm:$0xf]
        %v1366 = vld [vmem:[%s3 + $0x3d0] sm:$0xf]
        %v1367 = vld [vmem:[%s3 + $0x3d4] sm:$0xf]
        %v1368 = vld [vmem:[%s3 + $0x3d8] sm:$0xf]
        %v1369 = vld [vmem:[%s3 + $0x3dc] sm:$0xf]
        %v1370 = vld [vmem:[%s3 + $0x3e0] sm:$0xf]
        %v1371 = vld [vmem:[%s3 + $0x3e4] sm:$0xf]
        %v1372 = vld [vmem:[%s3 + $0x3e8] sm:$0xf]
        %v1373 = vld [vmem:[%s3 + $0x3ec] sm:$0xf]
        %v1374 = vld [vmem:[%s3 + $0x3f0] sm:$0xf]
        %v1375 = vld [vmem:[%s3 + $0x3f4] sm:$0xf]
        %v1376 = vld [vmem:[%s3 + $0x3f8] sm:$0xf]
        %v1377 = vld [vmem:[%s3 + $0x3fc] sm:$0xf]
        %v1378 = vld [vmem:[%s4] sm:$0x1]
        %v1380 = vlaneseq
        %v1381 = vshrl.u32 %v1380, 7
        %v1382 = vsub.s32 0, %v1381
        %v1383 = vrot.slane %v1378, %v1382
        %v1641 = vunpack.c.l.b16 %v1122
        %v1642 = vunpack.c.l.b16 %v1123
        %v1643 = vunpack.c.l.b16 %v1124
        %v1644 = vunpack.c.l.b16 %v1125
        %v1645 = vunpack.c.l.b16 %v1126
        %v1646 = vunpack.c.l.b16 %v1127
        %v1647 = vunpack.c.l.b16 %v1128
        %v1648 = vunpack.c.l.b16 %v1129
        %v1649 = vunpack.c.l.b16 %v1130
        %v1650 = vunpack.c.l.b16 %v1131
        %v1651 = vunpack.c.l.b16 %v1132
        %v1652 = vunpack.c.l.b16 %v1133
        %v1653 = vunpack.c.l.b16 %v1134
        %v1654 = vunpack.c.l.b16 %v1135
        %v1655 = vunpack.c.l.b16 %v1136
        %v1656 = vunpack.c.l.b16 %v1137
        %v1657 = vunpack.c.l.b16 %v1138
        %v1658 = vunpack.c.l.b16 %v1139
        %v1659 = vunpack.c.l.b16 %v1140
        %v1660 = vunpack.c.l.b16 %v1141
        %v1661 = vunpack.c.l.b16 %v1142
        %v1662 = vunpack.c.l.b16 %v1143
        %v1663 = vunpack.c.l.b16 %v1144
        %v1664 = vunpack.c.l.b16 %v1145
        %v1665 = vunpack.c.l.b16 %v1146
        %v1666 = vunpack.c.l.b16 %v1147
        %v1667 = vunpack.c.l.b16 %v1148
        %v1668 = vunpack.c.l.b16 %v1149
        %v1669 = vunpack.c.l.b16 %v1150
        %v1670 = vunpack.c.l.b16 %v1151
        %v1671 = vunpack.c.l.b16 %v1152
        %v1672 = vunpack.c.l.b16 %v1153
        %v1673 = vunpack.c.l.b16 %v1154
        %v1674 = vunpack.c.l.b16 %v1155
        %v1675 = vunpack.c.l.b16 %v1156
        %v1676 = vunpack.c.l.b16 %v1157
        %v1677 = vunpack.c.l.b16 %v1158
        %v1678 = vunpack.c.l.b16 %v1159
        %v1679 = vunpack.c.l.b16 %v1160
        %v1680 = vunpack.c.l.b16 %v1161
        %v1681 = vunpack.c.l.b16 %v1162
        %v1682 = vunpack.c.l.b16 %v1163
        %v1683 = vunpack.c.l.b16 %v1164
        %v1684 = vunpack.c.l.b16 %v1165
        %v1685 = vunpack.c.l.b16 %v1166
        %v1686 = vunpack.c.l.b16 %v1167
        %v1687 = vunpack.c.l.b16 %v1168
        %v1688 = vunpack.c.l.b16 %v1169
        %v1689 = vunpack.c.l.b16 %v1170
        %v1690 = vunpack.c.l.b16 %v1171
        %v1691 = vunpack.c.l.b16 %v1172
        %v1692 = vunpack.c.l.b16 %v1173
        %v1693 = vunpack.c.l.b16 %v1174
        %v1694 = vunpack.c.l.b16 %v1175
        %v1695 = vunpack.c.l.b16 %v1176
        %v1696 = vunpack.c.l.b16 %v1177
        %v1697 = vunpack.c.l.b16 %v1178
        %v1698 = vunpack.c.l.b16 %v1179
        %v1699 = vunpack.c.l.b16 %v1180
        %v1700 = vunpack.c.l.b16 %v1181
        %v1701 = vunpack.c.l.b16 %v1182
        %v1702 = vunpack.c.l.b16 %v1183
        %v1703 = vunpack.c.l.b16 %v1184
        %v1704 = vunpack.c.l.b16 %v1185
        %v1705 = vunpack.c.l.b16 %v1186
        %v1706 = vunpack.c.l.b16 %v1187
        %v1707 = vunpack.c.l.b16 %v1188
        %v1708 = vunpack.c.l.b16 %v1189
        %v1709 = vunpack.c.l.b16 %v1190
        %v1710 = vunpack.c.l.b16 %v1191
        %v1711 = vunpack.c.l.b16 %v1192
        %v1712 = vunpack.c.l.b16 %v1193
        %v1713 = vunpack.c.l.b16 %v1194
        %v1714 = vunpack.c.l.b16 %v1195
        %v1715 = vunpack.c.l.b16 %v1196
        %v1716 = vunpack.c.l.b16 %v1197
        %v1717 = vunpack.c.l.b16 %v1198
        %v1718 = vunpack.c.l.b16 %v1199
        %v1719 = vunpack.c.l.b16 %v1200
        %v1720 = vunpack.c.l.b16 %v1201
        %v1721 = vunpack.c.l.b16 %v1202
        %v1722 = vunpack.c.l.b16 %v1203
        %v1723 = vunpack.c.l.b16 %v1204
        %v1724 = vunpack.c.l.b16 %v1205
        %v1725 = vunpack.c.l.b16 %v1206
        %v1726 = vunpack.c.l.b16 %v1207
        %v1727 = vunpack.c.l.b16 %v1208
        %v1728 = vunpack.c.l.b16 %v1209
        %v1729 = vunpack.c.l.b16 %v1210
        %v1730 = vunpack.c.l.b16 %v1211
        %v1731 = vunpack.c.l.b16 %v1212
        %v1732 = vunpack.c.l.b16 %v1213
        %v1733 = vunpack.c.l.b16 %v1214
        %v1734 = vunpack.c.l.b16 %v1215
        %v1735 = vunpack.c.l.b16 %v1216
        %v1736 = vunpack.c.l.b16 %v1217
        %v1737 = vunpack.c.l.b16 %v1218
        %v1738 = vunpack.c.l.b16 %v1219
        %v1739 = vunpack.c.l.b16 %v1220
        %v1740 = vunpack.c.l.b16 %v1221
        %v1741 = vunpack.c.l.b16 %v1222
        %v1742 = vunpack.c.l.b16 %v1223
        %v1743 = vunpack.c.l.b16 %v1224
        %v1744 = vunpack.c.l.b16 %v1225
        %v1745 = vunpack.c.l.b16 %v1226
        %v1746 = vunpack.c.l.b16 %v1227
        %v1747 = vunpack.c.l.b16 %v1228
        %v1748 = vunpack.c.l.b16 %v1229
        %v1749 = vunpack.c.l.b16 %v1230
        %v1750 = vunpack.c.l.b16 %v1231
        %v1751 = vunpack.c.l.b16 %v1232
        %v1752 = vunpack.c.l.b16 %v1233
        %v1753 = vunpack.c.l.b16 %v1234
        %v1754 = vunpack.c.l.b16 %v1235
        %v1755 = vunpack.c.l.b16 %v1236
        %v1756 = vunpack.c.l.b16 %v1237
        %v1757 = vunpack.c.l.b16 %v1238
        %v1758 = vunpack.c.l.b16 %v1239
        %v1759 = vunpack.c.l.b16 %v1240
        %v1760 = vunpack.c.l.b16 %v1241
        %v1761 = vunpack.c.l.b16 %v1242
        %v1762 = vunpack.c.l.b16 %v1243
        %v1763 = vunpack.c.l.b16 %v1244
        %v1764 = vunpack.c.l.b16 %v1245
        %v1765 = vunpack.c.l.b16 %v1246
        %v1766 = vunpack.c.l.b16 %v1247
        %v1767 = vunpack.c.l.b16 %v1248
        %v1768 = vunpack.c.l.b16 %v1249
        %v1769 = vunpack.c.l.b16 %v1250
        %v1770 = vunpack.c.l.b16 %v1251
        %v1771 = vunpack.c.l.b16 %v1252
        %v1772 = vunpack.c.l.b16 %v1253
        %v1773 = vunpack.c.l.b16 %v1254
        %v1774 = vunpack.c.l.b16 %v1255
        %v1775 = vunpack.c.l.b16 %v1256
        %v1776 = vunpack.c.l.b16 %v1257
        %v1777 = vunpack.c.l.b16 %v1258
        %v1778 = vunpack.c.l.b16 %v1259
        %v1779 = vunpack.c.l.b16 %v1260
        %v1780 = vunpack.c.l.b16 %v1261
        %v1781 = vunpack.c.l.b16 %v1262
        %v1782 = vunpack.c.l.b16 %v1263
        %v1783 = vunpack.c.l.b16 %v1264
        %v1784 = vunpack.c.l.b16 %v1265
        %v1785 = vunpack.c.l.b16 %v1266
        %v1786 = vunpack.c.l.b16 %v1267
        %v1787 = vunpack.c.l.b16 %v1268
        %v1788 = vunpack.c.l.b16 %v1269
        %v1789 = vunpack.c.l.b16 %v1270
        %v1790 = vunpack.c.l.b16 %v1271
        %v1791 = vunpack.c.l.b16 %v1272
        %v1792 = vunpack.c.l.b16 %v1273
        %v1793 = vunpack.c.l.b16 %v1274
        %v1794 = vunpack.c.l.b16 %v1275
        %v1795 = vunpack.c.l.b16 %v1276
        %v1796 = vunpack.c.l.b16 %v1277
        %v1797 = vunpack.c.l.b16 %v1278
        %v1798 = vunpack.c.l.b16 %v1279
        %v1799 = vunpack.c.l.b16 %v1280
        %v1800 = vunpack.c.l.b16 %v1281
        %v1801 = vunpack.c.l.b16 %v1282
        %v1802 = vunpack.c.l.b16 %v1283
        %v1803 = vunpack.c.l.b16 %v1284
        %v1804 = vunpack.c.l.b16 %v1285
        %v1805 = vunpack.c.l.b16 %v1286
        %v1806 = vunpack.c.l.b16 %v1287
        %v1807 = vunpack.c.l.b16 %v1288
        %v1808 = vunpack.c.l.b16 %v1289
        %v1809 = vunpack.c.l.b16 %v1290
        %v1810 = vunpack.c.l.b16 %v1291
        %v1811 = vunpack.c.l.b16 %v1292
        %v1812 = vunpack.c.l.b16 %v1293
        %v1813 = vunpack.c.l.b16 %v1294
        %v1814 = vunpack.c.l.b16 %v1295
        %v1815 = vunpack.c.l.b16 %v1296
        %v1816 = vunpack.c.l.b16 %v1297
        %v1817 = vunpack.c.l.b16 %v1298
        %v1818 = vunpack.c.l.b16 %v1299
        %v1819 = vunpack.c.l.b16 %v1300
        %v1820 = vunpack.c.l.b16 %v1301
        %v1821 = vunpack.c.l.b16 %v1302
        %v1822 = vunpack.c.l.b16 %v1303
        %v1823 = vunpack.c.l.b16 %v1304
        %v1824 = vunpack.c.l.b16 %v1305
        %v1825 = vunpack.c.l.b16 %v1306
        %v1826 = vunpack.c.l.b16 %v1307
        %v1827 = vunpack.c.l.b16 %v1308
        %v1828 = vunpack.c.l.b16 %v1309
        %v1829 = vunpack.c.l.b16 %v1310
        %v1830 = vunpack.c.l.b16 %v1311
        %v1831 = vunpack.c.l.b16 %v1312
        %v1832 = vunpack.c.l.b16 %v1313
        %v1833 = vunpack.c.l.b16 %v1314
        %v1834 = vunpack.c.l.b16 %v1315
        %v1835 = vunpack.c.l.b16 %v1316
        %v1836 = vunpack.c.l.b16 %v1317
        %v1837 = vunpack.c.l.b16 %v1318
        %v1838 = vunpack.c.l.b16 %v1319
        %v1839 = vunpack.c.l.b16 %v1320
        %v1840 = vunpack.c.l.b16 %v1321
        %v1841 = vunpack.c.l.b16 %v1322
        %v1842 = vunpack.c.l.b16 %v1323
        %v1843 = vunpack.c.l.b16 %v1324
        %v1844 = vunpack.c.l.b16 %v1325
        %v1845 = vunpack.c.l.b16 %v1326
        %v1846 = vunpack.c.l.b16 %v1327
        %v1847 = vunpack.c.l.b16 %v1328
        %v1848 = vunpack.c.l.b16 %v1329
        %v1849 = vunpack.c.l.b16 %v1330
        %v1850 = vunpack.c.l.b16 %v1331
        %v1851 = vunpack.c.l.b16 %v1332
        %v1852 = vunpack.c.l.b16 %v1333
        %v1853 = vunpack.c.l.b16 %v1334
        %v1854 = vunpack.c.l.b16 %v1335
        %v1855 = vunpack.c.l.b16 %v1336
        %v1856 = vunpack.c.l.b16 %v1337
        %v1857 = vunpack.c.l.b16 %v1338
        %v1858 = vunpack.c.l.b16 %v1339
        %v1859 = vunpack.c.l.b16 %v1340
        %v1860 = vunpack.c.l.b16 %v1341
        %v1861 = vunpack.c.l.b16 %v1342
        %v1862 = vunpack.c.l.b16 %v1343
        %v1863 = vunpack.c.l.b16 %v1344
        %v1864 = vunpack.c.l.b16 %v1345
        %v1865 = vunpack.c.l.b16 %v1346
        %v1866 = vunpack.c.l.b16 %v1347
        %v1867 = vunpack.c.l.b16 %v1348
        %v1868 = vunpack.c.l.b16 %v1349
        %v1869 = vunpack.c.l.b16 %v1350
        %v1870 = vunpack.c.l.b16 %v1351
        %v1871 = vunpack.c.l.b16 %v1352
        %v1872 = vunpack.c.l.b16 %v1353
        %v1873 = vunpack.c.l.b16 %v1354
        %v1874 = vunpack.c.l.b16 %v1355
        %v1875 = vunpack.c.l.b16 %v1356
        %v1876 = vunpack.c.l.b16 %v1357
        %v1877 = vunpack.c.l.b16 %v1358
        %v1878 = vunpack.c.l.b16 %v1359
        %v1879 = vunpack.c.l.b16 %v1360
        %v1880 = vunpack.c.l.b16 %v1361
        %v1881 = vunpack.c.l.b16 %v1362
        %v1882 = vunpack.c.l.b16 %v1363
        %v1883 = vunpack.c.l.b16 %v1364
        %v1884 = vunpack.c.l.b16 %v1365
        %v1885 = vunpack.c.l.b16 %v1366
        %v1886 = vunpack.c.l.b16 %v1367
        %v1887 = vunpack.c.l.b16 %v1368
        %v1888 = vunpack.c.l.b16 %v1369
        %v1889 = vunpack.c.l.b16 %v1370
        %v1890 = vunpack.c.l.b16 %v1371
        %v1891 = vunpack.c.l.b16 %v1372
        %v1892 = vunpack.c.l.b16 %v1373
        %v1893 = vunpack.c.l.b16 %v1374
        %v1894 = vunpack.c.l.b16 %v1375
        %v1895 = vunpack.c.l.b16 %v1376
        %v1896 = vunpack.c.l.b16 %v1377
        %v1897 = vpack.c.b16 %v1642, %v1641
        %v1898 = vpack.c.b16 %v1644, %v1643
        %v1899 = vpack.c.b16 %v1646, %v1645
        %v1900 = vpack.c.b16 %v1648, %v1647
        %v1901 = vpack.c.b16 %v1650, %v1649
        %v1902 = vpack.c.b16 %v1652, %v1651
        %v1903 = vpack.c.b16 %v1654, %v1653
        %v1904 = vpack.c.b16 %v1656, %v1655
        %v1905 = vpack.c.b16 %v1658, %v1657
        %v1906 = vpack.c.b16 %v1660, %v1659
        %v1907 = vpack.c.b16 %v1662, %v1661
        %v1908 = vpack.c.b16 %v1664, %v1663
        %v1909 = vpack.c.b16 %v1666, %v1665
        %v1910 = vpack.c.b16 %v1668, %v1667
        %v1911 = vpack.c.b16 %v1670, %v1669
        %v1912 = vpack.c.b16 %v1672, %v1671
        %v1913 = vpack.c.b16 %v1674, %v1673
        %v1914 = vpack.c.b16 %v1676, %v1675
        %v1915 = vpack.c.b16 %v1678, %v1677
        %v1916 = vpack.c.b16 %v1680, %v1679
        %v1917 = vpack.c.b16 %v1682, %v1681
        %v1918 = vpack.c.b16 %v1684, %v1683
        %v1919 = vpack.c.b16 %v1686, %v1685
        %v1920 = vpack.c.b16 %v1688, %v1687
        %v1921 = vpack.c.b16 %v1690, %v1689
        %v1922 = vpack.c.b16 %v1692, %v1691
        %v1923 = vpack.c.b16 %v1694, %v1693
        %v1924 = vpack.c.b16 %v1696, %v1695
        %v1925 = vpack.c.b16 %v1698, %v1697
        %v1926 = vpack.c.b16 %v1700, %v1699
        %v1927 = vpack.c.b16 %v1702, %v1701
        %v1928 = vpack.c.b16 %v1704, %v1703
        %v1929 = vpack.c.b16 %v1706, %v1705
        %v1930 = vpack.c.b16 %v1708, %v1707
        %v1931 = vpack.c.b16 %v1710, %v1709
        %v1932 = vpack.c.b16 %v1712, %v1711
        %v1933 = vpack.c.b16 %v1714, %v1713
        %v1934 = vpack.c.b16 %v1716, %v1715
        %v1935 = vpack.c.b16 %v1718, %v1717
        %v1936 = vpack.c.b16 %v1720, %v1719
        %v1937 = vpack.c.b16 %v1722, %v1721
        %v1938 = vpack.c.b16 %v1724, %v1723
        %v1939 = vpack.c.b16 %v1726, %v1725
        %v1940 = vpack.c.b16 %v1728, %v1727
        %v1941 = vpack.c.b16 %v1730, %v1729
        %v1942 = vpack.c.b16 %v1732, %v1731
        %v1943 = vpack.c.b16 %v1734, %v1733
        %v1944 = vpack.c.b16 %v1736, %v1735
        %v1945 = vpack.c.b16 %v1738, %v1737
        %v1946 = vpack.c.b16 %v1740, %v1739
        %v1947 = vpack.c.b16 %v1742, %v1741
        %v1948 = vpack.c.b16 %v1744, %v1743
        %v1949 = vpack.c.b16 %v1746, %v1745
        %v1950 = vpack.c.b16 %v1748, %v1747
        %v1951 = vpack.c.b16 %v1750, %v1749
        %v1952 = vpack.c.b16 %v1752, %v1751
        %v1953 = vpack.c.b16 %v1754, %v1753
        %v1954 = vpack.c.b16 %v1756, %v1755
        %v1955 = vpack.c.b16 %v1758, %v1757
        %v1956 = vpack.c.b16 %v1760, %v1759
        %v1957 = vpack.c.b16 %v1762, %v1761
        %v1958 = vpack.c.b16 %v1764, %v1763
        %v1959 = vpack.c.b16 %v1766, %v1765
        %v1960 = vpack.c.b16 %v1768, %v1767
        %v1961 = vpack.c.b16 %v1770, %v1769
        %v1962 = vpack.c.b16 %v1772, %v1771
        %v1963 = vpack.c.b16 %v1774, %v1773
        %v1964 = vpack.c.b16 %v1776, %v1775
        %v1965 = vpack.c.b16 %v1778, %v1777
        %v1966 = vpack.c.b16 %v1780, %v1779
        %v1967 = vpack.c.b16 %v1782, %v1781
        %v1968 = vpack.c.b16 %v1784, %v1783
        %v1969 = vpack.c.b16 %v1786, %v1785
        %v1970 = vpack.c.b16 %v1788, %v1787
        %v1971 = vpack.c.b16 %v1790, %v1789
        %v1972 = vpack.c.b16 %v1792, %v1791
        %v1973 = vpack.c.b16 %v1794, %v1793
        %v1974 = vpack.c.b16 %v1796, %v1795
        %v1975 = vpack.c.b16 %v1798, %v1797
        %v1976 = vpack.c.b16 %v1800, %v1799
        %v1977 = vpack.c.b16 %v1802, %v1801
        %v1978 = vpack.c.b16 %v1804, %v1803
        %v1979 = vpack.c.b16 %v1806, %v1805
        %v1980 = vpack.c.b16 %v1808, %v1807
        %v1981 = vpack.c.b16 %v1810, %v1809
        %v1982 = vpack.c.b16 %v1812, %v1811
        %v1983 = vpack.c.b16 %v1814, %v1813
        %v1984 = vpack.c.b16 %v1816, %v1815
        %v1985 = vpack.c.b16 %v1818, %v1817
        %v1986 = vpack.c.b16 %v1820, %v1819
        %v1987 = vpack.c.b16 %v1822, %v1821
        %v1988 = vpack.c.b16 %v1824, %v1823
        %v1989 = vpack.c.b16 %v1826, %v1825
        %v1990 = vpack.c.b16 %v1828, %v1827
        %v1991 = vpack.c.b16 %v1830, %v1829
        %v1992 = vpack.c.b16 %v1832, %v1831
        %v1993 = vpack.c.b16 %v1834, %v1833
        %v1994 = vpack.c.b16 %v1836, %v1835
        %v1995 = vpack.c.b16 %v1838, %v1837
        %v1996 = vpack.c.b16 %v1840, %v1839
        %v1997 = vpack.c.b16 %v1842, %v1841
        %v1998 = vpack.c.b16 %v1844, %v1843
        %v1999 = vpack.c.b16 %v1846, %v1845
        %v2000 = vpack.c.b16 %v1848, %v1847
        %v2001 = vpack.c.b16 %v1850, %v1849
        %v2002 = vpack.c.b16 %v1852, %v1851
        %v2003 = vpack.c.b16 %v1854, %v1853
        %v2004 = vpack.c.b16 %v1856, %v1855
        %v2005 = vpack.c.b16 %v1858, %v1857
        %v2006 = vpack.c.b16 %v1860, %v1859
        %v2007 = vpack.c.b16 %v1862, %v1861
        %v2008 = vpack.c.b16 %v1864, %v1863
        %v2009 = vpack.c.b16 %v1866, %v1865
        %v2010 = vpack.c.b16 %v1868, %v1867
        %v2011 = vpack.c.b16 %v1870, %v1869
        %v2012 = vpack.c.b16 %v1872, %v1871
        %v2013 = vpack.c.b16 %v1874, %v1873
        %v2014 = vpack.c.b16 %v1876, %v1875
        %v2015 = vpack.c.b16 %v1878, %v1877
        %v2016 = vpack.c.b16 %v1880, %v1879
        %v2017 = vpack.c.b16 %v1882, %v1881
        %v2018 = vpack.c.b16 %v1884, %v1883
        %v2019 = vpack.c.b16 %v1886, %v1885
        %v2020 = vpack.c.b16 %v1888, %v1887
        %v2021 = vpack.c.b16 %v1890, %v1889
        %v2022 = vpack.c.b16 %v1892, %v1891
        %v2023 = vpack.c.b16 %v1894, %v1893
        %v2024 = vpack.c.b16 %v1896, %v1895
        %2153 = vmatprep.subr.bf16.mxu0 0
        %2154 = vmatpush1.bf16.msra.mxu0 %v1897
        %2155 = vmatprep.subr.bf16.mxu0 0
        %2156 = vmatpush1.bf16.msra.mxu0 %v1898
        %2157 = vmatprep.subr.bf16.mxu0 0
        %2158 = vmatpush1.bf16.msra.mxu0 %v1899
        %2159 = vmatprep.subr.bf16.mxu0 0
        %2160 = vmatpush1.bf16.msra.mxu0 %v1900
        %2161 = vmatprep.subr.bf16.mxu0 0
        %2162 = vmatpush1.bf16.msra.mxu0 %v1901
        %2163 = vmatprep.subr.bf16.mxu0 0
        %2164 = vmatpush1.bf16.msra.mxu0 %v1902
        %2165 = vmatprep.subr.bf16.mxu0 0
        %2166 = vmatpush1.bf16.msra.mxu0 %v1903
        %2167 = vmatprep.subr.bf16.mxu0 0
        %2168 = vmatpush1.bf16.msra.mxu0 %v1904
        %2169 = vmatprep.subr.bf16.mxu0 0
        %2170 = vmatpush1.bf16.msra.mxu0 %v1905
        %2171 = vmatprep.subr.bf16.mxu0 0
        %2172 = vmatpush1.bf16.msra.mxu0 %v1906
        %2173 = vmatprep.subr.bf16.mxu0 0
        %2174 = vmatpush1.bf16.msra.mxu0 %v1907
        %2175 = vmatprep.subr.bf16.mxu0 0
        %2176 = vmatpush1.bf16.msra.mxu0 %v1908
        %2177 = vmatprep.subr.bf16.mxu0 0
        %2178 = vmatpush1.bf16.msra.mxu0 %v1909
        %2179 = vmatprep.subr.bf16.mxu0 0
        %2180 = vmatpush1.bf16.msra.mxu0 %v1910
        %2181 = vmatprep.subr.bf16.mxu0 0
        %2182 = vmatpush1.bf16.msra.mxu0 %v1911
        %2183 = vmatprep.subr.bf16.mxu0 0
        %2184 = vmatpush1.bf16.msra.mxu0 %v1912
        %2185 = vmatprep.mubr.bf16.mxu0 %v1107
        %2186 = vmatmul.mubr.bf16.gmra.mrb[0].mxu0 %v1106
        %v2187 = vpop.f32.mrb[0].mxu0
        %v2188 = vadd.f32 %v1383, %v2187
        %v2189 = vpop.f32.mrb[0].mxu0
        %v2190 = vpop.f32.mrb[0].mxu0
        %v2191 = vpop.f32.mrb[0].mxu0
        %2192 = vdwg.mxu0
        %2193 = vmatprep.subr.bf16.mxu0 0
        %2194 = vmatpush1.bf16.msra.mxu0 %v1913
        %2195 = vmatprep.subr.bf16.mxu0 0
        %2196 = vmatpush1.bf16.msra.mxu0 %v1914
        %2197 = vmatprep.subr.bf16.mxu0 0
        %2198 = vmatpush1.bf16.msra.mxu0 %v1915
        %2199 = vmatprep.subr.bf16.mxu0 0
        %2200 = vmatpush1.bf16.msra.mxu0 %v1916
        %2201 = vmatprep.subr.bf16.mxu0 0
        %2202 = vmatpush1.bf16.msra.mxu0 %v1917
        %2203 = vmatprep.subr.bf16.mxu0 0
        %2204 = vmatpush1.bf16.msra.mxu0 %v1918
        %2205 = vmatprep.subr.bf16.mxu0 0
        %2206 = vmatpush1.bf16.msra.mxu0 %v1919
        %2207 = vmatprep.subr.bf16.mxu0 0
        %2208 = vmatpush1.bf16.msra.mxu0 %v1920
        %2209 = vmatprep.subr.bf16.mxu0 0
        %2210 = vmatpush1.bf16.msra.mxu0 %v1921
        %2211 = vmatprep.subr.bf16.mxu0 0
        %2212 = vmatpush1.bf16.msra.mxu0 %v1922
        %2213 = vmatprep.subr.bf16.mxu0 0
        %2214 = vmatpush1.bf16.msra.mxu0 %v1923
        %2215 = vmatprep.subr.bf16.mxu0 0
        %2216 = vmatpush1.bf16.msra.mxu0 %v1924
        %2217 = vmatprep.subr.bf16.mxu0 0
        %2218 = vmatpush1.bf16.msra.mxu0 %v1925
        %2219 = vmatprep.subr.bf16.mxu0 0
        %2220 = vmatpush1.bf16.msra.mxu0 %v1926
        %2221 = vmatprep.subr.bf16.mxu0 0
        %2222 = vmatpush1.bf16.msra.mxu0 %v1927
        %2223 = vmatprep.subr.bf16.mxu0 0
        %2224 = vmatpush1.bf16.msra.mxu0 %v1928
        %2225 = vmatprep.mubr.bf16.mxu0 %v1109
        %2226 = vmatmul.mubr.bf16.gmra.mrb[0].mxu0 %v1108
        %v2227 = vpop.f32.mrb[0].mxu0
        %v2228 = vadd.f32 %v2188, %v2227
        %v2229 = vpop.f32.mrb[0].mxu0
        %v2230 = vpop.f32.mrb[0].mxu0
        %v2231 = vpop.f32.mrb[0].mxu0
        %2232 = vdwg.mxu0
        %2233 = vmatprep.subr.bf16.mxu0 0
        %2234 = vmatpush1.bf16.msra.mxu0 %v1929
        %2235 = vmatprep.subr.bf16.mxu0 0
        %2236 = vmatpush1.bf16.msra.mxu0 %v1930
        %2237 = vmatprep.subr.bf16.mxu0 0
        %2238 = vmatpush1.bf16.msra.mxu0 %v1931
        %2239 = vmatprep.subr.bf16.mxu0 0
        %2240 = vmatpush1.bf16.msra.mxu0 %v1932
        %2241 = vmatprep.subr.bf16.mxu0 0
        %2242 = vmatpush1.bf16.msra.mxu0 %v1933
        %2243 = vmatprep.subr.bf16.mxu0 0
        %2244 = vmatpush1.bf16.msra.mxu0 %v1934
        %2245 = vmatprep.subr.bf16.mxu0 0
        %2246 = vmatpush1.bf16.msra.mxu0 %v1935
        %2247 = vmatprep.subr.bf16.mxu0 0
        %2248 = vmatpush1.bf16.msra.mxu0 %v1936
        %2249 = vmatprep.subr.bf16.mxu0 0
        %2250 = vmatpush1.bf16.msra.mxu0 %v1937
        %2251 = vmatprep.subr.bf16.mxu0 0
        %2252 = vmatpush1.bf16.msra.mxu0 %v1938
        %2253 = vmatprep.subr.bf16.mxu0 0
        %2254 = vmatpush1.bf16.msra.mxu0 %v1939
        %2255 = vmatprep.subr.bf16.mxu0 0
        %2256 = vmatpush1.bf16.msra.mxu0 %v1940
        %2257 = vmatprep.subr.bf16.mxu0 0
        %2258 = vmatpush1.bf16.msra.mxu0 %v1941
        %2259 = vmatprep.subr.bf16.mxu0 0
        %2260 = vmatpush1.bf16.msra.mxu0 %v1942
        %2261 = vmatprep.subr.bf16.mxu0 0
        %2262 = vmatpush1.bf16.msra.mxu0 %v1943
        %2263 = vmatprep.subr.bf16.mxu0 0
        %2264 = vmatpush1.bf16.msra.mxu0 %v1944
        %2265 = vmatprep.mubr.bf16.mxu0 %v1111
        %2266 = vmatmul.mubr.bf16.gmra.mrb[0].mxu0 %v1110
        %v2267 = vpop.f32.mrb[0].mxu0
        %v2268 = vadd.f32 %v2228, %v2267
        %v2269 = vpop.f32.mrb[0].mxu0
        %v2270 = vpop.f32.mrb[0].mxu0
        %v2271 = vpop.f32.mrb[0].mxu0
        %2272 = vdwg.mxu0
        %2273 = vmatprep.subr.bf16.mxu0 0
        %2274 = vmatpush1.bf16.msra.mxu0 %v1945
        %2275 = vmatprep.subr.bf16.mxu0 0
        %2276 = vmatpush1.bf16.msra.mxu0 %v1946
        %2277 = vmatprep.subr.bf16.mxu0 0
        %2278 = vmatpush1.bf16.msra.mxu0 %v1947
        %2279 = vmatprep.subr.bf16.mxu0 0
        %2280 = vmatpush1.bf16.msra.mxu0 %v1948
        %2281 = vmatprep.subr.bf16.mxu0 0
        %2282 = vmatpush1.bf16.msra.mxu0 %v1949
        %2283 = vmatprep.subr.bf16.mxu0 0
        %2284 = vmatpush1.bf16.msra.mxu0 %v1950
        %2285 = vmatprep.subr.bf16.mxu0 0
        %2286 = vmatpush1.bf16.msra.mxu0 %v1951
        %2287 = vmatprep.subr.bf16.mxu0 0
        %2288 = vmatpush1.bf16.msra.mxu0 %v1952
        %2289 = vmatprep.subr.bf16.mxu0 0
        %2290 = vmatpush1.bf16.msra.mxu0 %v1953
        %2291 = vmatprep.subr.bf16.mxu0 0
        %2292 = vmatpush1.bf16.msra.mxu0 %v1954
        %2293 = vmatprep.subr.bf16.mxu0 0
        %2294 = vmatpush1.bf16.msra.mxu0 %v1955
        %2295 = vmatprep.subr.bf16.mxu0 0
        %2296 = vmatpush1.bf16.msra.mxu0 %v1956
        %2297 = vmatprep.subr.bf16.mxu0 0
        %2298 = vmatpush1.bf16.msra.mxu0 %v1957
        %2299 = vmatprep.subr.bf16.mxu0 0
        %2300 = vmatpush1.bf16.msra.mxu0 %v1958
        %2301 = vmatprep.subr.bf16.mxu0 0
        %2302 = vmatpush1.bf16.msra.mxu0 %v1959
        %2303 = vmatprep.subr.bf16.mxu0 0
        %2304 = vmatpush1.bf16.msra.mxu0 %v1960
        %2305 = vmatprep.mubr.bf16.mxu0 %v1113
        %2306 = vmatmul.mubr.bf16.gmra.mrb[0].mxu0 %v1112
        %v2307 = vpop.f32.mrb[0].mxu0
        %v2308 = vadd.f32 %v2268, %v2307
        %v2309 = vpop.f32.mrb[0].mxu0
        %v2310 = vpop.f32.mrb[0].mxu0
        %v2311 = vpop.f32.mrb[0].mxu0
        %2312 = vdwg.mxu0
        %2313 = vmatprep.subr.bf16.mxu0 0
        %2314 = vmatpush1.bf16.msra.mxu0 %v1961
        %2315 = vmatprep.subr.bf16.mxu0 0
        %2316 = vmatpush1.bf16.msra.mxu0 %v1962
        %2317 = vmatprep.subr.bf16.mxu0 0
        %2318 = vmatpush1.bf16.msra.mxu0 %v1963
        %2319 = vmatprep.subr.bf16.mxu0 0
        %2320 = vmatpush1.bf16.msra.mxu0 %v1964
        %2321 = vmatprep.subr.bf16.mxu0 0
        %2322 = vmatpush1.bf16.msra.mxu0 %v1965
        %2323 = vmatprep.subr.bf16.mxu0 0
        %2324 = vmatpush1.bf16.msra.mxu0 %v1966
        %2325 = vmatprep.subr.bf16.mxu0 0
        %2326 = vmatpush1.bf16.msra.mxu0 %v1967
        %2327 = vmatprep.subr.bf16.mxu0 0
        %2328 = vmatpush1.bf16.msra.mxu0 %v1968
        %2329 = vmatprep.subr.bf16.mxu0 0
        %2330 = vmatpush1.bf16.msra.mxu0 %v1969
        %2331 = vmatprep.subr.bf16.mxu0 0
        %2332 = vmatpush1.bf16.msra.mxu0 %v1970
        %2333 = vmatprep.subr.bf16.mxu0 0
        %2334 = vmatpush1.bf16.msra.mxu0 %v1971
        %2335 = vmatprep.subr.bf16.mxu0 0
        %2336 = vmatpush1.bf16.msra.mxu0 %v1972
        %2337 = vmatprep.subr.bf16.mxu0 0
        %2338 = vmatpush1.bf16.msra.mxu0 %v1973
        %2339 = vmatprep.subr.bf16.mxu0 0
        %2340 = vmatpush1.bf16.msra.mxu0 %v1974
        %2341 = vmatprep.subr.bf16.mxu0 0
        %2342 = vmatpush1.bf16.msra.mxu0 %v1975
        %2343 = vmatprep.subr.bf16.mxu0 0
        %2344 = vmatpush1.bf16.msra.mxu0 %v1976
        %2345 = vmatprep.mubr.bf16.mxu0 %v1115
        %2346 = vmatmul.mubr.bf16.gmra.mrb[0].mxu0 %v1114
        %v2347 = vpop.f32.mrb[0].mxu0
        %v2348 = vadd.f32 %v2308, %v2347
        %v2349 = vpop.f32.mrb[0].mxu0
        %v2350 = vpop.f32.mrb[0].mxu0
        %v2351 = vpop.f32.mrb[0].mxu0
        %2352 = vdwg.mxu0
        %2353 = vmatprep.subr.bf16.mxu0 0
        %2354 = vmatpush1.bf16.msra.mxu0 %v1977
        %2355 = vmatprep.subr.bf16.mxu0 0
        %2356 = vmatpush1.bf16.msra.mxu0 %v1978
        %2357 = vmatprep.subr.bf16.mxu0 0
        %2358 = vmatpush1.bf16.msra.mxu0 %v1979
        %2359 = vmatprep.subr.bf16.mxu0 0
        %2360 = vmatpush1.bf16.msra.mxu0 %v1980
        %2361 = vmatprep.subr.bf16.mxu0 0
        %2362 = vmatpush1.bf16.msra.mxu0 %v1981
        %2363 = vmatprep.subr.bf16.mxu0 0
        %2364 = vmatpush1.bf16.msra.mxu0 %v1982
        %2365 = vmatprep.subr.bf16.mxu0 0
        %2366 = vmatpush1.bf16.msra.mxu0 %v1983
        %2367 = vmatprep.subr.bf16.mxu0 0
        %2368 = vmatpush1.bf16.msra.mxu0 %v1984
        %2369 = vmatprep.subr.bf16.mxu0 0
        %2370 = vmatpush1.bf16.msra.mxu0 %v1985
        %2371 = vmatprep.subr.bf16.mxu0 0
        %2372 = vmatpush1.bf16.msra.mxu0 %v1986
        %2373 = vmatprep.subr.bf16.mxu0 0
        %2374 = vmatpush1.bf16.msra.mxu0 %v1987
        %2375 = vmatprep.subr.bf16.mxu0 0
        %2376 = vmatpush1.bf16.msra.mxu0 %v1988
        %2377 = vmatprep.subr.bf16.mxu0 0
        %2378 = vmatpush1.bf16.msra.mxu0 %v1989
        %2379 = vmatprep.subr.bf16.mxu0 0
        %2380 = vmatpush1.bf16.msra.mxu0 %v1990
        %2381 = vmatprep.subr.bf16.mxu0 0
        %2382 = vmatpush1.bf16.msra.mxu0 %v1991
        %2383 = vmatprep.subr.bf16.mxu0 0
        %2384 = vmatpush1.bf16.msra.mxu0 %v1992
        %2385 = vmatprep.mubr.bf16.mxu0 %v1117
        %2386 = vmatmul.mubr.bf16.gmra.mrb[0].mxu0 %v1116
        %v2387 = vpop.f32.mrb[0].mxu0
        %v2388 = vadd.f32 %v2348, %v2387
        %v2389 = vpop.f32.mrb[0].mxu0
        %v2390 = vpop.f32.mrb[0].mxu0
        %v2391 = vpop.f32.mrb[0].mxu0
        %2392 = vdwg.mxu0
        %2393 = vmatprep.subr.bf16.mxu0 0
        %2394 = vmatpush1.bf16.msra.mxu0 %v1993
        %2395 = vmatprep.subr.bf16.mxu0 0
        %2396 = vmatpush1.bf16.msra.mxu0 %v1994
        %2397 = vmatprep.subr.bf16.mxu0 0
        %2398 = vmatpush1.bf16.msra.mxu0 %v1995
        %2399 = vmatprep.subr.bf16.mxu0 0
        %2400 = vmatpush1.bf16.msra.mxu0 %v1996
        %2401 = vmatprep.subr.bf16.mxu0 0
        %2402 = vmatpush1.bf16.msra.mxu0 %v1997
        %2403 = vmatprep.subr.bf16.mxu0 0
        %2404 = vmatpush1.bf16.msra.mxu0 %v1998
        %2405 = vmatprep.subr.bf16.mxu0 0
        %2406 = vmatpush1.bf16.msra.mxu0 %v1999
        %2407 = vmatprep.subr.bf16.mxu0 0
        %2408 = vmatpush1.bf16.msra.mxu0 %v2000
        %2409 = vmatprep.subr.bf16.mxu0 0
        %2410 = vmatpush1.bf16.msra.mxu0 %v2001
        %2411 = vmatprep.subr.bf16.mxu0 0
        %2412 = vmatpush1.bf16.msra.mxu0 %v2002
        %2413 = vmatprep.subr.bf16.mxu0 0
        %2414 = vmatpush1.bf16.msra.mxu0 %v2003
        %2415 = vmatprep.subr.bf16.mxu0 0
        %2416 = vmatpush1.bf16.msra.mxu0 %v2004
        %2417 = vmatprep.subr.bf16.mxu0 0
        %2418 = vmatpush1.bf16.msra.mxu0 %v2005
        %2419 = vmatprep.subr.bf16.mxu0 0
        %2420 = vmatpush1.bf16.msra.mxu0 %v2006
        %2421 = vmatprep.subr.bf16.mxu0 0
        %2422 = vmatpush1.bf16.msra.mxu0 %v2007
        %2423 = vmatprep.subr.bf16.mxu0 0
        %2424 = vmatpush1.bf16.msra.mxu0 %v2008
        %2425 = vmatprep.mubr.bf16.mxu0 %v1119
        %2426 = vmatmul.mubr.bf16.gmra.mrb[0].mxu0 %v1118
        %v2427 = vpop.f32.mrb[0].mxu0
        %v2428 = vadd.f32 %v2388, %v2427
        %v2429 = vpop.f32.mrb[0].mxu0
        %v2430 = vpop.f32.mrb[0].mxu0
        %v2431 = vpop.f32.mrb[0].mxu0
        %2432 = vdwg.mxu0
        %2433 = vmatprep.subr.bf16.mxu0 0
        %2434 = vmatpush1.bf16.msra.mxu0 %v2009
        %2435 = vmatprep.subr.bf16.mxu0 0
        %2436 = vmatpush1.bf16.msra.mxu0 %v2010
        %2437 = vmatprep.subr.bf16.mxu0 0
        %2438 = vmatpush1.bf16.msra.mxu0 %v2011
        %2439 = vmatprep.subr.bf16.mxu0 0
        %2440 = vmatpush1.bf16.msra.mxu0 %v2012
        %2441 = vmatprep.subr.bf16.mxu0 0
        %2442 = vmatpush1.bf16.msra.mxu0 %v2013
        %2443 = vmatprep.subr.bf16.mxu0 0
        %2444 = vmatpush1.bf16.msra.mxu0 %v2014
        %2445 = vmatprep.subr.bf16.mxu0 0
        %2446 = vmatpush1.bf16.msra.mxu0 %v2015
        %2447 = vmatprep.subr.bf16.mxu0 0
        %2448 = vmatpush1.bf16.msra.mxu0 %v2016
        %2449 = vmatprep.subr.bf16.mxu0 0
        %2450 = vmatpush1.bf16.msra.mxu0 %v2017
        %2451 = vmatprep.subr.bf16.mxu0 0
        %2452 = vmatpush1.bf16.msra.mxu0 %v2018
        %2453 = vmatprep.subr.bf16.mxu0 0
        %2454 = vmatpush1.bf16.msra.mxu0 %v2019
        %2455 = vmatprep.subr.bf16.mxu0 0
        %2456 = vmatpush1.bf16.msra.mxu0 %v2020
        %2457 = vmatprep.subr.bf16.mxu0 0
        %2458 = vmatpush1.bf16.msra.mxu0 %v2021
        %2459 = vmatprep.subr.bf16.mxu0 0
        %2460 = vmatpush1.bf16.msra.mxu0 %v2022
        %2461 = vmatprep.subr.bf16.mxu0 0
        %2462 = vmatpush1.bf16.msra.mxu0 %v2023
        %2463 = vmatprep.subr.bf16.mxu0 0
        %2464 = vmatpush1.bf16.msra.mxu0 %v2024
        %2465 = vmatprep.mubr.bf16.mxu0 %v1121
        %2466 = vmatmul.mubr.bf16.gmra.mrb[0].mxu0 %v1120
        %v2467 = vpop.f32.mrb[0].mxu0
        %v2468 = vadd.f32 %v2428, %v2467
        %v2469 = vpop.f32.mrb[0].mxu0
        %v2470 = vpop.f32.mrb[0].mxu0
        %v2471 = vpop.f32.mrb[0].mxu0
        %2472 = vdwg.mxu0
        %v2473 = vmax.f32 %v2468, 0.0
        %v2474 = vpack.c.bf16 %v2473, %v2473
        %v2475 = vld [vmem:[%s5] sm:$0xff]
        %v2476 = vld [vmem:[%s5 + $0x8] sm:$0xff]
        %v2477 = vld [vmem:[%s5 + $0x10] sm:$0xff]
        %v2478 = vld [vmem:[%s5 + $0x18] sm:$0xff]
        %v2479 = vld [vmem:[%s5 + $0x20] sm:$0xff]
        %v2480 = vld [vmem:[%s5 + $0x28] sm:$0xff]
        %v2481 = vld [vmem:[%s5 + $0x30] sm:$0xff]
        %v2482 = vld [vmem:[%s5 + $0x38] sm:$0xff]
        %v2483 = vld [vmem:[%s5 + $0x40] sm:$0xff]
        %v2484 = vld [vmem:[%s5 + $0x48] sm:$0xff]
        %v2485 = vld [vmem:[%s5 + $0x50] sm:$0xff]
        %v2486 = vld [vmem:[%s5 + $0x58] sm:$0xff]
        %v2487 = vld [vmem:[%s5 + $0x60] sm:$0xff]
        %v2488 = vld [vmem:[%s5 + $0x68] sm:$0xff]
        %v2489 = vld [vmem:[%s5 + $0x70] sm:$0xff]
        %v2490 = vld [vmem:[%s5 + $0x78] sm:$0xff]
        %v2491 = vld [vmem:[%s5 + $0x80] sm:$0xff]
        %v2492 = vld [vmem:[%s5 + $0x88] sm:$0xff]
        %v2493 = vld [vmem:[%s5 + $0x90] sm:$0xff]
        %v2494 = vld [vmem:[%s5 + $0x98] sm:$0xff]
        %v2495 = vld [vmem:[%s5 + $0xa0] sm:$0xff]
        %v2496 = vld [vmem:[%s5 + $0xa8] sm:$0xff]
        %v2497 = vld [vmem:[%s5 + $0xb0] sm:$0xff]
        %v2498 = vld [vmem:[%s5 + $0xb8] sm:$0xff]
        %v2499 = vld [vmem:[%s5 + $0xc0] sm:$0xff]
        %v2500 = vld [vmem:[%s5 + $0xc8] sm:$0xff]
        %v2501 = vld [vmem:[%s5 + $0xd0] sm:$0xff]
        %v2502 = vld [vmem:[%s5 + $0xd8] sm:$0xff]
        %v2503 = vld [vmem:[%s5 + $0xe0] sm:$0xff]
        %v2504 = vld [vmem:[%s5 + $0xe8] sm:$0xff]
        %v2505 = vld [vmem:[%s5 + $0xf0] sm:$0xff]
        %v2506 = vld [vmem:[%s5 + $0xf8] sm:$0xff]
        %v2507 = vld [vmem:[%s5 + $0x100] sm:$0xff]
        %v2508 = vld [vmem:[%s5 + $0x108] sm:$0xff]
        %v2509 = vld [vmem:[%s5 + $0x110] sm:$0xff]
        %v2510 = vld [vmem:[%s5 + $0x118] sm:$0xff]
        %v2511 = vld [vmem:[%s5 + $0x120] sm:$0xff]
        %v2512 = vld [vmem:[%s5 + $0x128] sm:$0xff]
        %v2513 = vld [vmem:[%s5 + $0x130] sm:$0xff]
        %v2514 = vld [vmem:[%s5 + $0x138] sm:$0xff]
        %v2515 = vld [vmem:[%s5 + $0x140] sm:$0xff]
        %v2516 = vld [vmem:[%s5 + $0x148] sm:$0xff]
        %v2517 = vld [vmem:[%s5 + $0x150] sm:$0xff]
        %v2518 = vld [vmem:[%s5 + $0x158] sm:$0xff]
        %v2519 = vld [vmem:[%s5 + $0x160] sm:$0xff]
        %v2520 = vld [vmem:[%s5 + $0x168] sm:$0xff]
        %v2521 = vld [vmem:[%s5 + $0x170] sm:$0xff]
        %v2522 = vld [vmem:[%s5 + $0x178] sm:$0xff]
        %v2523 = vld [vmem:[%s5 + $0x180] sm:$0xff]
        %v2524 = vld [vmem:[%s5 + $0x188] sm:$0xff]
        %v2525 = vld [vmem:[%s5 + $0x190] sm:$0xff]
        %v2526 = vld [vmem:[%s5 + $0x198] sm:$0xff]
        %v2527 = vld [vmem:[%s5 + $0x1a0] sm:$0xff]
        %v2528 = vld [vmem:[%s5 + $0x1a8] sm:$0xff]
        %v2529 = vld [vmem:[%s5 + $0x1b0] sm:$0xff]
        %v2530 = vld [vmem:[%s5 + $0x1b8] sm:$0xff]
        %v2531 = vld [vmem:[%s5 + $0x1c0] sm:$0xff]
        %v2532 = vld [vmem:[%s5 + $0x1c8] sm:$0xff]
        %v2533 = vld [vmem:[%s5 + $0x1d0] sm:$0xff]
        %v2534 = vld [vmem:[%s5 + $0x1d8] sm:$0xff]
        %v2535 = vld [vmem:[%s5 + $0x1e0] sm:$0xff]
        %v2536 = vld [vmem:[%s5 + $0x1e8] sm:$0xff]
        %v2537 = vld [vmem:[%s5 + $0x1f0] sm:$0xff]
        %v2538 = vld [vmem:[%s5 + $0x1f8] sm:$0xff]
        %v2539 = vld [vmem:[%s6] sm:$0xff]
        %v2541 = vlaneseq
        %v2542 = vshrl.u32 %v2541, 7
        %v2543 = vsub.s32 0, %v2542
        %v2544 = vrot.slane %v2539, %v2543
        %v2545 = vlaneseq
        %v2546 = vshrl.u32 %v2545, 7
        %v2547 = vsub.s32 1, %v2546
        %v2548 = vrot.slane %v2539, %v2547
        %v2549 = vlaneseq
        %v2550 = vshrl.u32 %v2549, 7
        %v2551 = vsub.s32 2, %v2550
        %v2552 = vrot.slane %v2539, %v2551
        %v2553 = vlaneseq
        %v2554 = vshrl.u32 %v2553, 7
        %v2555 = vsub.s32 3, %v2554
        %v2556 = vrot.slane %v2539, %v2555
        %v2557 = vlaneseq
        %v2558 = vshrl.u32 %v2557, 7
        %v2559 = vsub.s32 4, %v2558
        %v2560 = vrot.slane %v2539, %v2559
        %v2561 = vlaneseq
        %v2562 = vshrl.u32 %v2561, 7
        %v2563 = vsub.s32 5, %v2562
        %v2564 = vrot.slane %v2539, %v2563
        %v2565 = vlaneseq
        %v2566 = vshrl.u32 %v2565, 7
        %v2567 = vsub.s32 6, %v2566
        %v2568 = vrot.slane %v2539, %v2567
        %v2569 = vlaneseq
        %v2570 = vshrl.u32 %v2569, 7
        %v2571 = vsub.s32 7, %v2570
        %v2572 = vrot.slane %v2539, %v2571
        %v2645 = vunpack.c.l.b16 %v2475
        %v2646 = vunpack.c.h.b16 %v2475
        %v2647 = vunpack.c.l.b16 %v2476
        %v2648 = vunpack.c.h.b16 %v2476
        %v2649 = vunpack.c.l.b16 %v2477
        %v2650 = vunpack.c.h.b16 %v2477
        %v2651 = vunpack.c.l.b16 %v2478
        %v2652 = vunpack.c.h.b16 %v2478
        %v2653 = vunpack.c.l.b16 %v2479
        %v2654 = vunpack.c.h.b16 %v2479
        %v2655 = vunpack.c.l.b16 %v2480
        %v2656 = vunpack.c.h.b16 %v2480
        %v2657 = vunpack.c.l.b16 %v2481
        %v2658 = vunpack.c.h.b16 %v2481
        %v2659 = vunpack.c.l.b16 %v2482
        %v2660 = vunpack.c.h.b16 %v2482
        %v2661 = vunpack.c.l.b16 %v2483
        %v2662 = vunpack.c.h.b16 %v2483
        %v2663 = vunpack.c.l.b16 %v2484
        %v2664 = vunpack.c.h.b16 %v2484
        %v2665 = vunpack.c.l.b16 %v2485
        %v2666 = vunpack.c.h.b16 %v2485
        %v2667 = vunpack.c.l.b16 %v2486
        %v2668 = vunpack.c.h.b16 %v2486
        %v2669 = vunpack.c.l.b16 %v2487
        %v2670 = vunpack.c.h.b16 %v2487
        %v2671 = vunpack.c.l.b16 %v2488
        %v2672 = vunpack.c.h.b16 %v2488
        %v2673 = vunpack.c.l.b16 %v2489
        %v2674 = vunpack.c.h.b16 %v2489
        %v2675 = vunpack.c.l.b16 %v2490
        %v2676 = vunpack.c.h.b16 %v2490
        %v2677 = vunpack.c.l.b16 %v2491
        %v2678 = vunpack.c.h.b16 %v2491
        %v2679 = vunpack.c.l.b16 %v2492
        %v2680 = vunpack.c.h.b16 %v2492
        %v2681 = vunpack.c.l.b16 %v2493
        %v2682 = vunpack.c.h.b16 %v2493
        %v2683 = vunpack.c.l.b16 %v2494
        %v2684 = vunpack.c.h.b16 %v2494
        %v2685 = vunpack.c.l.b16 %v2495
        %v2686 = vunpack.c.h.b16 %v2495
        %v2687 = vunpack.c.l.b16 %v2496
        %v2688 = vunpack.c.h.b16 %v2496
        %v2689 = vunpack.c.l.b16 %v2497
        %v2690 = vunpack.c.h.b16 %v2497
        %v2691 = vunpack.c.l.b16 %v2498
        %v2692 = vunpack.c.h.b16 %v2498
        %v2693 = vunpack.c.l.b16 %v2499
        %v2694 = vunpack.c.h.b16 %v2499
        %v2695 = vunpack.c.l.b16 %v2500
        %v2696 = vunpack.c.h.b16 %v2500
        %v2697 = vunpack.c.l.b16 %v2501
        %v2698 = vunpack.c.h.b16 %v2501
        %v2699 = vunpack.c.l.b16 %v2502
        %v2700 = vunpack.c.h.b16 %v2502
        %v2701 = vunpack.c.l.b16 %v2503
        %v2702 = vunpack.c.h.b16 %v2503
        %v2703 = vunpack.c.l.b16 %v2504
        %v2704 = vunpack.c.h.b16 %v2504
        %v2705 = vunpack.c.l.b16 %v2505
        %v2706 = vunpack.c.h.b16 %v2505
        %v2707 = vunpack.c.l.b16 %v2506
        %v2708 = vunpack.c.h.b16 %v2506
        %v2709 = vunpack.c.l.b16 %v2507
        %v2710 = vunpack.c.h.b16 %v2507
        %v2711 = vunpack.c.l.b16 %v2508
        %v2712 = vunpack.c.h.b16 %v2508
        %v2713 = vunpack.c.l.b16 %v2509
        %v2714 = vunpack.c.h.b16 %v2509
        %v2715 = vunpack.c.l.b16 %v2510
        %v2716 = vunpack.c.h.b16 %v2510
        %v2717 = vunpack.c.l.b16 %v2511
        %v2718 = vunpack.c.h.b16 %v2511
        %v2719 = vunpack.c.l.b16 %v2512
        %v2720 = vunpack.c.h.b16 %v2512
        %v2721 = vunpack.c.l.b16 %v2513
        %v2722 = vunpack.c.h.b16 %v2513
        %v2723 = vunpack.c.l.b16 %v2514
        %v2724 = vunpack.c.h.b16 %v2514
        %v2725 = vunpack.c.l.b16 %v2515
        %v2726 = vunpack.c.h.b16 %v2515
        %v2727 = vunpack.c.l.b16 %v2516
        %v2728 = vunpack.c.h.b16 %v2516
        %v2729 = vunpack.c.l.b16 %v2517
        %v2730 = vunpack.c.h.b16 %v2517
        %v2731 = vunpack.c.l.b16 %v2518
        %v2732 = vunpack.c.h.b16 %v2518
        %v2733 = vunpack.c.l.b16 %v2519
        %v2734 = vunpack.c.h.b16 %v2519
        %v2735 = vunpack.c.l.b16 %v2520
        %v2736 = vunpack.c.h.b16 %v2520
        %v2737 = vunpack.c.l.b16 %v2521
        %v2738 = vunpack.c.h.b16 %v2521
        %v2739 = vunpack.c.l.b16 %v2522
        %v2740 = vunpack.c.h.b16 %v2522
        %v2741 = vunpack.c.l.b16 %v2523
        %v2742 = vunpack.c.h.b16 %v2523
        %v2743 = vunpack.c.l.b16 %v2524
        %v2744 = vunpack.c.h.b16 %v2524
        %v2745 = vunpack.c.l.b16 %v2525
        %v2746 = vunpack.c.h.b16 %v2525
        %v2747 = vunpack.c.l.b16 %v2526
        %v2748 = vunpack.c.h.b16 %v2526
        %v2749 = vunpack.c.l.b16 %v2527
        %v2750 = vunpack.c.h.b16 %v2527
        %v2751 = vunpack.c.l.b16 %v2528
        %v2752 = vunpack.c.h.b16 %v2528
        %v2753 = vunpack.c.l.b16 %v2529
        %v2754 = vunpack.c.h.b16 %v2529
        %v2755 = vunpack.c.l.b16 %v2530
        %v2756 = vunpack.c.h.b16 %v2530
        %v2757 = vunpack.c.l.b16 %v2531
        %v2758 = vunpack.c.h.b16 %v2531
        %v2759 = vunpack.c.l.b16 %v2532
        %v2760 = vunpack.c.h.b16 %v2532
        %v2761 = vunpack.c.l.b16 %v2533
        %v2762 = vunpack.c.h.b16 %v2533
        %v2763 = vunpack.c.l.b16 %v2534
        %v2764 = vunpack.c.h.b16 %v2534
        %v2765 = vunpack.c.l.b16 %v2535
        %v2766 = vunpack.c.h.b16 %v2535
        %v2767 = vunpack.c.l.b16 %v2536
        %v2768 = vunpack.c.h.b16 %v2536
        %v2769 = vunpack.c.l.b16 %v2537
        %v2770 = vunpack.c.h.b16 %v2537
        %v2771 = vunpack.c.l.b16 %v2538
        %v2772 = vunpack.c.h.b16 %v2538
        %v2773 = vpack.c.b16 %v2653, %v2645
        %v2774 = vpack.c.b16 %v2654, %v2646
        %v2775 = vpack.c.b16 %v2655, %v2647
        %v2776 = vpack.c.b16 %v2656, %v2648
        %v2777 = vpack.c.b16 %v2657, %v2649
        %v2778 = vpack.c.b16 %v2658, %v2650
        %v2779 = vpack.c.b16 %v2659, %v2651
        %v2780 = vpack.c.b16 %v2660, %v2652
        %v2781 = vpack.c.b16 %v2669, %v2661
        %v2782 = vpack.c.b16 %v2670, %v2662
        %v2783 = vpack.c.b16 %v2671, %v2663
        %v2784 = vpack.c.b16 %v2672, %v2664
        %v2785 = vpack.c.b16 %v2673, %v2665
        %v2786 = vpack.c.b16 %v2674, %v2666
        %v2787 = vpack.c.b16 %v2675, %v2667
        %v2788 = vpack.c.b16 %v2676, %v2668
        %v2789 = vpack.c.b16 %v2685, %v2677
        %v2790 = vpack.c.b16 %v2686, %v2678
        %v2791 = vpack.c.b16 %v2687, %v2679
        %v2792 = vpack.c.b16 %v2688, %v2680
        %v2793 = vpack.c.b16 %v2689, %v2681
        %v2794 = vpack.c.b16 %v2690, %v2682
        %v2795 = vpack.c.b16 %v2691, %v2683
        %v2796 = vpack.c.b16 %v2692, %v2684
        %v2797 = vpack.c.b16 %v2701, %v2693
        %v2798 = vpack.c.b16 %v2702, %v2694
        %v2799 = vpack.c.b16 %v2703, %v2695
        %v2800 = vpack.c.b16 %v2704, %v2696
        %v2801 = vpack.c.b16 %v2705, %v2697
        %v2802 = vpack.c.b16 %v2706, %v2698
        %v2803 = vpack.c.b16 %v2707, %v2699
        %v2804 = vpack.c.b16 %v2708, %v2700
        %v2805 = vpack.c.b16 %v2717, %v2709
        %v2806 = vpack.c.b16 %v2718, %v2710
        %v2807 = vpack.c.b16 %v2719, %v2711
        %v2808 = vpack.c.b16 %v2720, %v2712
        %v2809 = vpack.c.b16 %v2721, %v2713
        %v2810 = vpack.c.b16 %v2722, %v2714
        %v2811 = vpack.c.b16 %v2723, %v2715
        %v2812 = vpack.c.b16 %v2724, %v2716
        %v2813 = vpack.c.b16 %v2733, %v2725
        %v2814 = vpack.c.b16 %v2734, %v2726
        %v2815 = vpack.c.b16 %v2735, %v2727
        %v2816 = vpack.c.b16 %v2736, %v2728
        %v2817 = vpack.c.b16 %v2737, %v2729
        %v2818 = vpack.c.b16 %v2738, %v2730
        %v2819 = vpack.c.b16 %v2739, %v2731
        %v2820 = vpack.c.b16 %v2740, %v2732
        %v2821 = vpack.c.b16 %v2749, %v2741
        %v2822 = vpack.c.b16 %v2750, %v2742
        %v2823 = vpack.c.b16 %v2751, %v2743
        %v2824 = vpack.c.b16 %v2752, %v2744
        %v2825 = vpack.c.b16 %v2753, %v2745
        %v2826 = vpack.c.b16 %v2754, %v2746
        %v2827 = vpack.c.b16 %v2755, %v2747
        %v2828 = vpack.c.b16 %v2756, %v2748
        %v2829 = vpack.c.b16 %v2765, %v2757
        %v2830 = vpack.c.b16 %v2766, %v2758
        %v2831 = vpack.c.b16 %v2767, %v2759
        %v2832 = vpack.c.b16 %v2768, %v2760
        %v2833 = vpack.c.b16 %v2769, %v2761
        %v2834 = vpack.c.b16 %v2770, %v2762
        %v2835 = vpack.c.b16 %v2771, %v2763
        %v2836 = vpack.c.b16 %v2772, %v2764
        %2901 = vmatprep.subr.bf16.mxu0 %v2774
        %2902 = vmatpush1.bf16.msra.mxu0 %v2773
        %2903 = vmatprep.subr.bf16.mxu0 %v2782
        %2904 = vmatpush1.bf16.msra.mxu0 %v2781
        %2905 = vmatprep.subr.bf16.mxu0 %v2790
        %2906 = vmatpush1.bf16.msra.mxu0 %v2789
        %2907 = vmatprep.subr.bf16.mxu0 %v2798
        %2908 = vmatpush1.bf16.msra.mxu0 %v2797
        %2909 = vmatprep.subr.bf16.mxu0 %v2806
        %2910 = vmatpush1.bf16.msra.mxu0 %v2805
        %2911 = vmatprep.subr.bf16.mxu0 %v2814
        %2912 = vmatpush1.bf16.msra.mxu0 %v2813
        %2913 = vmatprep.subr.bf16.mxu0 %v2822
        %2914 = vmatpush1.bf16.msra.mxu0 %v2821
        %2915 = vmatprep.subr.bf16.mxu0 %v2830
        %2916 = vmatpush1.bf16.msra.mxu0 %v2829
        %2917 = vmatprep.subr.bf16.mxu0 0
        %2918 = vmatpush1.bf16.msra.mxu0 0
        %2919 = vmatprep.subr.bf16.mxu0 0
        %2920 = vmatpush1.bf16.msra.mxu0 0
        %2921 = vmatprep.subr.bf16.mxu0 0
        %2922 = vmatpush1.bf16.msra.mxu0 0
        %2923 = vmatprep.subr.bf16.mxu0 0
        %2924 = vmatpush1.bf16.msra.mxu0 0
        %2925 = vmatprep.subr.bf16.mxu0 0
        %2926 = vmatpush1.bf16.msra.mxu0 0
        %2927 = vmatprep.subr.bf16.mxu0 0
        %2928 = vmatpush1.bf16.msra.mxu0 0
        %2929 = vmatprep.subr.bf16.mxu0 0
        %2930 = vmatpush1.bf16.msra.mxu0 0
        %2931 = vmatprep.subr.bf16.mxu0 0
        %2932 = vmatpush1.bf16.msra.mxu0 0
        %2933 = vmatprep.mubr.bf16.mxu0 0
        %2934 = vmatmul.mubr.bf16.gmra.mrb[0].mxu0 %v2474
        %v2935 = vpop.f32.mrb[0].mxu0
        %v2936 = vadd.f32 %v2544, %v2935
        %v2937 = vpop.f32.mrb[0].mxu0
        %v2938 = vadd.f32 %v2548, %v2937
        %v2939 = vpop.f32.mrb[0].mxu0
        %v2940 = vpop.f32.mrb[0].mxu0
        %2941 = vdwg.mxu0
        %2942 = vmatprep.subr.bf16.mxu0 %v2776
        %2943 = vmatpush1.bf16.msra.mxu0 %v2775
        %2944 = vmatprep.subr.bf16.mxu0 %v2784
        %2945 = vmatpush1.bf16.msra.mxu0 %v2783
        %2946 = vmatprep.subr.bf16.mxu0 %v2792
        %2947 = vmatpush1.bf16.msra.mxu0 %v2791
        %2948 = vmatprep.subr.bf16.mxu0 %v2800
        %2949 = vmatpush1.bf16.msra.mxu0 %v2799
        %2950 = vmatprep.subr.bf16.mxu0 %v2808
        %2951 = vmatpush1.bf16.msra.mxu0 %v2807
        %2952 = vmatprep.subr.bf16.mxu0 %v2816
        %2953 = vmatpush1.bf16.msra.mxu0 %v2815
        %2954 = vmatprep.subr.bf16.mxu0 %v2824
        %2955 = vmatpush1.bf16.msra.mxu0 %v2823
        %2956 = vmatprep.subr.bf16.mxu0 %v2832
        %2957 = vmatpush1.bf16.msra.mxu0 %v2831
        %2958 = vmatprep.subr.bf16.mxu0 0
        %2959 = vmatpush1.bf16.msra.mxu0 0
        %2960 = vmatprep.subr.bf16.mxu0 0
        %2961 = vmatpush1.bf16.msra.mxu0 0
        %2962 = vmatprep.subr.bf16.mxu0 0
        %2963 = vmatpush1.bf16.msra.mxu0 0
        %2964 = vmatprep.subr.bf16.mxu0 0
        %2965 = vmatpush1.bf16.msra.mxu0 0
        %2966 = vmatprep.subr.bf16.mxu0 0
        %2967 = vmatpush1.bf16.msra.mxu0 0
        %2968 = vmatprep.subr.bf16.mxu0 0
        %2969 = vmatpush1.bf16.msra.mxu0 0
        %2970 = vmatprep.subr.bf16.mxu0 0
        %2971 = vmatpush1.bf16.msra.mxu0 0
        %2972 = vmatprep.subr.bf16.mxu0 0
        %2973 = vmatpush1.bf16.msra.mxu0 0
        %2974 = vmatprep.mubr.bf16.mxu0 0
        %2975 = vmatmul.mubr.bf16.gmra.mrb[0].mxu0 %v2474
        %v2976 = vpop.f32.mrb[0].mxu0
        %v2977 = vadd.f32 %v2552, %v2976
        %v2978 = vpop.f32.mrb[0].mxu0
        %v2979 = vadd.f32 %v2556, %v2978
        %v2980 = vpop.f32.mrb[0].mxu0
        %v2981 = vpop.f32.mrb[0].mxu0
        %2982 = vdwg.mxu0
        %2983 = vmatprep.subr.bf16.mxu0 %v2778
        %2984 = vmatpush1.bf16.msra.mxu0 %v2777
        %2985 = vmatprep.subr.bf16.mxu0 %v2786
        %2986 = vmatpush1.bf16.msra.mxu0 %v2785
        %2987 = vmatprep.subr.bf16.mxu0 %v2794
        %2988 = vmatpush1.bf16.msra.mxu0 %v2793
        %2989 = vmatprep.subr.bf16.mxu0 %v2802
        %2990 = vmatpush1.bf16.msra.mxu0 %v2801
        %2991 = vmatprep.subr.bf16.mxu0 %v2810
        %2992 = vmatpush1.bf16.msra.mxu0 %v2809
        %2993 = vmatprep.subr.bf16.mxu0 %v2818
        %2994 = vmatpush1.bf16.msra.mxu0 %v2817
        %2995 = vmatprep.subr.bf16.mxu0 %v2826
        %2996 = vmatpush1.bf16.msra.mxu0 %v2825
        %2997 = vmatprep.subr.bf16.mxu0 %v2834
        %2998 = vmatpush1.bf16.msra.mxu0 %v2833
        %2999 = vmatprep.subr.bf16.mxu0 0
        %3000 = vmatpush1.bf16.msra.mxu0 0
        %3001 = vmatprep.subr.bf16.mxu0 0
        %3002 = vmatpush1.bf16.msra.mxu0 0
        %3003 = vmatprep.subr.bf16.mxu0 0
        %3004 = vmatpush1.bf16.msra.mxu0 0
        %3005 = vmatprep.subr.bf16.mxu0 0
        %3006 = vmatpush1.bf16.msra.mxu0 0
        %3007 = vmatprep.subr.bf16.mxu0 0
        %3008 = vmatpush1.bf16.msra.mxu0 0
        %3009 = vmatprep.subr.bf16.mxu0 0
        %3010 = vmatpush1.bf16.msra.mxu0 0
        %3011 = vmatprep.subr.bf16.mxu0 0
        %3012 = vmatpush1.bf16.msra.mxu0 0
        %3013 = vmatprep.subr.bf16.mxu0 0
        %3014 = vmatpush1.bf16.msra.mxu0 0
        %3015 = vmatprep.mubr.bf16.mxu0 0
        %3016 = vmatmul.mubr.bf16.gmra.mrb[0].mxu0 %v2474
        %v3017 = vpop.f32.mrb[0].mxu0
        %v3018 = vadd.f32 %v2560, %v3017
        %v3019 = vpop.f32.mrb[0].mxu0
        %v3020 = vadd.f32 %v2564, %v3019
        %v3021 = vpop.f32.mrb[0].mxu0
        %v3022 = vpop.f32.mrb[0].mxu0
        %3023 = vdwg.mxu0
        %3024 = vmatprep.subr.bf16.mxu0 %v2780
        %3025 = vmatpush1.bf16.msra.mxu0 %v2779
        %3026 = vmatprep.subr.bf16.mxu0 %v2788
        %3027 = vmatpush1.bf16.msra.mxu0 %v2787
        %3028 = vmatprep.subr.bf16.mxu0 %v2796
        %3029 = vmatpush1.bf16.msra.mxu0 %v2795
        %3030 = vmatprep.subr.bf16.mxu0 %v2804
        %3031 = vmatpush1.bf16.msra.mxu0 %v2803
        %3032 = vmatprep.subr.bf16.mxu0 %v2812
        %3033 = vmatpush1.bf16.msra.mxu0 %v2811
        %3034 = vmatprep.subr.bf16.mxu0 %v2820
        %3035 = vmatpush1.bf16.msra.mxu0 %v2819
        %3036 = vmatprep.subr.bf16.mxu0 %v2828
        %3037 = vmatpush1.bf16.msra.mxu0 %v2827
        %3038 = vmatprep.subr.bf16.mxu0 %v2836
        %3039 = vmatpush1.bf16.msra.mxu0 %v2835
        %3040 = vmatprep.subr.bf16.mxu0 0
        %3041 = vmatpush1.bf16.msra.mxu0 0
        %3042 = vmatprep.subr.bf16.mxu0 0
        %3043 = vmatpush1.bf16.msra.mxu0 0
        %3044 = vmatprep.subr.bf16.mxu0 0
        %3045 = vmatpush1.bf16.msra.mxu0 0
        %3046 = vmatprep.subr.bf16.mxu0 0
        %3047 = vmatpush1.bf16.msra.mxu0 0
        %3048 = vmatprep.subr.bf16.mxu0 0
        %3049 = vmatpush1.bf16.msra.mxu0 0
        %3050 = vmatprep.subr.bf16.mxu0 0
        %3051 = vmatpush1.bf16.msra.mxu0 0
        %3052 = vmatprep.subr.bf16.mxu0 0
        %3053 = vmatpush1.bf16.msra.mxu0 0
        %3054 = vmatprep.subr.bf16.mxu0 0
        %3055 = vmatpush1.bf16.msra.mxu0 0
        %3056 = vmatprep.mubr.bf16.mxu0 0
        %3057 = vmatmul.mubr.bf16.gmra.mrb[0].mxu0 %v2474
        %v3058 = vpop.f32.mrb[0].mxu0
        %v3059 = vadd.f32 %v2568, %v3058
        %v3060 = vpop.f32.mrb[0].mxu0
        %v3061 = vadd.f32 %v2572, %v3060
        %v3062 = vpop.f32.mrb[0].mxu0
        %v3063 = vpop.f32.mrb[0].mxu0
        %3064 = vdwg.mxu0
        %v3065 = vmax.f32 %v2936, 0.0
        %v3066 = vmax.f32 %v2938, 0.0
        %v3067 = vmax.f32 %v2977, 0.0
        %v3068 = vmax.f32 %v2979, 0.0
        %v3069 = vmax.f32 %v3018, 0.0
        %v3070 = vmax.f32 %v3020, 0.0
        %v3071 = vmax.f32 %v3059, 0.0
        %v3072 = vmax.f32 %v3061, 0.0
        %v3073 = vpack.c.bf16 %v3065, %v3065
        %v3074 = vpack.c.bf16 %v3066, %v3066
        %v3075 = vpack.c.bf16 %v3067, %v3067
        %v3076 = vpack.c.bf16 %v3068, %v3068
        %v3077 = vpack.c.bf16 %v3069, %v3069
        %v3078 = vpack.c.bf16 %v3070, %v3070
        %v3079 = vpack.c.bf16 %v3071, %v3071
        %v3080 = vpack.c.bf16 %v3072, %v3072
        %v3081 = vld [vmem:[%s7] sm:$0xf]
        %v3082 = vld [vmem:[%s7 + $0x4] sm:$0xf]
        %v3083 = vld [vmem:[%s7 + $0x8] sm:$0xf]
        %v3084 = vld [vmem:[%s7 + $0xc] sm:$0xf]
        %v3085 = vld [vmem:[%s7 + $0x10] sm:$0xf]
        %v3086 = vld [vmem:[%s7 + $0x14] sm:$0xf]
        %v3087 = vld [vmem:[%s7 + $0x18] sm:$0xf]
        %v3088 = vld [vmem:[%s7 + $0x1c] sm:$0xf]
        %v3089 = vld [vmem:[%s7 + $0x20] sm:$0xf]
        %v3090 = vld [vmem:[%s7 + $0x24] sm:$0xf]
        %v3091 = vld [vmem:[%s7 + $0x28] sm:$0xf]
        %v3092 = vld [vmem:[%s7 + $0x2c] sm:$0xf]
        %v3093 = vld [vmem:[%s7 + $0x30] sm:$0xf]
        %v3094 = vld [vmem:[%s7 + $0x34] sm:$0xf]
        %v3095 = vld [vmem:[%s7 + $0x38] sm:$0xf]
        %v3096 = vld [vmem:[%s7 + $0x3c] sm:$0xf]
        %v3097 = vld [vmem:[%s7 + $0x40] sm:$0xf]
        %v3098 = vld [vmem:[%s7 + $0x44] sm:$0xf]
        %v3099 = vld [vmem:[%s7 + $0x48] sm:$0xf]
        %v3100 = vld [vmem:[%s7 + $0x4c] sm:$0xf]
        %v3101 = vld [vmem:[%s7 + $0x50] sm:$0xf]
        %v3102 = vld [vmem:[%s7 + $0x54] sm:$0xf]
        %v3103 = vld [vmem:[%s7 + $0x58] sm:$0xf]
        %v3104 = vld [vmem:[%s7 + $0x5c] sm:$0xf]
        %v3105 = vld [vmem:[%s7 + $0x60] sm:$0xf]
        %v3106 = vld [vmem:[%s7 + $0x64] sm:$0xf]
        %v3107 = vld [vmem:[%s7 + $0x68] sm:$0xf]
        %v3108 = vld [vmem:[%s7 + $0x6c] sm:$0xf]
        %v3109 = vld [vmem:[%s7 + $0x70] sm:$0xf]
        %v3110 = vld [vmem:[%s7 + $0x74] sm:$0xf]
        %v3111 = vld [vmem:[%s7 + $0x78] sm:$0xf]
        %v3112 = vld [vmem:[%s7 + $0x7c] sm:$0xf]
        %v3113 = vld [vmem:[%s7 + $0x80] sm:$0xf]
        %v3114 = vld [vmem:[%s7 + $0x84] sm:$0xf]
        %v3115 = vld [vmem:[%s7 + $0x88] sm:$0xf]
        %v3116 = vld [vmem:[%s7 + $0x8c] sm:$0xf]
        %v3117 = vld [vmem:[%s7 + $0x90] sm:$0xf]
        %v3118 = vld [vmem:[%s7 + $0x94] sm:$0xf]
        %v3119 = vld [vmem:[%s7 + $0x98] sm:$0xf]
        %v3120 = vld [vmem:[%s7 + $0x9c] sm:$0xf]
        %v3121 = vld [vmem:[%s7 + $0xa0] sm:$0xf]
        %v3122 = vld [vmem:[%s7 + $0xa4] sm:$0xf]
        %v3123 = vld [vmem:[%s7 + $0xa8] sm:$0xf]
        %v3124 = vld [vmem:[%s7 + $0xac] sm:$0xf]
        %v3125 = vld [vmem:[%s7 + $0xb0] sm:$0xf]
        %v3126 = vld [vmem:[%s7 + $0xb4] sm:$0xf]
        %v3127 = vld [vmem:[%s7 + $0xb8] sm:$0xf]
        %v3128 = vld [vmem:[%s7 + $0xbc] sm:$0xf]
        %v3129 = vld [vmem:[%s7 + $0xc0] sm:$0xf]
        %v3130 = vld [vmem:[%s7 + $0xc4] sm:$0xf]
        %v3131 = vld [vmem:[%s7 + $0xc8] sm:$0xf]
        %v3132 = vld [vmem:[%s7 + $0xcc] sm:$0xf]
        %v3133 = vld [vmem:[%s7 + $0xd0] sm:$0xf]
        %v3134 = vld [vmem:[%s7 + $0xd4] sm:$0xf]
        %v3135 = vld [vmem:[%s7 + $0xd8] sm:$0xf]
        %v3136 = vld [vmem:[%s7 + $0xdc] sm:$0xf]
        %v3137 = vld [vmem:[%s7 + $0xe0] sm:$0xf]
        %v3138 = vld [vmem:[%s7 + $0xe4] sm:$0xf]
        %v3139 = vld [vmem:[%s7 + $0xe8] sm:$0xf]
        %v3140 = vld [vmem:[%s7 + $0xec] sm:$0xf]
        %v3141 = vld [vmem:[%s7 + $0xf0] sm:$0xf]
        %v3142 = vld [vmem:[%s7 + $0xf4] sm:$0xf]
        %v3143 = vld [vmem:[%s7 + $0xf8] sm:$0xf]
        %v3144 = vld [vmem:[%s7 + $0xfc] sm:$0xf]
        %v3145 = vld [vmem:[%s7 + $0x100] sm:$0xf]
        %v3146 = vld [vmem:[%s7 + $0x104] sm:$0xf]
        %v3147 = vld [vmem:[%s7 + $0x108] sm:$0xf]
        %v3148 = vld [vmem:[%s7 + $0x10c] sm:$0xf]
        %v3149 = vld [vmem:[%s7 + $0x110] sm:$0xf]
        %v3150 = vld [vmem:[%s7 + $0x114] sm:$0xf]
        %v3151 = vld [vmem:[%s7 + $0x118] sm:$0xf]
        %v3152 = vld [vmem:[%s7 + $0x11c] sm:$0xf]
        %v3153 = vld [vmem:[%s7 + $0x120] sm:$0xf]
        %v3154 = vld [vmem:[%s7 + $0x124] sm:$0xf]
        %v3155 = vld [vmem:[%s7 + $0x128] sm:$0xf]
        %v3156 = vld [vmem:[%s7 + $0x12c] sm:$0xf]
        %v3157 = vld [vmem:[%s7 + $0x130] sm:$0xf]
        %v3158 = vld [vmem:[%s7 + $0x134] sm:$0xf]
        %v3159 = vld [vmem:[%s7 + $0x138] sm:$0xf]
        %v3160 = vld [vmem:[%s7 + $0x13c] sm:$0xf]
        %v3161 = vld [vmem:[%s7 + $0x140] sm:$0xf]
        %v3162 = vld [vmem:[%s7 + $0x144] sm:$0xf]
        %v3163 = vld [vmem:[%s7 + $0x148] sm:$0xf]
        %v3164 = vld [vmem:[%s7 + $0x14c] sm:$0xf]
        %v3165 = vld [vmem:[%s7 + $0x150] sm:$0xf]
        %v3166 = vld [vmem:[%s7 + $0x154] sm:$0xf]
        %v3167 = vld [vmem:[%s7 + $0x158] sm:$0xf]
        %v3168 = vld [vmem:[%s7 + $0x15c] sm:$0xf]
        %v3169 = vld [vmem:[%s7 + $0x160] sm:$0xf]
        %v3170 = vld [vmem:[%s7 + $0x164] sm:$0xf]
        %v3171 = vld [vmem:[%s7 + $0x168] sm:$0xf]
        %v3172 = vld [vmem:[%s7 + $0x16c] sm:$0xf]
        %v3173 = vld [vmem:[%s7 + $0x170] sm:$0xf]
        %v3174 = vld [vmem:[%s7 + $0x174] sm:$0xf]
        %v3175 = vld [vmem:[%s7 + $0x178] sm:$0xf]
        %v3176 = vld [vmem:[%s7 + $0x17c] sm:$0xf]
        %v3177 = vld [vmem:[%s7 + $0x180] sm:$0xf]
        %v3178 = vld [vmem:[%s7 + $0x184] sm:$0xf]
        %v3179 = vld [vmem:[%s7 + $0x188] sm:$0xf]
        %v3180 = vld [vmem:[%s7 + $0x18c] sm:$0xf]
        %v3181 = vld [vmem:[%s7 + $0x190] sm:$0xf]
        %v3182 = vld [vmem:[%s7 + $0x194] sm:$0xf]
        %v3183 = vld [vmem:[%s7 + $0x198] sm:$0xf]
        %v3184 = vld [vmem:[%s7 + $0x19c] sm:$0xf]
        %v3185 = vld [vmem:[%s7 + $0x1a0] sm:$0xf]
        %v3186 = vld [vmem:[%s7 + $0x1a4] sm:$0xf]
        %v3187 = vld [vmem:[%s7 + $0x1a8] sm:$0xf]
        %v3188 = vld [vmem:[%s7 + $0x1ac] sm:$0xf]
        %v3189 = vld [vmem:[%s7 + $0x1b0] sm:$0xf]
        %v3190 = vld [vmem:[%s7 + $0x1b4] sm:$0xf]
        %v3191 = vld [vmem:[%s7 + $0x1b8] sm:$0xf]
        %v3192 = vld [vmem:[%s7 + $0x1bc] sm:$0xf]
        %v3193 = vld [vmem:[%s7 + $0x1c0] sm:$0xf]
        %v3194 = vld [vmem:[%s7 + $0x1c4] sm:$0xf]
        %v3195 = vld [vmem:[%s7 + $0x1c8] sm:$0xf]
        %v3196 = vld [vmem:[%s7 + $0x1cc] sm:$0xf]
        %v3197 = vld [vmem:[%s7 + $0x1d0] sm:$0xf]
        %v3198 = vld [vmem:[%s7 + $0x1d4] sm:$0xf]
        %v3199 = vld [vmem:[%s7 + $0x1d8] sm:$0xf]
        %v3200 = vld [vmem:[%s7 + $0x1dc] sm:$0xf]
        %v3201 = vld [vmem:[%s7 + $0x1e0] sm:$0xf]
        %v3202 = vld [vmem:[%s7 + $0x1e4] sm:$0xf]
        %v3203 = vld [vmem:[%s7 + $0x1e8] sm:$0xf]
        %v3204 = vld [vmem:[%s7 + $0x1ec] sm:$0xf]
        %v3205 = vld [vmem:[%s7 + $0x1f0] sm:$0xf]
        %v3206 = vld [vmem:[%s7 + $0x1f4] sm:$0xf]
        %v3207 = vld [vmem:[%s7 + $0x1f8] sm:$0xf]
        %v3208 = vld [vmem:[%s7 + $0x1fc] sm:$0xf]
        %v3209 = vld [vmem:[%s8] sm:$0x1]
        %v3211 = vlaneseq
        %v3212 = vshrl.u32 %v3211, 7
        %v3213 = vsub.s32 0, %v3212
        %v3214 = vrot.slane %v3209, %v3213
        %v3344 = vunpack.c.l.b16 %v3081
        %v3345 = vunpack.c.l.b16 %v3082
        %v3346 = vunpack.c.l.b16 %v3083
        %v3347 = vunpack.c.l.b16 %v3084
        %v3348 = vunpack.c.l.b16 %v3085
        %v3349 = vunpack.c.l.b16 %v3086
        %v3350 = vunpack.c.l.b16 %v3087
        %v3351 = vunpack.c.l.b16 %v3088
        %v3352 = vunpack.c.l.b16 %v3089
        %v3353 = vunpack.c.l.b16 %v3090
        %v3354 = vunpack.c.l.b16 %v3091
        %v3355 = vunpack.c.l.b16 %v3092
        %v3356 = vunpack.c.l.b16 %v3093
        %v3357 = vunpack.c.l.b16 %v3094
        %v3358 = vunpack.c.l.b16 %v3095
        %v3359 = vunpack.c.l.b16 %v3096
        %v3360 = vunpack.c.l.b16 %v3097
        %v3361 = vunpack.c.l.b16 %v3098
        %v3362 = vunpack.c.l.b16 %v3099
        %v3363 = vunpack.c.l.b16 %v3100
        %v3364 = vunpack.c.l.b16 %v3101
        %v3365 = vunpack.c.l.b16 %v3102
        %v3366 = vunpack.c.l.b16 %v3103
        %v3367 = vunpack.c.l.b16 %v3104
        %v3368 = vunpack.c.l.b16 %v3105
        %v3369 = vunpack.c.l.b16 %v3106
        %v3370 = vunpack.c.l.b16 %v3107
        %v3371 = vunpack.c.l.b16 %v3108
        %v3372 = vunpack.c.l.b16 %v3109
        %v3373 = vunpack.c.l.b16 %v3110
        %v3374 = vunpack.c.l.b16 %v3111
        %v3375 = vunpack.c.l.b16 %v3112
        %v3376 = vunpack.c.l.b16 %v3113
        %v3377 = vunpack.c.l.b16 %v3114
        %v3378 = vunpack.c.l.b16 %v3115
        %v3379 = vunpack.c.l.b16 %v3116
        %v3380 = vunpack.c.l.b16 %v3117
        %v3381 = vunpack.c.l.b16 %v3118
        %v3382 = vunpack.c.l.b16 %v3119
        %v3383 = vunpack.c.l.b16 %v3120
        %v3384 = vunpack.c.l.b16 %v3121
        %v3385 = vunpack.c.l.b16 %v3122
        %v3386 = vunpack.c.l.b16 %v3123
        %v3387 = vunpack.c.l.b16 %v3124
        %v3388 = vunpack.c.l.b16 %v3125
        %v3389 = vunpack.c.l.b16 %v3126
        %v3390 = vunpack.c.l.b16 %v3127
        %v3391 = vunpack.c.l.b16 %v3128
        %v3392 = vunpack.c.l.b16 %v3129
        %v3393 = vunpack.c.l.b16 %v3130
        %v3394 = vunpack.c.l.b16 %v3131
        %v3395 = vunpack.c.l.b16 %v3132
        %v3396 = vunpack.c.l.b16 %v3133
        %v3397 = vunpack.c.l.b16 %v3134
        %v3398 = vunpack.c.l.b16 %v3135
        %v3399 = vunpack.c.l.b16 %v3136
        %v3400 = vunpack.c.l.b16 %v3137
        %v3401 = vunpack.c.l.b16 %v3138
        %v3402 = vunpack.c.l.b16 %v3139
        %v3403 = vunpack.c.l.b16 %v3140
        %v3404 = vunpack.c.l.b16 %v3141
        %v3405 = vunpack.c.l.b16 %v3142
        %v3406 = vunpack.c.l.b16 %v3143
        %v3407 = vunpack.c.l.b16 %v3144
        %v3408 = vunpack.c.l.b16 %v3145
        %v3409 = vunpack.c.l.b16 %v3146
        %v3410 = vunpack.c.l.b16 %v3147
        %v3411 = vunpack.c.l.b16 %v3148
        %v3412 = vunpack.c.l.b16 %v3149
        %v3413 = vunpack.c.l.b16 %v3150
        %v3414 = vunpack.c.l.b16 %v3151
        %v3415 = vunpack.c.l.b16 %v3152
        %v3416 = vunpack.c.l.b16 %v3153
        %v3417 = vunpack.c.l.b16 %v3154
        %v3418 = vunpack.c.l.b16 %v3155
        %v3419 = vunpack.c.l.b16 %v3156
        %v3420 = vunpack.c.l.b16 %v3157
        %v3421 = vunpack.c.l.b16 %v3158
        %v3422 = vunpack.c.l.b16 %v3159
        %v3423 = vunpack.c.l.b16 %v3160
        %v3424 = vunpack.c.l.b16 %v3161
        %v3425 = vunpack.c.l.b16 %v3162
        %v3426 = vunpack.c.l.b16 %v3163
        %v3427 = vunpack.c.l.b16 %v3164
        %v3428 = vunpack.c.l.b16 %v3165
        %v3429 = vunpack.c.l.b16 %v3166
        %v3430 = vunpack.c.l.b16 %v3167
        %v3431 = vunpack.c.l.b16 %v3168
        %v3432 = vunpack.c.l.b16 %v3169
        %v3433 = vunpack.c.l.b16 %v3170
        %v3434 = vunpack.c.l.b16 %v3171
        %v3435 = vunpack.c.l.b16 %v3172
        %v3436 = vunpack.c.l.b16 %v3173
        %v3437 = vunpack.c.l.b16 %v3174
        %v3438 = vunpack.c.l.b16 %v3175
        %v3439 = vunpack.c.l.b16 %v3176
        %v3440 = vunpack.c.l.b16 %v3177
        %v3441 = vunpack.c.l.b16 %v3178
        %v3442 = vunpack.c.l.b16 %v3179
        %v3443 = vunpack.c.l.b16 %v3180
        %v3444 = vunpack.c.l.b16 %v3181
        %v3445 = vunpack.c.l.b16 %v3182
        %v3446 = vunpack.c.l.b16 %v3183
        %v3447 = vunpack.c.l.b16 %v3184
        %v3448 = vunpack.c.l.b16 %v3185
        %v3449 = vunpack.c.l.b16 %v3186
        %v3450 = vunpack.c.l.b16 %v3187
        %v3451 = vunpack.c.l.b16 %v3188
        %v3452 = vunpack.c.l.b16 %v3189
        %v3453 = vunpack.c.l.b16 %v3190
        %v3454 = vunpack.c.l.b16 %v3191
        %v3455 = vunpack.c.l.b16 %v3192
        %v3456 = vunpack.c.l.b16 %v3193
        %v3457 = vunpack.c.l.b16 %v3194
        %v3458 = vunpack.c.l.b16 %v3195
        %v3459 = vunpack.c.l.b16 %v3196
        %v3460 = vunpack.c.l.b16 %v3197
        %v3461 = vunpack.c.l.b16 %v3198
        %v3462 = vunpack.c.l.b16 %v3199
        %v3463 = vunpack.c.l.b16 %v3200
        %v3464 = vunpack.c.l.b16 %v3201
        %v3465 = vunpack.c.l.b16 %v3202
        %v3466 = vunpack.c.l.b16 %v3203
        %v3467 = vunpack.c.l.b16 %v3204
        %v3468 = vunpack.c.l.b16 %v3205
        %v3469 = vunpack.c.l.b16 %v3206
        %v3470 = vunpack.c.l.b16 %v3207
        %v3471 = vunpack.c.l.b16 %v3208
        %v3472 = vpack.c.b16 %v3345, %v3344
        %v3473 = vpack.c.b16 %v3347, %v3346
        %v3474 = vpack.c.b16 %v3349, %v3348
        %v3475 = vpack.c.b16 %v3351, %v3350
        %v3476 = vpack.c.b16 %v3353, %v3352
        %v3477 = vpack.c.b16 %v3355, %v3354
        %v3478 = vpack.c.b16 %v3357, %v3356
        %v3479 = vpack.c.b16 %v3359, %v3358
        %v3480 = vpack.c.b16 %v3361, %v3360
        %v3481 = vpack.c.b16 %v3363, %v3362
        %v3482 = vpack.c.b16 %v3365, %v3364
        %v3483 = vpack.c.b16 %v3367, %v3366
        %v3484 = vpack.c.b16 %v3369, %v3368
        %v3485 = vpack.c.b16 %v3371, %v3370
        %v3486 = vpack.c.b16 %v3373, %v3372
        %v3487 = vpack.c.b16 %v3375, %v3374
        %v3488 = vpack.c.b16 %v3377, %v3376
        %v3489 = vpack.c.b16 %v3379, %v3378
        %v3490 = vpack.c.b16 %v3381, %v3380
        %v3491 = vpack.c.b16 %v3383, %v3382
        %v3492 = vpack.c.b16 %v3385, %v3384
        %v3493 = vpack.c.b16 %v3387, %v3386
        %v3494 = vpack.c.b16 %v3389, %v3388
        %v3495 = vpack.c.b16 %v3391, %v3390
        %v3496 = vpack.c.b16 %v3393, %v3392
        %v3497 = vpack.c.b16 %v3395, %v3394
        %v3498 = vpack.c.b16 %v3397, %v3396
        %v3499 = vpack.c.b16 %v3399, %v3398
        %v3500 = vpack.c.b16 %v3401, %v3400
        %v3501 = vpack.c.b16 %v3403, %v3402
        %v3502 = vpack.c.b16 %v3405, %v3404
        %v3503 = vpack.c.b16 %v3407, %v3406
        %v3504 = vpack.c.b16 %v3409, %v3408
        %v3505 = vpack.c.b16 %v3411, %v3410
        %v3506 = vpack.c.b16 %v3413, %v3412
        %v3507 = vpack.c.b16 %v3415, %v3414
        %v3508 = vpack.c.b16 %v3417, %v3416
        %v3509 = vpack.c.b16 %v3419, %v3418
        %v3510 = vpack.c.b16 %v3421, %v3420
        %v3511 = vpack.c.b16 %v3423, %v3422
        %v3512 = vpack.c.b16 %v3425, %v3424
        %v3513 = vpack.c.b16 %v3427, %v3426
        %v3514 = vpack.c.b16 %v3429, %v3428
        %v3515 = vpack.c.b16 %v3431, %v3430
        %v3516 = vpack.c.b16 %v3433, %v3432
        %v3517 = vpack.c.b16 %v3435, %v3434
        %v3518 = vpack.c.b16 %v3437, %v3436
        %v3519 = vpack.c.b16 %v3439, %v3438
        %v3520 = vpack.c.b16 %v3441, %v3440
        %v3521 = vpack.c.b16 %v3443, %v3442
        %v3522 = vpack.c.b16 %v3445, %v3444
        %v3523 = vpack.c.b16 %v3447, %v3446
        %v3524 = vpack.c.b16 %v3449, %v3448
        %v3525 = vpack.c.b16 %v3451, %v3450
        %v3526 = vpack.c.b16 %v3453, %v3452
        %v3527 = vpack.c.b16 %v3455, %v3454
        %v3528 = vpack.c.b16 %v3457, %v3456
        %v3529 = vpack.c.b16 %v3459, %v3458
        %v3530 = vpack.c.b16 %v3461, %v3460
        %v3531 = vpack.c.b16 %v3463, %v3462
        %v3532 = vpack.c.b16 %v3465, %v3464
        %v3533 = vpack.c.b16 %v3467, %v3466
        %v3534 = vpack.c.b16 %v3469, %v3468
        %v3535 = vpack.c.b16 %v3471, %v3470
        %3600 = vmatprep.subr.bf16.mxu0 0
        %3601 = vmatpush1.bf16.msra.mxu0 %v3472
        %3602 = vmatprep.subr.bf16.mxu0 0
        %3603 = vmatpush1.bf16.msra.mxu0 %v3473
        %3604 = vmatprep.subr.bf16.mxu0 0
        %3605 = vmatpush1.bf16.msra.mxu0 %v3474
        %3606 = vmatprep.subr.bf16.mxu0 0
        %3607 = vmatpush1.bf16.msra.mxu0 %v3475
        %3608 = vmatprep.subr.bf16.mxu0 0
        %3609 = vmatpush1.bf16.msra.mxu0 %v3476
        %3610 = vmatprep.subr.bf16.mxu0 0
        %3611 = vmatpush1.bf16.msra.mxu0 %v3477
        %3612 = vmatprep.subr.bf16.mxu0 0
        %3613 = vmatpush1.bf16.msra.mxu0 %v3478
        %3614 = vmatprep.subr.bf16.mxu0 0
        %3615 = vmatpush1.bf16.msra.mxu0 %v3479
        %3616 = vmatprep.subr.bf16.mxu0 0
        %3617 = vmatpush1.bf16.msra.mxu0 %v3480
        %3618 = vmatprep.subr.bf16.mxu0 0
        %3619 = vmatpush1.bf16.msra.mxu0 %v3481
        %3620 = vmatprep.subr.bf16.mxu0 0
        %3621 = vmatpush1.bf16.msra.mxu0 %v3482
        %3622 = vmatprep.subr.bf16.mxu0 0
        %3623 = vmatpush1.bf16.msra.mxu0 %v3483
        %3624 = vmatprep.subr.bf16.mxu0 0
        %3625 = vmatpush1.bf16.msra.mxu0 %v3484
        %3626 = vmatprep.subr.bf16.mxu0 0
        %3627 = vmatpush1.bf16.msra.mxu0 %v3485
        %3628 = vmatprep.subr.bf16.mxu0 0
        %3629 = vmatpush1.bf16.msra.mxu0 %v3486
        %3630 = vmatprep.subr.bf16.mxu0 0
        %3631 = vmatpush1.bf16.msra.mxu0 %v3487
        %3632 = vmatprep.mubr.bf16.mxu0 %v3074
        %3633 = vmatmul.mubr.bf16.gmra.mrb[0].mxu0 %v3073
        %v3634 = vpop.f32.mrb[0].mxu0
        %v3635 = vadd.f32 %v3214, %v3634
        %v3636 = vpop.f32.mrb[0].mxu0
        %v3637 = vpop.f32.mrb[0].mxu0
        %v3638 = vpop.f32.mrb[0].mxu0
        %3639 = vdwg.mxu0
        %3640 = vmatprep.subr.bf16.mxu0 0
        %3641 = vmatpush1.bf16.msra.mxu0 %v3488
        %3642 = vmatprep.subr.bf16.mxu0 0
        %3643 = vmatpush1.bf16.msra.mxu0 %v3489
        %3644 = vmatprep.subr.bf16.mxu0 0
        %3645 = vmatpush1.bf16.msra.mxu0 %v3490
        %3646 = vmatprep.subr.bf16.mxu0 0
        %3647 = vmatpush1.bf16.msra.mxu0 %v3491
        %3648 = vmatprep.subr.bf16.mxu0 0
        %3649 = vmatpush1.bf16.msra.mxu0 %v3492
        %3650 = vmatprep.subr.bf16.mxu0 0
        %3651 = vmatpush1.bf16.msra.mxu0 %v3493
        %3652 = vmatprep.subr.bf16.mxu0 0
        %3653 = vmatpush1.bf16.msra.mxu0 %v3494
        %3654 = vmatprep.subr.bf16.mxu0 0
        %3655 = vmatpush1.bf16.msra.mxu0 %v3495
        %3656 = vmatprep.subr.bf16.mxu0 0
        %3657 = vmatpush1.bf16.msra.mxu0 %v3496
        %3658 = vmatprep.subr.bf16.mxu0 0
        %3659 = vmatpush1.bf16.msra.mxu0 %v3497
        %3660 = vmatprep.subr.bf16.mxu0 0
        %3661 = vmatpush1.bf16.msra.mxu0 %v3498
        %3662 = vmatprep.subr.bf16.mxu0 0
        %3663 = vmatpush1.bf16.msra.mxu0 %v3499
        %3664 = vmatprep.subr.bf16.mxu0 0
        %3665 = vmatpush1.bf16.msra.mxu0 %v3500
        %3666 = vmatprep.subr.bf16.mxu0 0
        %3667 = vmatpush1.bf16.msra.mxu0 %v3501
        %3668 = vmatprep.subr.bf16.mxu0 0
        %3669 = vmatpush1.bf16.msra.mxu0 %v3502
        %3670 = vmatprep.subr.bf16.mxu0 0
        %3671 = vmatpush1.bf16.msra.mxu0 %v3503
        %3672 = vmatprep.mubr.bf16.mxu0 %v3076
        %3673 = vmatmul.mubr.bf16.gmra.mrb[0].mxu0 %v3075
        %v3674 = vpop.f32.mrb[0].mxu0
        %v3675 = vadd.f32 %v3635, %v3674
        %v3676 = vpop.f32.mrb[0].mxu0
        %v3677 = vpop.f32.mrb[0].mxu0
        %v3678 = vpop.f32.mrb[0].mxu0
        %3679 = vdwg.mxu0
        %3680 = vmatprep.subr.bf16.mxu0 0
        %3681 = vmatpush1.bf16.msra.mxu0 %v3504
        %3682 = vmatprep.subr.bf16.mxu0 0
        %3683 = vmatpush1.bf16.msra.mxu0 %v3505
        %3684 = vmatprep.subr.bf16.mxu0 0
        %3685 = vmatpush1.bf16.msra.mxu0 %v3506
        %3686 = vmatprep.subr.bf16.mxu0 0
        %3687 = vmatpush1.bf16.msra.mxu0 %v3507
        %3688 = vmatprep.subr.bf16.mxu0 0
        %3689 = vmatpush1.bf16.msra.mxu0 %v3508
        %3690 = vmatprep.subr.bf16.mxu0 0
        %3691 = vmatpush1.bf16.msra.mxu0 %v3509
        %3692 = vmatprep.subr.bf16.mxu0 0
        %3693 = vmatpush1.bf16.msra.mxu0 %v3510
        %3694 = vmatprep.subr.bf16.mxu0 0
        %3695 = vmatpush1.bf16.msra.mxu0 %v3511
        %3696 = vmatprep.subr.bf16.mxu0 0
        %3697 = vmatpush1.bf16.msra.mxu0 %v3512
        %3698 = vmatprep.subr.bf16.mxu0 0
        %3699 = vmatpush1.bf16.msra.mxu0 %v3513
        %3700 = vmatprep.subr.bf16.mxu0 0
        %3701 = vmatpush1.bf16.msra.mxu0 %v3514
        %3702 = vmatprep.subr.bf16.mxu0 0
        %3703 = vmatpush1.bf16.msra.mxu0 %v3515
        %3704 = vmatprep.subr.bf16.mxu0 0
        %3705 = vmatpush1.bf16.msra.mxu0 %v3516
        %3706 = vmatprep.subr.bf16.mxu0 0
        %3707 = vmatpush1.bf16.msra.mxu0 %v3517
        %3708 = vmatprep.subr.bf16.mxu0 0
        %3709 = vmatpush1.bf16.msra.mxu0 %v3518
        %3710 = vmatprep.subr.bf16.mxu0 0
        %3711 = vmatpush1.bf16.msra.mxu0 %v3519
        %3712 = vmatprep.mubr.bf16.mxu0 %v3078
        %3713 = vmatmul.mubr.bf16.gmra.mrb[0].mxu0 %v3077
        %v3714 = vpop.f32.mrb[0].mxu0
        %v3715 = vadd.f32 %v3675, %v3714
        %v3716 = vpop.f32.mrb[0].mxu0
        %v3717 = vpop.f32.mrb[0].mxu0
        %v3718 = vpop.f32.mrb[0].mxu0
        %3719 = vdwg.mxu0
        %3720 = vmatprep.subr.bf16.mxu0 0
        %3721 = vmatpush1.bf16.msra.mxu0 %v3520
        %3722 = vmatprep.subr.bf16.mxu0 0
        %3723 = vmatpush1.bf16.msra.mxu0 %v3521
        %3724 = vmatprep.subr.bf16.mxu0 0
        %3725 = vmatpush1.bf16.msra.mxu0 %v3522
        %3726 = vmatprep.subr.bf16.mxu0 0
        %3727 = vmatpush1.bf16.msra.mxu0 %v3523
        %3728 = vmatprep.subr.bf16.mxu0 0
        %3729 = vmatpush1.bf16.msra.mxu0 %v3524
        %3730 = vmatprep.subr.bf16.mxu0 0
        %3731 = vmatpush1.bf16.msra.mxu0 %v3525
        %3732 = vmatprep.subr.bf16.mxu0 0
        %3733 = vmatpush1.bf16.msra.mxu0 %v3526
        %3734 = vmatprep.subr.bf16.mxu0 0
        %3735 = vmatpush1.bf16.msra.mxu0 %v3527
        %3736 = vmatprep.subr.bf16.mxu0 0
        %3737 = vmatpush1.bf16.msra.mxu0 %v3528
        %3738 = vmatprep.subr.bf16.mxu0 0
        %3739 = vmatpush1.bf16.msra.mxu0 %v3529
        %3740 = vmatprep.subr.bf16.mxu0 0
        %3741 = vmatpush1.bf16.msra.mxu0 %v3530
        %3742 = vmatprep.subr.bf16.mxu0 0
        %3743 = vmatpush1.bf16.msra.mxu0 %v3531
        %3744 = vmatprep.subr.bf16.mxu0 0
        %3745 = vmatpush1.bf16.msra.mxu0 %v3532
        %3746 = vmatprep.subr.bf16.mxu0 0
        %3747 = vmatpush1.bf16.msra.mxu0 %v3533
        %3748 = vmatprep.subr.bf16.mxu0 0
        %3749 = vmatpush1.bf16.msra.mxu0 %v3534
        %3750 = vmatprep.subr.bf16.mxu0 0
        %3751 = vmatpush1.bf16.msra.mxu0 %v3535
        %3752 = vmatprep.mubr.bf16.mxu0 %v3080
        %3753 = vmatmul.mubr.bf16.gmra.mrb[0].mxu0 %v3079
        %v3754 = vpop.f32.mrb[0].mxu0
        %v3755 = vadd.f32 %v3715, %v3754
        %v3756 = vpop.f32.mrb[0].mxu0
        %v3757 = vpop.f32.mrb[0].mxu0
        %v3758 = vpop.f32.mrb[0].mxu0
        %3759 = vdwg.mxu0
        %3760 = vst [vmem:[%s375] sm:$0xff] %v3755
      $region64: #{age_reg_net_forward.1} parent=55 // pred_fallthru
        _
      %p3761 = scmp.lt.s32.totalorder %s24, 1
      %s3762 = scalar_select %p3761, %s24, 1
      %s3763 = smul.addr %s3762, 8
      %s3764 = scalar_lea.vmem %s9, %s3763
      // Predicated region
      $region65: #{age_reg_net_forward.1} parent=55 // pred_check
        %p3765 = pneg %p251
      $region66: #{age_reg_net_forward.1} parent=55 // pred_check_branch
        %3767 = sbr.rel (%p3765) target = $region68
      $region67: #{age_reg_net_forward.1} parent=55 // pred_region
        _
      $region68: #{age_reg_net_forward.1} parent=55 // pred_fallthru
        _
    $region56: #{age_reg_net_forward.1} parent=5 // pred_fallthru
      _
    %p3768 = scmp.le.s32.totalorder 2, %s15
    // Predicated region
    $region69: #{age_reg_net_forward.1} parent=5 // pred_check
      %p3769 = pneg %p3768
    $region70: #{age_reg_net_forward.1} parent=5 // pred_check_branch
      %3771 = sbr.rel (%p3769) target = $region72
    $region71: #{age_reg_net_forward.1} parent=5 // pred_region
      %s3772 = ssub.s32 %s15, 2
      // Predicated region
      $region73: #{age_reg_net_forward.1} parent=71 // pred_check
        %p3773 = pneg %p257
      $region74: #{age_reg_net_forward.1} parent=71 // pred_check_branch
        %3775 = sbr.rel (%p3773) target = $region76
      $region75: #{age_reg_net_forward.1} parent=71 // pred_region
        %p3776 = scmp.lt.s32.totalorder %s26, 1
        %s3777 = scalar_select %p3776, %s26, 1
        %s3778 = smul.addr %s3777, 8
        %s3779 = scalar_lea.vmem %s9, %s3778
      $region76: #{age_reg_net_forward.1} parent=71 // pred_fallthru
        _
    $region72: #{age_reg_net_forward.1} parent=5 // pred_fallthru
      _
  $region6: #{age_reg_net_forward.1} parent=0 // loop_footer
    %s19 = sadd.s32 1, %s15
  $region7: #{age_reg_net_forward.1} parent=0 // loop_footer_branch
    %14 = sbr.rel target = $region3
  $region8: #{age_reg_net_forward.1} parent=0 // loop_exit
    _

</llo_original>
